<compile_context>
chip_gen: v7x
topology: tpu7x:2x2x1
jax: 0.10.0
libtpu: 0.0.40
codegen_flags: <defaults>
</compile_context>

<pallas_src>
import jax
import jax.numpy as jnp
from jax.experimental import pallas as pl
from jax.experimental.pallas import tpu as pltpu

# ---- small, module-consistent config (scaled down from 384/64/8/8) ----
N_EMBD = 128          # n_embd
BLOCKSIZE = 16        # blocksize (max sequence length T)
N_HEAD = 4            # n_head
N_LAYER = 2           # n_layer
VOCAB_SIZE = 128      # vocab_size (module's len('')==0 is degenerate; pick 128)
LN_EPS = 1e-5
NEG_BIG = -1e30       # additive causal mask value (robust vs. -inf, bf16-safe)


def _layernorm(x, gamma, beta):
    # x: (T, C) f32; gamma/beta: (1, C).  Biased variance (torch LayerNorm).
    mu = jnp.mean(x, axis=-1, keepdims=True)
    xc = x - mu
    var = jnp.mean(xc * xc, axis=-1, keepdims=True)
    return xc * jax.lax.rsqrt(var + LN_EPS) * gamma + beta


# ---------------------------------------------------------------------------
# Fused forward kernel: embeddings -> N_LAYER blocks -> ln_f -> lm_head.
# grid = (B,): each program handles one batch element end-to-end.
# ---------------------------------------------------------------------------
def gpt_kernel(ids_ref,                       # SMEM (B, T) int32 [scalar prefetch]
               tok_ref, pos_ref,              # (V, C) f32, (BLOCKSIZE, C) f32
               wqkv_ref,                      # (L, C, 3C) bf16
               wproj_ref, bproj_ref,          # (L, C, C) bf16, (L, 1, C) f32
               ln1g_ref, ln1b_ref,            # (L, 1, C) f32
               w1_ref, b1_ref,                # (L, C, 4C) bf16, (L, 1, 4C) f32
               w2_ref, b2_ref,                # (L, 4C, C) bf16, (L, 1, C) f32
               ln2g_ref, ln2b_ref,            # (L, 1, C) f32
               lnfg_ref, lnfb_ref,            # (1, C) f32
               wlm_ref, blm_ref,              # (C, V) bf16, (1, V) f32
               o_ref,                         # (1, T, V) f32
               x_buf, cat_buf):               # VMEM (T, C) f32 scratch x2
    b = pl.program_id(0)
    T, C = x_buf.shape
    hs = C // N_HEAD
    scale = float(hs) ** -0.5

    # ---- embeddings: x[t, :] = tok_emb[ids[b, t], :] + pos_emb[t, :] ----
    for t in range(T):
        tid = ids_ref[b, t]                                   # scalar from SMEM
        x_buf[pl.ds(t, 1), :] = (tok_ref[pl.ds(tid, 1), :]
                                 + pos_ref[pl.ds(t, 1), :])
    x = x_buf[...]                                            # (T, C) f32

    # ---- additive causal mask, built once for all heads/layers ----
    row = jax.lax.broadcasted_iota(jnp.int32, (T, T), 0)
    col = jax.lax.broadcasted_iota(jnp.int32, (T, T), 1)
    mask_add = jnp.where(col <= row, 0.0, NEG_BIG).astype(jnp.float32)

    for l in range(N_LAYER):
        # -------- multi-head self-attention --------
        xb = x.astype(jnp.bfloat16)
        qkv = jnp.dot(xb, wqkv_ref[l],
                      preferred_element_type=jnp.float32)     # (T, 3C) f32
        q = qkv[:, :C]
        k = qkv[:, C:2 * C]
        v = qkv[:, 2 * C:]

        for h in range(N_HEAD):
            lo = h * hs
            qh = q[:, lo:lo + hs]
            kh = k[:, lo:lo + hs]
            vh = v[:, lo:lo + hs]
            wei = jnp.dot(qh, kh.T,
                          preferred_element_type=jnp.float32) * scale + mask_add
            wei = wei - jnp.max(wei, axis=-1, keepdims=True)
            p = jnp.exp(wei)
            p = p * pl.reciprocal(jnp.sum(p, axis=-1, keepdims=True), approx=True)
            # pack head outputs contiguously along the lane axis
            cat_buf[:, lo:lo + hs] = jnp.dot(p, vh,
                                             preferred_element_type=jnp.float32)

        sa = jnp.dot(cat_buf[...].astype(jnp.bfloat16), wproj_ref[l],
                     preferred_element_type=jnp.float32) + bproj_ref[l]
        x = _layernorm(x + sa, ln1g_ref[l], ln1b_ref[l])       # post-norm (module)

        # -------- feed-forward --------
        h1 = jnp.dot(x.astype(jnp.bfloat16), w1_ref[l],
                     preferred_element_type=jnp.float32) + b1_ref[l]
        h1 = jnp.maximum(h1, 0.0)
        ff = jnp.dot(h1.astype(jnp.bfloat16), w2_ref[l],
                     preferred_element_type=jnp.float32) + b2_ref[l]
        x = _layernorm(x + ff, ln2g_ref[l], ln2b_ref[l])

    # ---- final LayerNorm + lm_head ----
    xf = _layernorm(x, lnfg_ref[...], lnfb_ref[...])
    o_ref[0] = jnp.dot(xf.astype(jnp.bfloat16), wlm_ref[...],
                       preferred_element_type=jnp.float32) + blm_ref[...]


def gpt_forward_fn(params, index):
    B, T = index.shape
    C, V, L = N_EMBD, VOCAB_SIZE, N_LAYER

    def full(shape):
        # whole-array block, constant index_map (weights resident in VMEM;
        # Pallas skips the re-DMA when the block index does not change).
        return pl.BlockSpec(shape, lambda b, ids: (0,) * len(shape))

    grid_spec = pltpu.PrefetchScalarGridSpec(
        num_scalar_prefetch=1,            # token ids -> SMEM
        grid=(B,),
        in_specs=[
            full((V, C)),                                  # tok_emb
            full((BLOCKSIZE, C)),                          # pos_emb
            full((L, C, 3 * C)),                           # wqkv (packed q|k|v)
            full((L, C, C)), full((L, 1, C)),              # wproj, bproj
            full((L, 1, C)), full((L, 1, C)),              # ln1 gamma, beta
            full((L, C, 4 * C)), full((L, 1, 4 * C)),      # fc1 w, b
            full((L, 4 * C, C)), full((L, 1, C)),          # fc2 w, b
            full((L, 1, C)), full((L, 1, C)),              # ln2 gamma, beta
            full((1, C)), full((1, C)),                    # ln_f gamma, beta
            full((C, V)), full((1, V)),                    # lm_head w, b
        ],
        out_specs=pl.BlockSpec((1, T, V), lambda b, ids: (b, 0, 0)),
        scratch_shapes=[pltpu.VMEM((T, C), jnp.float32),   # x_buf (embeddings)
                        pltpu.VMEM((T, C), jnp.float32)],  # cat_buf (head concat)
    )
    # NOTE(v7x): at the real config (n_embd=384, large vocab) tile lm_head over
    # V / FFN over 4C and set pltpu.CompilerParams(vmem_limit_bytes=...);
    # at this toy size everything fits the default scoped VMEM on all gens.
    return pl.pallas_call(
        gpt_kernel,
        out_shape=jax.ShapeDtypeStruct((B, T, V), jnp.float32),
        grid_spec=grid_spec,
        compiler_params=pltpu.CompilerParams(
            dimension_semantics=("parallel",)),            # batch -> TCs on v7x
    )(index,
      params["tok_emb"], params["pos_emb"],
      params["wqkv"], params["wproj"], params["bproj"],
      params["ln1_g"], params["ln1_b"],
      params["w1"], params["b1"], params["w2"], params["b2"],
      params["ln2_g"], params["ln2_b"],
      params["lnf_g"], params["lnf_b"], params["wlm"], params["blm"])


gpt_forward = jax.jit(gpt_forward_fn)


# ---------------------------------------------------------------------------
# Parameter init (matches _init_weights: N(0, 0.02) linears & embeddings,
# zero biases, LayerNorm gamma=1 beta=0).  Matmul weights stored bf16.
# ---------------------------------------------------------------------------
def init_params(key):
    C, V, L, TMAX = N_EMBD, VOCAB_SIZE, N_LAYER, BLOCKSIZE
    keys = iter(jax.random.split(key, 8))

    def nrm(shape, dtype=jnp.float32):
        return (0.02 * jax.random.normal(next(keys), shape, jnp.float32)).astype(dtype)

    ones = lambda s: jnp.ones(s, jnp.float32)
    zeros = lambda s: jnp.zeros(s, jnp.float32)

    return {
        "tok_emb": nrm((V, C)),
        "pos_emb": nrm((TMAX, C)),
        "wqkv": nrm((L, C, 3 * C), jnp.bfloat16),      # per-head K/Q/V packed columnwise
        "wproj": nrm((L, C, C), jnp.bfloat16),
        "bproj": zeros((L, 1, C)),
        "ln1_g": ones((L, 1, C)), "ln1_b": zeros((L, 1, C)),
        "w1": nrm((L, C, 4 * C), jnp.bfloat16), "b1": zeros((L, 1, 4 * C)),
        "w2": nrm((L, 4 * C, C), jnp.bfloat16), "b2": zeros((L, 1, C)),
        "ln2_g": ones((L, 1, C)), "ln2_b": zeros((L, 1, C)),
        "lnf_g": ones((1, C)), "lnf_b": zeros((1, C)),
        "wlm": nrm((C, V), jnp.bfloat16), "blm": zeros((1, V)),
    }


if __name__ == "__main__":
    key = jax.random.PRNGKey(0)
    pkey, ikey = jax.random.split(key)
    params = init_params(pkey)

    B, T = 2, BLOCKSIZE
    index = jax.random.randint(ikey, (B, T), 0, VOCAB_SIZE, dtype=jnp.int32)

    logits = gpt_forward(params, index)
    jax.block_until_ready(logits)

    assert logits.shape == (B, T, VOCAB_SIZE), logits.shape
    assert bool(jnp.all(jnp.isfinite(logits)))
    print("KERNEL_OK")
</pallas_src>

<mosaic_0001>
module attributes {stable_mosaic.version = 11 : i64} {
  func.func @gpt_kernel(%arg0: i32, %arg1: memref<2x16xi32, #tpu.memory_space<smem>>, %arg2: memref<128x128xf32, #tpu.memory_space<vmem>>, %arg3: memref<16x128xf32, #tpu.memory_space<vmem>>, %arg4: memref<2x128x384xbf16, #tpu.memory_space<vmem>>, %arg5: memref<2x128x128xbf16, #tpu.memory_space<vmem>>, %arg6: memref<2x1x128xf32, #tpu.memory_space<vmem>>, %arg7: memref<2x1x128xf32, #tpu.memory_space<vmem>>, %arg8: memref<2x1x128xf32, #tpu.memory_space<vmem>>, %arg9: memref<2x128x512xbf16, #tpu.memory_space<vmem>>, %arg10: memref<2x1x512xf32, #tpu.memory_space<vmem>>, %arg11: memref<2x512x128xbf16, #tpu.memory_space<vmem>>, %arg12: memref<2x1x128xf32, #tpu.memory_space<vmem>>, %arg13: memref<2x1x128xf32, #tpu.memory_space<vmem>>, %arg14: memref<2x1x128xf32, #tpu.memory_space<vmem>>, %arg15: memref<1x128xf32, #tpu.memory_space<vmem>>, %arg16: memref<1x128xf32, #tpu.memory_space<vmem>>, %arg17: memref<128x128xbf16, #tpu.memory_space<vmem>>, %arg18: memref<1x128xf32, #tpu.memory_space<vmem>>, %arg19: memref<1x16x128xf32, #tpu.memory_space<vmem>>, %arg20: memref<16x128xf32, #tpu.memory_space<vmem>>, %arg21: memref<16x128xf32, #tpu.memory_space<vmem>>) attributes {dimension_semantics = [#tpu.dimension_semantics<parallel>], iteration_bounds = array<i64: 2>, scalar_prefetch = 1 : i64, scratch_operands = 2 : i64, tpu.core_type = #tpu.core_type<tc>, window_params = [{pipeline_mode = #tpu.pipeline_mode<synchronous>, transform_indices = @transform_0, window_bounds = array<i64: 128, 128>}, {pipeline_mode = #tpu.pipeline_mode<synchronous>, transform_indices = @transform_1, window_bounds = array<i64: 16, 128>}, {pipeline_mode = #tpu.pipeline_mode<synchronous>, transform_indices = @transform_2, window_bounds = array<i64: 2, 128, 384>}, {pipeline_mode = #tpu.pipeline_mode<synchronous>, transform_indices = @transform_3, window_bounds = array<i64: 2, 128, 128>}, {pipeline_mode = #tpu.pipeline_mode<synchronous>, transform_indices = @transform_4, window_bounds = array<i64: 2, 1, 128>}, {pipeline_mode = #tpu.pipeline_mode<synchronous>, transform_indices = @transform_5, window_bounds = array<i64: 2, 1, 128>}, {pipeline_mode = #tpu.pipeline_mode<synchronous>, transform_indices = @transform_6, window_bounds = array<i64: 2, 1, 128>}, {pipeline_mode = #tpu.pipeline_mode<synchronous>, transform_indices = @transform_7, window_bounds = array<i64: 2, 128, 512>}, {pipeline_mode = #tpu.pipeline_mode<synchronous>, transform_indices = @transform_8, window_bounds = array<i64: 2, 1, 512>}, {pipeline_mode = #tpu.pipeline_mode<synchronous>, transform_indices = @transform_9, window_bounds = array<i64: 2, 512, 128>}, {pipeline_mode = #tpu.pipeline_mode<synchronous>, transform_indices = @transform_10, window_bounds = array<i64: 2, 1, 128>}, {pipeline_mode = #tpu.pipeline_mode<synchronous>, transform_indices = @transform_11, window_bounds = array<i64: 2, 1, 128>}, {pipeline_mode = #tpu.pipeline_mode<synchronous>, transform_indices = @transform_12, window_bounds = array<i64: 2, 1, 128>}, {pipeline_mode = #tpu.pipeline_mode<synchronous>, transform_indices = @transform_13, window_bounds = array<i64: 1, 128>}, {pipeline_mode = #tpu.pipeline_mode<synchronous>, transform_indices = @transform_14, window_bounds = array<i64: 1, 128>}, {pipeline_mode = #tpu.pipeline_mode<synchronous>, transform_indices = @transform_15, window_bounds = array<i64: 128, 128>}, {pipeline_mode = #tpu.pipeline_mode<synchronous>, transform_indices = @transform_16, window_bounds = array<i64: 1, 128>}, {transform_indices = @transform_17, window_bounds = array<i64: 1, 16, 128>}]} {
    %0 = arith.index_cast %arg0 : i32 to index
    %c0 = arith.constant 0 : index
    %1 = memref.load %arg1[%0, %c0] : memref<2x16xi32, #tpu.memory_space<smem>>
    %2 = arith.index_cast %1 : i32 to index
    %c0_0 = arith.constant 0 : index
    %3 = vector.load %arg2[%2, %c0_0] : memref<128x128xf32, #tpu.memory_space<vmem>>, vector<1x128xf32>
    %c0_1 = arith.constant 0 : index
    %c0_2 = arith.constant 0 : index
    %4 = vector.load %arg3[%c0_1, %c0_2] : memref<16x128xf32, #tpu.memory_space<vmem>>, vector<1x128xf32>
    %5 = arith.addf %3, %4 : vector<1x128xf32>
    %c0_3 = arith.constant 0 : index
    %c0_4 = arith.constant 0 : index
    %6 = vector.load %arg20[%c0_3, %c0_4] : memref<16x128xf32, #tpu.memory_space<vmem>>, vector<1x128xf32>
    tpu.vector_store %arg20[%c0_3, %c0_4], %5 {strides = array<i32>} : memref<16x128xf32, #tpu.memory_space<vmem>>, vector<1x128xf32>,
    %7 = arith.index_cast %arg0 : i32 to index
    %c1 = arith.constant 1 : index
    %8 = memref.load %arg1[%7, %c1] : memref<2x16xi32, #tpu.memory_space<smem>>
    %9 = arith.index_cast %8 : i32 to index
    %c0_5 = arith.constant 0 : index
    %10 = vector.load %arg2[%9, %c0_5] : memref<128x128xf32, #tpu.memory_space<vmem>>, vector<1x128xf32>
    %c1_6 = arith.constant 1 : index
    %c0_7 = arith.constant 0 : index
    %11 = vector.load %arg3[%c1_6, %c0_7] : memref<16x128xf32, #tpu.memory_space<vmem>>, vector<1x128xf32>
    %12 = arith.addf %10, %11 : vector<1x128xf32>
    %c1_8 = arith.constant 1 : index
    %c0_9 = arith.constant 0 : index
    %13 = vector.load %arg20[%c1_8, %c0_9] : memref<16x128xf32, #tpu.memory_space<vmem>>, vector<1x128xf32>
    tpu.vector_store %arg20[%c1_8, %c0_9], %12 {strides = array<i32>} : memref<16x128xf32, #tpu.memory_space<vmem>>, vector<1x128xf32>,
    %14 = arith.index_cast %arg0 : i32 to index
    %c2 = arith.constant 2 : index
    %15 = memref.load %arg1[%14, %c2] : memref<2x16xi32, #tpu.memory_space<smem>>
    %16 = arith.index_cast %15 : i32 to index
    %c0_10 = arith.constant 0 : index
    %17 = vector.load %arg2[%16, %c0_10] : memref<128x128xf32, #tpu.memory_space<vmem>>, vector<1x128xf32>
    %c2_11 = arith.constant 2 : index
    %c0_12 = arith.constant 0 : index
    %18 = vector.load %arg3[%c2_11, %c0_12] : memref<16x128xf32, #tpu.memory_space<vmem>>, vector<1x128xf32>
    %19 = arith.addf %17, %18 : vector<1x128xf32>
    %c2_13 = arith.constant 2 : index
    %c0_14 = arith.constant 0 : index
    %20 = vector.load %arg20[%c2_13, %c0_14] : memref<16x128xf32, #tpu.memory_space<vmem>>, vector<1x128xf32>
    tpu.vector_store %arg20[%c2_13, %c0_14], %19 {strides = array<i32>} : memref<16x128xf32, #tpu.memory_space<vmem>>, vector<1x128xf32>,
    %21 = arith.index_cast %arg0 : i32 to index
    %c3 = arith.constant 3 : index
    %22 = memref.load %arg1[%21, %c3] : memref<2x16xi32, #tpu.memory_space<smem>>
    %23 = arith.index_cast %22 : i32 to index
    %c0_15 = arith.constant 0 : index
    %24 = vector.load %arg2[%23, %c0_15] : memref<128x128xf32, #tpu.memory_space<vmem>>, vector<1x128xf32>
    %c3_16 = arith.constant 3 : index
    %c0_17 = arith.constant 0 : index
    %25 = vector.load %arg3[%c3_16, %c0_17] : memref<16x128xf32, #tpu.memory_space<vmem>>, vector<1x128xf32>
    %26 = arith.addf %24, %25 : vector<1x128xf32>
    %c3_18 = arith.constant 3 : index
    %c0_19 = arith.constant 0 : index
    %27 = vector.load %arg20[%c3_18, %c0_19] : memref<16x128xf32, #tpu.memory_space<vmem>>, vector<1x128xf32>
    tpu.vector_store %arg20[%c3_18, %c0_19], %26 {strides = array<i32>} : memref<16x128xf32, #tpu.memory_space<vmem>>, vector<1x128xf32>,
    %28 = arith.index_cast %arg0 : i32 to index
    %c4 = arith.constant 4 : index
    %29 = memref.load %arg1[%28, %c4] : memref<2x16xi32, #tpu.memory_space<smem>>
    %30 = arith.index_cast %29 : i32 to index
    %c0_20 = arith.constant 0 : index
    %31 = vector.load %arg2[%30, %c0_20] : memref<128x128xf32, #tpu.memory_space<vmem>>, vector<1x128xf32>
    %c4_21 = arith.constant 4 : index
    %c0_22 = arith.constant 0 : index
    %32 = vector.load %arg3[%c4_21, %c0_22] : memref<16x128xf32, #tpu.memory_space<vmem>>, vector<1x128xf32>
    %33 = arith.addf %31, %32 : vector<1x128xf32>
    %c4_23 = arith.constant 4 : index
    %c0_24 = arith.constant 0 : index
    %34 = vector.load %arg20[%c4_23, %c0_24] : memref<16x128xf32, #tpu.memory_space<vmem>>, vector<1x128xf32>
    tpu.vector_store %arg20[%c4_23, %c0_24], %33 {strides = array<i32>} : memref<16x128xf32, #tpu.memory_space<vmem>>, vector<1x128xf32>,
    %35 = arith.index_cast %arg0 : i32 to index
    %c5 = arith.constant 5 : index
    %36 = memref.load %arg1[%35, %c5] : memref<2x16xi32, #tpu.memory_space<smem>>
    %37 = arith.index_cast %36 : i32 to index
    %c0_25 = arith.constant 0 : index
    %38 = vector.load %arg2[%37, %c0_25] : memref<128x128xf32, #tpu.memory_space<vmem>>, vector<1x128xf32>
    %c5_26 = arith.constant 5 : index
    %c0_27 = arith.constant 0 : index
    %39 = vector.load %arg3[%c5_26, %c0_27] : memref<16x128xf32, #tpu.memory_space<vmem>>, vector<1x128xf32>
    %40 = arith.addf %38, %39 : vector<1x128xf32>
    %c5_28 = arith.constant 5 : index
    %c0_29 = arith.constant 0 : index
    %41 = vector.load %arg20[%c5_28, %c0_29] : memref<16x128xf32, #tpu.memory_space<vmem>>, vector<1x128xf32>
    tpu.vector_store %arg20[%c5_28, %c0_29], %40 {strides = array<i32>} : memref<16x128xf32, #tpu.memory_space<vmem>>, vector<1x128xf32>,
    %42 = arith.index_cast %arg0 : i32 to index
    %c6 = arith.constant 6 : index
    %43 = memref.load %arg1[%42, %c6] : memref<2x16xi32, #tpu.memory_space<smem>>
    %44 = arith.index_cast %43 : i32 to index
    %c0_30 = arith.constant 0 : index
    %45 = vector.load %arg2[%44, %c0_30] : memref<128x128xf32, #tpu.memory_space<vmem>>, vector<1x128xf32>
    %c6_31 = arith.constant 6 : index
    %c0_32 = arith.constant 0 : index
    %46 = vector.load %arg3[%c6_31, %c0_32] : memref<16x128xf32, #tpu.memory_space<vmem>>, vector<1x128xf32>
    %47 = arith.addf %45, %46 : vector<1x128xf32>
    %c6_33 = arith.constant 6 : index
    %c0_34 = arith.constant 0 : index
    %48 = vector.load %arg20[%c6_33, %c0_34] : memref<16x128xf32, #tpu.memory_space<vmem>>, vector<1x128xf32>
    tpu.vector_store %arg20[%c6_33, %c0_34], %47 {strides = array<i32>} : memref<16x128xf32, #tpu.memory_space<vmem>>, vector<1x128xf32>,
    %49 = arith.index_cast %arg0 : i32 to index
    %c7 = arith.constant 7 : index
    %50 = memref.load %arg1[%49, %c7] : memref<2x16xi32, #tpu.memory_space<smem>>
    %51 = arith.index_cast %50 : i32 to index
    %c0_35 = arith.constant 0 : index
    %52 = vector.load %arg2[%51, %c0_35] : memref<128x128xf32, #tpu.memory_space<vmem>>, vector<1x128xf32>
    %c7_36 = arith.constant 7 : index
    %c0_37 = arith.constant 0 : index
    %53 = vector.load %arg3[%c7_36, %c0_37] : memref<16x128xf32, #tpu.memory_space<vmem>>, vector<1x128xf32>
    %54 = arith.addf %52, %53 : vector<1x128xf32>
    %c7_38 = arith.constant 7 : index
    %c0_39 = arith.constant 0 : index
    %55 = vector.load %arg20[%c7_38, %c0_39] : memref<16x128xf32, #tpu.memory_space<vmem>>, vector<1x128xf32>
    tpu.vector_store %arg20[%c7_38, %c0_39], %54 {strides = array<i32>} : memref<16x128xf32, #tpu.memory_space<vmem>>, vector<1x128xf32>,
    %56 = arith.index_cast %arg0 : i32 to index
    %c8 = arith.constant 8 : index
    %57 = memref.load %arg1[%56, %c8] : memref<2x16xi32, #tpu.memory_space<smem>>
    %58 = arith.index_cast %57 : i32 to index
    %c0_40 = arith.constant 0 : index
    %59 = vector.load %arg2[%58, %c0_40] : memref<128x128xf32, #tpu.memory_space<vmem>>, vector<1x128xf32>
    %c8_41 = arith.constant 8 : index
    %c0_42 = arith.constant 0 : index
    %60 = vector.load %arg3[%c8_41, %c0_42] : memref<16x128xf32, #tpu.memory_space<vmem>>, vector<1x128xf32>
    %61 = arith.addf %59, %60 : vector<1x128xf32>
    %c8_43 = arith.constant 8 : index
    %c0_44 = arith.constant 0 : index
    %62 = vector.load %arg20[%c8_43, %c0_44] : memref<16x128xf32, #tpu.memory_space<vmem>>, vector<1x128xf32>
    tpu.vector_store %arg20[%c8_43, %c0_44], %61 {strides = array<i32>} : memref<16x128xf32, #tpu.memory_space<vmem>>, vector<1x128xf32>,
    %63 = arith.index_cast %arg0 : i32 to index
    %c9 = arith.constant 9 : index
    %64 = memref.load %arg1[%63, %c9] : memref<2x16xi32, #tpu.memory_space<smem>>
    %65 = arith.index_cast %64 : i32 to index
    %c0_45 = arith.constant 0 : index
    %66 = vector.load %arg2[%65, %c0_45] : memref<128x128xf32, #tpu.memory_space<vmem>>, vector<1x128xf32>
    %c9_46 = arith.constant 9 : index
    %c0_47 = arith.constant 0 : index
    %67 = vector.load %arg3[%c9_46, %c0_47] : memref<16x128xf32, #tpu.memory_space<vmem>>, vector<1x128xf32>
    %68 = arith.addf %66, %67 : vector<1x128xf32>
    %c9_48 = arith.constant 9 : index
    %c0_49 = arith.constant 0 : index
    %69 = vector.load %arg20[%c9_48, %c0_49] : memref<16x128xf32, #tpu.memory_space<vmem>>, vector<1x128xf32>
    tpu.vector_store %arg20[%c9_48, %c0_49], %68 {strides = array<i32>} : memref<16x128xf32, #tpu.memory_space<vmem>>, vector<1x128xf32>,
    %70 = arith.index_cast %arg0 : i32 to index
    %c10 = arith.constant 10 : index
    %71 = memref.load %arg1[%70, %c10] : memref<2x16xi32, #tpu.memory_space<smem>>
    %72 = arith.index_cast %71 : i32 to index
    %c0_50 = arith.constant 0 : index
    %73 = vector.load %arg2[%72, %c0_50] : memref<128x128xf32, #tpu.memory_space<vmem>>, vector<1x128xf32>
    %c10_51 = arith.constant 10 : index
    %c0_52 = arith.constant 0 : index
    %74 = vector.load %arg3[%c10_51, %c0_52] : memref<16x128xf32, #tpu.memory_space<vmem>>, vector<1x128xf32>
    %75 = arith.addf %73, %74 : vector<1x128xf32>
    %c10_53 = arith.constant 10 : index
    %c0_54 = arith.constant 0 : index
    %76 = vector.load %arg20[%c10_53, %c0_54] : memref<16x128xf32, #tpu.memory_space<vmem>>, vector<1x128xf32>
    tpu.vector_store %arg20[%c10_53, %c0_54], %75 {strides = array<i32>} : memref<16x128xf32, #tpu.memory_space<vmem>>, vector<1x128xf32>,
    %77 = arith.index_cast %arg0 : i32 to index
    %c11 = arith.constant 11 : index
    %78 = memref.load %arg1[%77, %c11] : memref<2x16xi32, #tpu.memory_space<smem>>
    %79 = arith.index_cast %78 : i32 to index
    %c0_55 = arith.constant 0 : index
    %80 = vector.load %arg2[%79, %c0_55] : memref<128x128xf32, #tpu.memory_space<vmem>>, vector<1x128xf32>
    %c11_56 = arith.constant 11 : index
    %c0_57 = arith.constant 0 : index
    %81 = vector.load %arg3[%c11_56, %c0_57] : memref<16x128xf32, #tpu.memory_space<vmem>>, vector<1x128xf32>
    %82 = arith.addf %80, %81 : vector<1x128xf32>
    %c11_58 = arith.constant 11 : index
    %c0_59 = arith.constant 0 : index
    %83 = vector.load %arg20[%c11_58, %c0_59] : memref<16x128xf32, #tpu.memory_space<vmem>>, vector<1x128xf32>
    tpu.vector_store %arg20[%c11_58, %c0_59], %82 {strides = array<i32>} : memref<16x128xf32, #tpu.memory_space<vmem>>, vector<1x128xf32>,
    %84 = arith.index_cast %arg0 : i32 to index
    %c12 = arith.constant 12 : index
    %85 = memref.load %arg1[%84, %c12] : memref<2x16xi32, #tpu.memory_space<smem>>
    %86 = arith.index_cast %85 : i32 to index
    %c0_60 = arith.constant 0 : index
    %87 = vector.load %arg2[%86, %c0_60] : memref<128x128xf32, #tpu.memory_space<vmem>>, vector<1x128xf32>
    %c12_61 = arith.constant 12 : index
    %c0_62 = arith.constant 0 : index
    %88 = vector.load %arg3[%c12_61, %c0_62] : memref<16x128xf32, #tpu.memory_space<vmem>>, vector<1x128xf32>
    %89 = arith.addf %87, %88 : vector<1x128xf32>
    %c12_63 = arith.constant 12 : index
    %c0_64 = arith.constant 0 : index
    %90 = vector.load %arg20[%c12_63, %c0_64] : memref<16x128xf32, #tpu.memory_space<vmem>>, vector<1x128xf32>
    tpu.vector_store %arg20[%c12_63, %c0_64], %89 {strides = array<i32>} : memref<16x128xf32, #tpu.memory_space<vmem>>, vector<1x128xf32>,
    %91 = arith.index_cast %arg0 : i32 to index
    %c13 = arith.constant 13 : index
    %92 = memref.load %arg1[%91, %c13] : memref<2x16xi32, #tpu.memory_space<smem>>
    %93 = arith.index_cast %92 : i32 to index
    %c0_65 = arith.constant 0 : index
    %94 = vector.load %arg2[%93, %c0_65] : memref<128x128xf32, #tpu.memory_space<vmem>>, vector<1x128xf32>
    %c13_66 = arith.constant 13 : index
    %c0_67 = arith.constant 0 : index
    %95 = vector.load %arg3[%c13_66, %c0_67] : memref<16x128xf32, #tpu.memory_space<vmem>>, vector<1x128xf32>
    %96 = arith.addf %94, %95 : vector<1x128xf32>
    %c13_68 = arith.constant 13 : index
    %c0_69 = arith.constant 0 : index
    %97 = vector.load %arg20[%c13_68, %c0_69] : memref<16x128xf32, #tpu.memory_space<vmem>>, vector<1x128xf32>
    tpu.vector_store %arg20[%c13_68, %c0_69], %96 {strides = array<i32>} : memref<16x128xf32, #tpu.memory_space<vmem>>, vector<1x128xf32>,
    %98 = arith.index_cast %arg0 : i32 to index
    %c14 = arith.constant 14 : index
    %99 = memref.load %arg1[%98, %c14] : memref<2x16xi32, #tpu.memory_space<smem>>
    %100 = arith.index_cast %99 : i32 to index
    %c0_70 = arith.constant 0 : index
    %101 = vector.load %arg2[%100, %c0_70] : memref<128x128xf32, #tpu.memory_space<vmem>>, vector<1x128xf32>
    %c14_71 = arith.constant 14 : index
    %c0_72 = arith.constant 0 : index
    %102 = vector.load %arg3[%c14_71, %c0_72] : memref<16x128xf32, #tpu.memory_space<vmem>>, vector<1x128xf32>
    %103 = arith.addf %101, %102 : vector<1x128xf32>
    %c14_73 = arith.constant 14 : index
    %c0_74 = arith.constant 0 : index
    %104 = vector.load %arg20[%c14_73, %c0_74] : memref<16x128xf32, #tpu.memory_space<vmem>>, vector<1x128xf32>
    tpu.vector_store %arg20[%c14_73, %c0_74], %103 {strides = array<i32>} : memref<16x128xf32, #tpu.memory_space<vmem>>, vector<1x128xf32>,
    %105 = arith.index_cast %arg0 : i32 to index
    %c15 = arith.constant 15 : index
    %106 = memref.load %arg1[%105, %c15] : memref<2x16xi32, #tpu.memory_space<smem>>
    %107 = arith.index_cast %106 : i32 to index
    %c0_75 = arith.constant 0 : index
    %108 = vector.load %arg2[%107, %c0_75] : memref<128x128xf32, #tpu.memory_space<vmem>>, vector<1x128xf32>
    %c15_76 = arith.constant 15 : index
    %c0_77 = arith.constant 0 : index
    %109 = vector.load %arg3[%c15_76, %c0_77] : memref<16x128xf32, #tpu.memory_space<vmem>>, vector<1x128xf32>
    %110 = arith.addf %108, %109 : vector<1x128xf32>
    %c15_78 = arith.constant 15 : index
    %c0_79 = arith.constant 0 : index
    %111 = vector.load %arg20[%c15_78, %c0_79] : memref<16x128xf32, #tpu.memory_space<vmem>>, vector<1x128xf32>
    tpu.vector_store %arg20[%c15_78, %c0_79], %110 {strides = array<i32>} : memref<16x128xf32, #tpu.memory_space<vmem>>, vector<1x128xf32>,
    %c0_80 = arith.constant 0 : index
    %c0_81 = arith.constant 0 : index
    %112 = vector.load %arg20[%c0_80, %c0_81] : memref<16x128xf32, #tpu.memory_space<vmem>>, vector<16x128xf32>
    %113 = tpu.iota {dimensions = array<i32: 0>} : vector<16x16xi32>
    %114 = tpu.iota {dimensions = array<i32: 1>} : vector<16x16xi32>
    %115 = arith.cmpi sle, %114, %113 : vector<16x16xi32>
    %cst = arith.constant 0.000000e+00 : f32
    %cst_82 = arith.constant -1.000000e+30 : f32
    %116 = vector.broadcast %cst : f32 to vector<16x16xf32>
    %117 = vector.broadcast %cst_82 : f32 to vector<16x16xf32>
    %118 = arith.select %115, %116, %117 : vector<16x16xi1>, vector<16x16xf32>
    %119 = arith.truncf %112 : vector<16x128xf32> to vector<16x128xbf16>
    %c0_83 = arith.constant 0 : index
    %c0_84 = arith.constant 0 : index
    %c0_85 = arith.constant 0 : index
    %120 = vector.load %arg4[%c0_83, %c0_84, %c0_85] : memref<2x128x384xbf16, #tpu.memory_space<vmem>>, vector<1x128x384xbf16>
    %121 = vector.shape_cast %120 : vector<1x128x384xbf16> to vector<128x384xbf16>
    %cst_86 = arith.constant dense<0.000000e+00> : vector<16x384xf32>
    %122 = tpu.matmul %119, %121, %cst_86 {dimension_numbers = #tpu.dot_dimension_numbers<[1], [0], [0], [1], [0, 0, 1, 1], [], []>} : vector<16x128xbf16>, vector<128x384xbf16>, vector<16x384xf32> -> vector<16x384xf32>
    %123 = vector.extract_strided_slice %122 {offsets = [0, 0], sizes = [16, 128], strides = [1, 1]} : vector<16x384xf32> to vector<16x128xf32>
    %124 = vector.extract_strided_slice %122 {offsets = [0, 128], sizes = [16, 128], strides = [1, 1]} : vector<16x384xf32> to vector<16x128xf32>
    %125 = vector.extract_strided_slice %122 {offsets = [0, 256], sizes = [16, 128], strides = [1, 1]} : vector<16x384xf32> to vector<16x128xf32>
    %126 = vector.extract_strided_slice %123 {offsets = [0, 0], sizes = [16, 32], strides = [1, 1]} : vector<16x128xf32> to vector<16x32xf32>
    %127 = vector.extract_strided_slice %124 {offsets = [0, 0], sizes = [16, 32], strides = [1, 1]} : vector<16x128xf32> to vector<16x32xf32>
    %128 = vector.extract_strided_slice %125 {offsets = [0, 0], sizes = [16, 32], strides = [1, 1]} : vector<16x128xf32> to vector<16x32xf32>
    %129 = tpu.transpose %127, [1, 0] : vector<16x32xf32> -> vector<32x16xf32>
    %cst_87 = arith.constant dense<0.000000e+00> : vector<16x16xf32>
    %130 = tpu.matmul %126, %129, %cst_87 {dimension_numbers = #tpu.dot_dimension_numbers<[1], [0], [0], [1], [0, 0, 1, 1], [], []>} : vector<16x32xf32>, vector<32x16xf32>, vector<16x16xf32> -> vector<16x16xf32>
    %cst_88 = arith.constant 0.176776692 : f32
    %131 = vector.broadcast %cst_88 : f32 to vector<16x16xf32>
    %132 = arith.mulf %130, %131 : vector<16x16xf32>
    %133 = arith.addf %132, %118 : vector<16x16xf32>
    %cst_89 = arith.constant dense<0xFF800000> : vector<16xf32>
    %134 = vector.multi_reduction <maximumf>, %133, %cst_89 [1] : vector<16x16xf32> to vector<16xf32>
    %135 = vector.shape_cast %134 : vector<16xf32> to vector<16x1xf32>
    %136 = vector.broadcast %135 : vector<16x1xf32> to vector<16x16xf32>
    %137 = arith.subf %133, %136 : vector<16x16xf32>
    %138 = math.exp %137 : vector<16x16xf32>
    %cst_90 = arith.constant dense<0.000000e+00> : vector<16xf32>
    %139 = vector.multi_reduction <add>, %138, %cst_90 [1] : vector<16x16xf32> to vector<16xf32>
    %140 = vector.shape_cast %139 : vector<16xf32> to vector<16x1xf32>
    %141 = tpu.reciprocal %140 {approx = true} : vector<16x1xf32> -> vector<16x1xf32>
    %142 = vector.broadcast %141 : vector<16x1xf32> to vector<16x16xf32>
    %143 = arith.mulf %138, %142 : vector<16x16xf32>
    %cst_91 = arith.constant dense<0.000000e+00> : vector<16x32xf32>
    %144 = tpu.matmul %143, %128, %cst_91 {dimension_numbers = #tpu.dot_dimension_numbers<[1], [0], [0], [1], [0, 0, 1, 1], [], []>} : vector<16x16xf32>, vector<16x32xf32>, vector<16x32xf32> -> vector<16x32xf32>
    %c0_92 = arith.constant 0 : index
    %c0_93 = arith.constant 0 : index
    %145 = vector.load %arg21[%c0_92, %c0_93] : memref<16x128xf32, #tpu.memory_space<vmem>>, vector<16x32xf32>
    tpu.vector_store %arg21[%c0_92, %c0_93], %144 {strides = array<i32>} : memref<16x128xf32, #tpu.memory_space<vmem>>, vector<16x32xf32>,
    %146 = vector.extract_strided_slice %123 {offsets = [0, 32], sizes = [16, 32], strides = [1, 1]} : vector<16x128xf32> to vector<16x32xf32>
    %147 = vector.extract_strided_slice %124 {offsets = [0, 32], sizes = [16, 32], strides = [1, 1]} : vector<16x128xf32> to vector<16x32xf32>
    %148 = vector.extract_strided_slice %125 {offsets = [0, 32], sizes = [16, 32], strides = [1, 1]} : vector<16x128xf32> to vector<16x32xf32>
    %149 = tpu.transpose %147, [1, 0] : vector<16x32xf32> -> vector<32x16xf32>
    %cst_94 = arith.constant dense<0.000000e+00> : vector<16x16xf32>
    %150 = tpu.matmul %146, %149, %cst_94 {dimension_numbers = #tpu.dot_dimension_numbers<[1], [0], [0], [1], [0, 0, 1, 1], [], []>} : vector<16x32xf32>, vector<32x16xf32>, vector<16x16xf32> -> vector<16x16xf32>
    %cst_95 = arith.constant 0.176776692 : f32
    %151 = vector.broadcast %cst_95 : f32 to vector<16x16xf32>
    %152 = arith.mulf %150, %151 : vector<16x16xf32>
    %153 = arith.addf %152, %118 : vector<16x16xf32>
    %cst_96 = arith.constant dense<0xFF800000> : vector<16xf32>
    %154 = vector.multi_reduction <maximumf>, %153, %cst_96 [1] : vector<16x16xf32> to vector<16xf32>
    %155 = vector.shape_cast %154 : vector<16xf32> to vector<16x1xf32>
    %156 = vector.broadcast %155 : vector<16x1xf32> to vector<16x16xf32>
    %157 = arith.subf %153, %156 : vector<16x16xf32>
    %158 = math.exp %157 : vector<16x16xf32>
    %cst_97 = arith.constant dense<0.000000e+00> : vector<16xf32>
    %159 = vector.multi_reduction <add>, %158, %cst_97 [1] : vector<16x16xf32> to vector<16xf32>
    %160 = vector.shape_cast %159 : vector<16xf32> to vector<16x1xf32>
    %161 = tpu.reciprocal %160 {approx = true} : vector<16x1xf32> -> vector<16x1xf32>
    %162 = vector.broadcast %161 : vector<16x1xf32> to vector<16x16xf32>
    %163 = arith.mulf %158, %162 : vector<16x16xf32>
    %cst_98 = arith.constant dense<0.000000e+00> : vector<16x32xf32>
    %164 = tpu.matmul %163, %148, %cst_98 {dimension_numbers = #tpu.dot_dimension_numbers<[1], [0], [0], [1], [0, 0, 1, 1], [], []>} : vector<16x16xf32>, vector<16x32xf32>, vector<16x32xf32> -> vector<16x32xf32>
    %c0_99 = arith.constant 0 : index
    %c32 = arith.constant 32 : index
    %165 = vector.load %arg21[%c0_99, %c32] : memref<16x128xf32, #tpu.memory_space<vmem>>, vector<16x32xf32>
    tpu.vector_store %arg21[%c0_99, %c32], %164 {strides = array<i32>} : memref<16x128xf32, #tpu.memory_space<vmem>>, vector<16x32xf32>,
    %166 = vector.extract_strided_slice %123 {offsets = [0, 64], sizes = [16, 32], strides = [1, 1]} : vector<16x128xf32> to vector<16x32xf32>
    %167 = vector.extract_strided_slice %124 {offsets = [0, 64], sizes = [16, 32], strides = [1, 1]} : vector<16x128xf32> to vector<16x32xf32>
    %168 = vector.extract_strided_slice %125 {offsets = [0, 64], sizes = [16, 32], strides = [1, 1]} : vector<16x128xf32> to vector<16x32xf32>
    %169 = tpu.transpose %167, [1, 0] : vector<16x32xf32> -> vector<32x16xf32>
    %cst_100 = arith.constant dense<0.000000e+00> : vector<16x16xf32>
    %170 = tpu.matmul %166, %169, %cst_100 {dimension_numbers = #tpu.dot_dimension_numbers<[1], [0], [0], [1], [0, 0, 1, 1], [], []>} : vector<16x32xf32>, vector<32x16xf32>, vector<16x16xf32> -> vector<16x16xf32>
    %cst_101 = arith.constant 0.176776692 : f32
    %171 = vector.broadcast %cst_101 : f32 to vector<16x16xf32>
    %172 = arith.mulf %170, %171 : vector<16x16xf32>
    %173 = arith.addf %172, %118 : vector<16x16xf32>
    %cst_102 = arith.constant dense<0xFF800000> : vector<16xf32>
    %174 = vector.multi_reduction <maximumf>, %173, %cst_102 [1] : vector<16x16xf32> to vector<16xf32>
    %175 = vector.shape_cast %174 : vector<16xf32> to vector<16x1xf32>
    %176 = vector.broadcast %175 : vector<16x1xf32> to vector<16x16xf32>
    %177 = arith.subf %173, %176 : vector<16x16xf32>
    %178 = math.exp %177 : vector<16x16xf32>
    %cst_103 = arith.constant dense<0.000000e+00> : vector<16xf32>
    %179 = vector.multi_reduction <add>, %178, %cst_103 [1] : vector<16x16xf32> to vector<16xf32>
    %180 = vector.shape_cast %179 : vector<16xf32> to vector<16x1xf32>
    %181 = tpu.reciprocal %180 {approx = true} : vector<16x1xf32> -> vector<16x1xf32>
    %182 = vector.broadcast %181 : vector<16x1xf32> to vector<16x16xf32>
    %183 = arith.mulf %178, %182 : vector<16x16xf32>
    %cst_104 = arith.constant dense<0.000000e+00> : vector<16x32xf32>
    %184 = tpu.matmul %183, %168, %cst_104 {dimension_numbers = #tpu.dot_dimension_numbers<[1], [0], [0], [1], [0, 0, 1, 1], [], []>} : vector<16x16xf32>, vector<16x32xf32>, vector<16x32xf32> -> vector<16x32xf32>
    %c0_105 = arith.constant 0 : index
    %c64 = arith.constant 64 : index
    %185 = vector.load %arg21[%c0_105, %c64] : memref<16x128xf32, #tpu.memory_space<vmem>>, vector<16x32xf32>
    tpu.vector_store %arg21[%c0_105, %c64], %184 {strides = array<i32>} : memref<16x128xf32, #tpu.memory_space<vmem>>, vector<16x32xf32>,
    %186 = vector.extract_strided_slice %123 {offsets = [0, 96], sizes = [16, 32], strides = [1, 1]} : vector<16x128xf32> to vector<16x32xf32>
    %187 = vector.extract_strided_slice %124 {offsets = [0, 96], sizes = [16, 32], strides = [1, 1]} : vector<16x128xf32> to vector<16x32xf32>
    %188 = vector.extract_strided_slice %125 {offsets = [0, 96], sizes = [16, 32], strides = [1, 1]} : vector<16x128xf32> to vector<16x32xf32>
    %189 = tpu.transpose %187, [1, 0] : vector<16x32xf32> -> vector<32x16xf32>
    %cst_106 = arith.constant dense<0.000000e+00> : vector<16x16xf32>
    %190 = tpu.matmul %186, %189, %cst_106 {dimension_numbers = #tpu.dot_dimension_numbers<[1], [0], [0], [1], [0, 0, 1, 1], [], []>} : vector<16x32xf32>, vector<32x16xf32>, vector<16x16xf32> -> vector<16x16xf32>
    %cst_107 = arith.constant 0.176776692 : f32
    %191 = vector.broadcast %cst_107 : f32 to vector<16x16xf32>
    %192 = arith.mulf %190, %191 : vector<16x16xf32>
    %193 = arith.addf %192, %118 : vector<16x16xf32>
    %cst_108 = arith.constant dense<0xFF800000> : vector<16xf32>
    %194 = vector.multi_reduction <maximumf>, %193, %cst_108 [1] : vector<16x16xf32> to vector<16xf32>
    %195 = vector.shape_cast %194 : vector<16xf32> to vector<16x1xf32>
    %196 = vector.broadcast %195 : vector<16x1xf32> to vector<16x16xf32>
    %197 = arith.subf %193, %196 : vector<16x16xf32>
    %198 = math.exp %197 : vector<16x16xf32>
    %cst_109 = arith.constant dense<0.000000e+00> : vector<16xf32>
    %199 = vector.multi_reduction <add>, %198, %cst_109 [1] : vector<16x16xf32> to vector<16xf32>
    %200 = vector.shape_cast %199 : vector<16xf32> to vector<16x1xf32>
    %201 = tpu.reciprocal %200 {approx = true} : vector<16x1xf32> -> vector<16x1xf32>
    %202 = vector.broadcast %201 : vector<16x1xf32> to vector<16x16xf32>
    %203 = arith.mulf %198, %202 : vector<16x16xf32>
    %cst_110 = arith.constant dense<0.000000e+00> : vector<16x32xf32>
    %204 = tpu.matmul %203, %188, %cst_110 {dimension_numbers = #tpu.dot_dimension_numbers<[1], [0], [0], [1], [0, 0, 1, 1], [], []>} : vector<16x16xf32>, vector<16x32xf32>, vector<16x32xf32> -> vector<16x32xf32>
    %c0_111 = arith.constant 0 : index
    %c96 = arith.constant 96 : index
    %205 = vector.load %arg21[%c0_111, %c96] : memref<16x128xf32, #tpu.memory_space<vmem>>, vector<16x32xf32>
    tpu.vector_store %arg21[%c0_111, %c96], %204 {strides = array<i32>} : memref<16x128xf32, #tpu.memory_space<vmem>>, vector<16x32xf32>,
    %c0_112 = arith.constant 0 : index
    %c0_113 = arith.constant 0 : index
    %206 = vector.load %arg21[%c0_112, %c0_113] : memref<16x128xf32, #tpu.memory_space<vmem>>, vector<16x128xf32>
    %207 = arith.truncf %206 : vector<16x128xf32> to vector<16x128xbf16>
    %c0_114 = arith.constant 0 : index
    %c0_115 = arith.constant 0 : index
    %c0_116 = arith.constant 0 : index
    %208 = vector.load %arg5[%c0_114, %c0_115, %c0_116] : memref<2x128x128xbf16, #tpu.memory_space<vmem>>, vector<1x128x128xbf16>
    %209 = vector.shape_cast %208 : vector<1x128x128xbf16> to vector<128x128xbf16>
    %cst_117 = arith.constant dense<0.000000e+00> : vector<16x128xf32>
    %210 = tpu.matmul %207, %209, %cst_117 {dimension_numbers = #tpu.dot_dimension_numbers<[1], [0], [0], [1], [0, 0, 1, 1], [], []>} : vector<16x128xbf16>, vector<128x128xbf16>, vector<16x128xf32> -> vector<16x128xf32>
    %c0_118 = arith.constant 0 : index
    %c0_119 = arith.constant 0 : index
    %c0_120 = arith.constant 0 : index
    %211 = vector.load %arg6[%c0_118, %c0_119, %c0_120] : memref<2x1x128xf32, #tpu.memory_space<vmem>>, vector<1x1x128xf32>
    %212 = vector.shape_cast %211 : vector<1x1x128xf32> to vector<1x128xf32>
    %213 = vector.broadcast %212 : vector<1x128xf32> to vector<16x128xf32>
    %214 = arith.addf %210, %213 : vector<16x128xf32>
    %215 = arith.addf %112, %214 : vector<16x128xf32>
    %c0_121 = arith.constant 0 : index
    %c0_122 = arith.constant 0 : index
    %c0_123 = arith.constant 0 : index
    %216 = vector.load %arg7[%c0_121, %c0_122, %c0_123] : memref<2x1x128xf32, #tpu.memory_space<vmem>>, vector<1x1x128xf32>
    %217 = vector.shape_cast %216 : vector<1x1x128xf32> to vector<1x128xf32>
    %c0_124 = arith.constant 0 : index
    %c0_125 = arith.constant 0 : index
    %c0_126 = arith.constant 0 : index
    %218 = vector.load %arg8[%c0_124, %c0_125, %c0_126] : memref<2x1x128xf32, #tpu.memory_space<vmem>>, vector<1x1x128xf32>
    %219 = vector.shape_cast %218 : vector<1x1x128xf32> to vector<1x128xf32>
    %cst_127 = arith.constant dense<0.000000e+00> : vector<16xf32>
    %220 = vector.multi_reduction <add>, %215, %cst_127 [1] : vector<16x128xf32> to vector<16xf32>
    %221 = vector.shape_cast %220 : vector<16xf32> to vector<16x1xf32>
    %cst_128 = arith.constant 1.280000e+02 : f32
    %222 = vector.broadcast %cst_128 : f32 to vector<16x1xf32>
    %223 = arith.divf %221, %222 : vector<16x1xf32>
    %224 = vector.broadcast %223 : vector<16x1xf32> to vector<16x128xf32>
    %225 = arith.subf %215, %224 : vector<16x128xf32>
    %226 = arith.mulf %225, %225 : vector<16x128xf32>
    %cst_129 = arith.constant dense<0.000000e+00> : vector<16xf32>
    %227 = vector.multi_reduction <add>, %226, %cst_129 [1] : vector<16x128xf32> to vector<16xf32>
    %228 = vector.shape_cast %227 : vector<16xf32> to vector<16x1xf32>
    %cst_130 = arith.constant 1.280000e+02 : f32
    %229 = vector.broadcast %cst_130 : f32 to vector<16x1xf32>
    %230 = arith.divf %228, %229 : vector<16x1xf32>
    %cst_131 = arith.constant 9.99999974E-6 : f32
    %231 = vector.broadcast %cst_131 : f32 to vector<16x1xf32>
    %232 = arith.addf %230, %231 : vector<16x1xf32>
    %233 = math.rsqrt %232 : vector<16x1xf32>
    %234 = vector.broadcast %233 : vector<16x1xf32> to vector<16x128xf32>
    %235 = arith.mulf %225, %234 : vector<16x128xf32>
    %236 = vector.broadcast %217 : vector<1x128xf32> to vector<16x128xf32>
    %237 = arith.mulf %235, %236 : vector<16x128xf32>
    %238 = vector.broadcast %219 : vector<1x128xf32> to vector<16x128xf32>
    %239 = arith.addf %237, %238 : vector<16x128xf32>
    %240 = arith.truncf %239 : vector<16x128xf32> to vector<16x128xbf16>
    %c0_132 = arith.constant 0 : index
    %c0_133 = arith.constant 0 : index
    %c0_134 = arith.constant 0 : index
    %241 = vector.load %arg9[%c0_132, %c0_133, %c0_134] : memref<2x128x512xbf16, #tpu.memory_space<vmem>>, vector<1x128x512xbf16>
    %242 = vector.shape_cast %241 : vector<1x128x512xbf16> to vector<128x512xbf16>
    %cst_135 = arith.constant dense<0.000000e+00> : vector<16x512xf32>
    %243 = tpu.matmul %240, %242, %cst_135 {dimension_numbers = #tpu.dot_dimension_numbers<[1], [0], [0], [1], [0, 0, 1, 1], [], []>} : vector<16x128xbf16>, vector<128x512xbf16>, vector<16x512xf32> -> vector<16x512xf32>
    %c0_136 = arith.constant 0 : index
    %c0_137 = arith.constant 0 : index
    %c0_138 = arith.constant 0 : index
    %244 = vector.load %arg10[%c0_136, %c0_137, %c0_138] : memref<2x1x512xf32, #tpu.memory_space<vmem>>, vector<1x1x512xf32>
    %245 = vector.shape_cast %244 : vector<1x1x512xf32> to vector<1x512xf32>
    %246 = vector.broadcast %245 : vector<1x512xf32> to vector<16x512xf32>
    %247 = arith.addf %243, %246 : vector<16x512xf32>
    %cst_139 = arith.constant 0.000000e+00 : f32
    %248 = vector.broadcast %cst_139 : f32 to vector<16x512xf32>
    %249 = arith.maximumf %247, %248 : vector<16x512xf32>
    %250 = arith.truncf %249 : vector<16x512xf32> to vector<16x512xbf16>
    %c0_140 = arith.constant 0 : index
    %c0_141 = arith.constant 0 : index
    %c0_142 = arith.constant 0 : index
    %251 = vector.load %arg11[%c0_140, %c0_141, %c0_142] : memref<2x512x128xbf16, #tpu.memory_space<vmem>>, vector<1x512x128xbf16>
    %252 = vector.shape_cast %251 : vector<1x512x128xbf16> to vector<512x128xbf16>
    %cst_143 = arith.constant dense<0.000000e+00> : vector<16x128xf32>
    %253 = tpu.matmul %250, %252, %cst_143 {dimension_numbers = #tpu.dot_dimension_numbers<[1], [0], [0], [1], [0, 0, 1, 1], [], []>} : vector<16x512xbf16>, vector<512x128xbf16>, vector<16x128xf32> -> vector<16x128xf32>
    %c0_144 = arith.constant 0 : index
    %c0_145 = arith.constant 0 : index
    %c0_146 = arith.constant 0 : index
    %254 = vector.load %arg12[%c0_144, %c0_145, %c0_146] : memref<2x1x128xf32, #tpu.memory_space<vmem>>, vector<1x1x128xf32>
    %255 = vector.shape_cast %254 : vector<1x1x128xf32> to vector<1x128xf32>
    %256 = vector.broadcast %255 : vector<1x128xf32> to vector<16x128xf32>
    %257 = arith.addf %253, %256 : vector<16x128xf32>
    %258 = arith.addf %239, %257 : vector<16x128xf32>
    %c0_147 = arith.constant 0 : index
    %c0_148 = arith.constant 0 : index
    %c0_149 = arith.constant 0 : index
    %259 = vector.load %arg13[%c0_147, %c0_148, %c0_149] : memref<2x1x128xf32, #tpu.memory_space<vmem>>, vector<1x1x128xf32>
    %260 = vector.shape_cast %259 : vector<1x1x128xf32> to vector<1x128xf32>
    %c0_150 = arith.constant 0 : index
    %c0_151 = arith.constant 0 : index
    %c0_152 = arith.constant 0 : index
    %261 = vector.load %arg14[%c0_150, %c0_151, %c0_152] : memref<2x1x128xf32, #tpu.memory_space<vmem>>, vector<1x1x128xf32>
    %262 = vector.shape_cast %261 : vector<1x1x128xf32> to vector<1x128xf32>
    %cst_153 = arith.constant dense<0.000000e+00> : vector<16xf32>
    %263 = vector.multi_reduction <add>, %258, %cst_153 [1] : vector<16x128xf32> to vector<16xf32>
    %264 = vector.shape_cast %263 : vector<16xf32> to vector<16x1xf32>
    %cst_154 = arith.constant 1.280000e+02 : f32
    %265 = vector.broadcast %cst_154 : f32 to vector<16x1xf32>
    %266 = arith.divf %264, %265 : vector<16x1xf32>
    %267 = vector.broadcast %266 : vector<16x1xf32> to vector<16x128xf32>
    %268 = arith.subf %258, %267 : vector<16x128xf32>
    %269 = arith.mulf %268, %268 : vector<16x128xf32>
    %cst_155 = arith.constant dense<0.000000e+00> : vector<16xf32>
    %270 = vector.multi_reduction <add>, %269, %cst_155 [1] : vector<16x128xf32> to vector<16xf32>
    %271 = vector.shape_cast %270 : vector<16xf32> to vector<16x1xf32>
    %cst_156 = arith.constant 1.280000e+02 : f32
    %272 = vector.broadcast %cst_156 : f32 to vector<16x1xf32>
    %273 = arith.divf %271, %272 : vector<16x1xf32>
    %cst_157 = arith.constant 9.99999974E-6 : f32
    %274 = vector.broadcast %cst_157 : f32 to vector<16x1xf32>
    %275 = arith.addf %273, %274 : vector<16x1xf32>
    %276 = math.rsqrt %275 : vector<16x1xf32>
    %277 = vector.broadcast %276 : vector<16x1xf32> to vector<16x128xf32>
    %278 = arith.mulf %268, %277 : vector<16x128xf32>
    %279 = vector.broadcast %260 : vector<1x128xf32> to vector<16x128xf32>
    %280 = arith.mulf %278, %279 : vector<16x128xf32>
    %281 = vector.broadcast %262 : vector<1x128xf32> to vector<16x128xf32>
    %282 = arith.addf %280, %281 : vector<16x128xf32>
    %283 = arith.truncf %282 : vector<16x128xf32> to vector<16x128xbf16>
    %c1_158 = arith.constant 1 : index
    %c0_159 = arith.constant 0 : index
    %c0_160 = arith.constant 0 : index
    %284 = vector.load %arg4[%c1_158, %c0_159, %c0_160] : memref<2x128x384xbf16, #tpu.memory_space<vmem>>, vector<1x128x384xbf16>
    %285 = vector.shape_cast %284 : vector<1x128x384xbf16> to vector<128x384xbf16>
    %cst_161 = arith.constant dense<0.000000e+00> : vector<16x384xf32>
    %286 = tpu.matmul %283, %285, %cst_161 {dimension_numbers = #tpu.dot_dimension_numbers<[1], [0], [0], [1], [0, 0, 1, 1], [], []>} : vector<16x128xbf16>, vector<128x384xbf16>, vector<16x384xf32> -> vector<16x384xf32>
    %287 = vector.extract_strided_slice %286 {offsets = [0, 0], sizes = [16, 128], strides = [1, 1]} : vector<16x384xf32> to vector<16x128xf32>
    %288 = vector.extract_strided_slice %286 {offsets = [0, 128], sizes = [16, 128], strides = [1, 1]} : vector<16x384xf32> to vector<16x128xf32>
    %289 = vector.extract_strided_slice %286 {offsets = [0, 256], sizes = [16, 128], strides = [1, 1]} : vector<16x384xf32> to vector<16x128xf32>
    %290 = vector.extract_strided_slice %287 {offsets = [0, 0], sizes = [16, 32], strides = [1, 1]} : vector<16x128xf32> to vector<16x32xf32>
    %291 = vector.extract_strided_slice %288 {offsets = [0, 0], sizes = [16, 32], strides = [1, 1]} : vector<16x128xf32> to vector<16x32xf32>
    %292 = vector.extract_strided_slice %289 {offsets = [0, 0], sizes = [16, 32], strides = [1, 1]} : vector<16x128xf32> to vector<16x32xf32>
    %293 = tpu.transpose %291, [1, 0] : vector<16x32xf32> -> vector<32x16xf32>
    %cst_162 = arith.constant dense<0.000000e+00> : vector<16x16xf32>
    %294 = tpu.matmul %290, %293, %cst_162 {dimension_numbers = #tpu.dot_dimension_numbers<[1], [0], [0], [1], [0, 0, 1, 1], [], []>} : vector<16x32xf32>, vector<32x16xf32>, vector<16x16xf32> -> vector<16x16xf32>
    %cst_163 = arith.constant 0.176776692 : f32
    %295 = vector.broadcast %cst_163 : f32 to vector<16x16xf32>
    %296 = arith.mulf %294, %295 : vector<16x16xf32>
    %297 = arith.addf %296, %118 : vector<16x16xf32>
    %cst_164 = arith.constant dense<0xFF800000> : vector<16xf32>
    %298 = vector.multi_reduction <maximumf>, %297, %cst_164 [1] : vector<16x16xf32> to vector<16xf32>
    %299 = vector.shape_cast %298 : vector<16xf32> to vector<16x1xf32>
    %300 = vector.broadcast %299 : vector<16x1xf32> to vector<16x16xf32>
    %301 = arith.subf %297, %300 : vector<16x16xf32>
    %302 = math.exp %301 : vector<16x16xf32>
    %cst_165 = arith.constant dense<0.000000e+00> : vector<16xf32>
    %303 = vector.multi_reduction <add>, %302, %cst_165 [1] : vector<16x16xf32> to vector<16xf32>
    %304 = vector.shape_cast %303 : vector<16xf32> to vector<16x1xf32>
    %305 = tpu.reciprocal %304 {approx = true} : vector<16x1xf32> -> vector<16x1xf32>
    %306 = vector.broadcast %305 : vector<16x1xf32> to vector<16x16xf32>
    %307 = arith.mulf %302, %306 : vector<16x16xf32>
    %cst_166 = arith.constant dense<0.000000e+00> : vector<16x32xf32>
    %308 = tpu.matmul %307, %292, %cst_166 {dimension_numbers = #tpu.dot_dimension_numbers<[1], [0], [0], [1], [0, 0, 1, 1], [], []>} : vector<16x16xf32>, vector<16x32xf32>, vector<16x32xf32> -> vector<16x32xf32>
    %c0_167 = arith.constant 0 : index
    %c0_168 = arith.constant 0 : index
    %309 = vector.load %arg21[%c0_167, %c0_168] : memref<16x128xf32, #tpu.memory_space<vmem>>, vector<16x32xf32>
    tpu.vector_store %arg21[%c0_167, %c0_168], %308 {strides = array<i32>} : memref<16x128xf32, #tpu.memory_space<vmem>>, vector<16x32xf32>,
    %310 = vector.extract_strided_slice %287 {offsets = [0, 32], sizes = [16, 32], strides = [1, 1]} : vector<16x128xf32> to vector<16x32xf32>
    %311 = vector.extract_strided_slice %288 {offsets = [0, 32], sizes = [16, 32], strides = [1, 1]} : vector<16x128xf32> to vector<16x32xf32>
    %312 = vector.extract_strided_slice %289 {offsets = [0, 32], sizes = [16, 32], strides = [1, 1]} : vector<16x128xf32> to vector<16x32xf32>
    %313 = tpu.transpose %311, [1, 0] : vector<16x32xf32> -> vector<32x16xf32>
    %cst_169 = arith.constant dense<0.000000e+00> : vector<16x16xf32>
    %314 = tpu.matmul %310, %313, %cst_169 {dimension_numbers = #tpu.dot_dimension_numbers<[1], [0], [0], [1], [0, 0, 1, 1], [], []>} : vector<16x32xf32>, vector<32x16xf32>, vector<16x16xf32> -> vector<16x16xf32>
    %cst_170 = arith.constant 0.176776692 : f32
    %315 = vector.broadcast %cst_170 : f32 to vector<16x16xf32>
    %316 = arith.mulf %314, %315 : vector<16x16xf32>
    %317 = arith.addf %316, %118 : vector<16x16xf32>
    %cst_171 = arith.constant dense<0xFF800000> : vector<16xf32>
    %318 = vector.multi_reduction <maximumf>, %317, %cst_171 [1] : vector<16x16xf32> to vector<16xf32>
    %319 = vector.shape_cast %318 : vector<16xf32> to vector<16x1xf32>
    %320 = vector.broadcast %319 : vector<16x1xf32> to vector<16x16xf32>
    %321 = arith.subf %317, %320 : vector<16x16xf32>
    %322 = math.exp %321 : vector<16x16xf32>
    %cst_172 = arith.constant dense<0.000000e+00> : vector<16xf32>
    %323 = vector.multi_reduction <add>, %322, %cst_172 [1] : vector<16x16xf32> to vector<16xf32>
    %324 = vector.shape_cast %323 : vector<16xf32> to vector<16x1xf32>
    %325 = tpu.reciprocal %324 {approx = true} : vector<16x1xf32> -> vector<16x1xf32>
    %326 = vector.broadcast %325 : vector<16x1xf32> to vector<16x16xf32>
    %327 = arith.mulf %322, %326 : vector<16x16xf32>
    %cst_173 = arith.constant dense<0.000000e+00> : vector<16x32xf32>
    %328 = tpu.matmul %327, %312, %cst_173 {dimension_numbers = #tpu.dot_dimension_numbers<[1], [0], [0], [1], [0, 0, 1, 1], [], []>} : vector<16x16xf32>, vector<16x32xf32>, vector<16x32xf32> -> vector<16x32xf32>
    %c0_174 = arith.constant 0 : index
    %c32_175 = arith.constant 32 : index
    %329 = vector.load %arg21[%c0_174, %c32_175] : memref<16x128xf32, #tpu.memory_space<vmem>>, vector<16x32xf32>
    tpu.vector_store %arg21[%c0_174, %c32_175], %328 {strides = array<i32>} : memref<16x128xf32, #tpu.memory_space<vmem>>, vector<16x32xf32>,
    %330 = vector.extract_strided_slice %287 {offsets = [0, 64], sizes = [16, 32], strides = [1, 1]} : vector<16x128xf32> to vector<16x32xf32>
    %331 = vector.extract_strided_slice %288 {offsets = [0, 64], sizes = [16, 32], strides = [1, 1]} : vector<16x128xf32> to vector<16x32xf32>
    %332 = vector.extract_strided_slice %289 {offsets = [0, 64], sizes = [16, 32], strides = [1, 1]} : vector<16x128xf32> to vector<16x32xf32>
    %333 = tpu.transpose %331, [1, 0] : vector<16x32xf32> -> vector<32x16xf32>
    %cst_176 = arith.constant dense<0.000000e+00> : vector<16x16xf32>
    %334 = tpu.matmul %330, %333, %cst_176 {dimension_numbers = #tpu.dot_dimension_numbers<[1], [0], [0], [1], [0, 0, 1, 1], [], []>} : vector<16x32xf32>, vector<32x16xf32>, vector<16x16xf32> -> vector<16x16xf32>
    %cst_177 = arith.constant 0.176776692 : f32
    %335 = vector.broadcast %cst_177 : f32 to vector<16x16xf32>
    %336 = arith.mulf %334, %335 : vector<16x16xf32>
    %337 = arith.addf %336, %118 : vector<16x16xf32>
    %cst_178 = arith.constant dense<0xFF800000> : vector<16xf32>
    %338 = vector.multi_reduction <maximumf>, %337, %cst_178 [1] : vector<16x16xf32> to vector<16xf32>
    %339 = vector.shape_cast %338 : vector<16xf32> to vector<16x1xf32>
    %340 = vector.broadcast %339 : vector<16x1xf32> to vector<16x16xf32>
    %341 = arith.subf %337, %340 : vector<16x16xf32>
    %342 = math.exp %341 : vector<16x16xf32>
    %cst_179 = arith.constant dense<0.000000e+00> : vector<16xf32>
    %343 = vector.multi_reduction <add>, %342, %cst_179 [1] : vector<16x16xf32> to vector<16xf32>
    %344 = vector.shape_cast %343 : vector<16xf32> to vector<16x1xf32>
    %345 = tpu.reciprocal %344 {approx = true} : vector<16x1xf32> -> vector<16x1xf32>
    %346 = vector.broadcast %345 : vector<16x1xf32> to vector<16x16xf32>
    %347 = arith.mulf %342, %346 : vector<16x16xf32>
    %cst_180 = arith.constant dense<0.000000e+00> : vector<16x32xf32>
    %348 = tpu.matmul %347, %332, %cst_180 {dimension_numbers = #tpu.dot_dimension_numbers<[1], [0], [0], [1], [0, 0, 1, 1], [], []>} : vector<16x16xf32>, vector<16x32xf32>, vector<16x32xf32> -> vector<16x32xf32>
    %c0_181 = arith.constant 0 : index
    %c64_182 = arith.constant 64 : index
    %349 = vector.load %arg21[%c0_181, %c64_182] : memref<16x128xf32, #tpu.memory_space<vmem>>, vector<16x32xf32>
    tpu.vector_store %arg21[%c0_181, %c64_182], %348 {strides = array<i32>} : memref<16x128xf32, #tpu.memory_space<vmem>>, vector<16x32xf32>,
    %350 = vector.extract_strided_slice %287 {offsets = [0, 96], sizes = [16, 32], strides = [1, 1]} : vector<16x128xf32> to vector<16x32xf32>
    %351 = vector.extract_strided_slice %288 {offsets = [0, 96], sizes = [16, 32], strides = [1, 1]} : vector<16x128xf32> to vector<16x32xf32>
    %352 = vector.extract_strided_slice %289 {offsets = [0, 96], sizes = [16, 32], strides = [1, 1]} : vector<16x128xf32> to vector<16x32xf32>
    %353 = tpu.transpose %351, [1, 0] : vector<16x32xf32> -> vector<32x16xf32>
    %cst_183 = arith.constant dense<0.000000e+00> : vector<16x16xf32>
    %354 = tpu.matmul %350, %353, %cst_183 {dimension_numbers = #tpu.dot_dimension_numbers<[1], [0], [0], [1], [0, 0, 1, 1], [], []>} : vector<16x32xf32>, vector<32x16xf32>, vector<16x16xf32> -> vector<16x16xf32>
    %cst_184 = arith.constant 0.176776692 : f32
    %355 = vector.broadcast %cst_184 : f32 to vector<16x16xf32>
    %356 = arith.mulf %354, %355 : vector<16x16xf32>
    %357 = arith.addf %356, %118 : vector<16x16xf32>
    %cst_185 = arith.constant dense<0xFF800000> : vector<16xf32>
    %358 = vector.multi_reduction <maximumf>, %357, %cst_185 [1] : vector<16x16xf32> to vector<16xf32>
    %359 = vector.shape_cast %358 : vector<16xf32> to vector<16x1xf32>
    %360 = vector.broadcast %359 : vector<16x1xf32> to vector<16x16xf32>
    %361 = arith.subf %357, %360 : vector<16x16xf32>
    %362 = math.exp %361 : vector<16x16xf32>
    %cst_186 = arith.constant dense<0.000000e+00> : vector<16xf32>
    %363 = vector.multi_reduction <add>, %362, %cst_186 [1] : vector<16x16xf32> to vector<16xf32>
    %364 = vector.shape_cast %363 : vector<16xf32> to vector<16x1xf32>
    %365 = tpu.reciprocal %364 {approx = true} : vector<16x1xf32> -> vector<16x1xf32>
    %366 = vector.broadcast %365 : vector<16x1xf32> to vector<16x16xf32>
    %367 = arith.mulf %362, %366 : vector<16x16xf32>
    %cst_187 = arith.constant dense<0.000000e+00> : vector<16x32xf32>
    %368 = tpu.matmul %367, %352, %cst_187 {dimension_numbers = #tpu.dot_dimension_numbers<[1], [0], [0], [1], [0, 0, 1, 1], [], []>} : vector<16x16xf32>, vector<16x32xf32>, vector<16x32xf32> -> vector<16x32xf32>
    %c0_188 = arith.constant 0 : index
    %c96_189 = arith.constant 96 : index
    %369 = vector.load %arg21[%c0_188, %c96_189] : memref<16x128xf32, #tpu.memory_space<vmem>>, vector<16x32xf32>
    tpu.vector_store %arg21[%c0_188, %c96_189], %368 {strides = array<i32>} : memref<16x128xf32, #tpu.memory_space<vmem>>, vector<16x32xf32>,
    %c0_190 = arith.constant 0 : index
    %c0_191 = arith.constant 0 : index
    %370 = vector.load %arg21[%c0_190, %c0_191] : memref<16x128xf32, #tpu.memory_space<vmem>>, vector<16x128xf32>
    %371 = arith.truncf %370 : vector<16x128xf32> to vector<16x128xbf16>
    %c1_192 = arith.constant 1 : index
    %c0_193 = arith.constant 0 : index
    %c0_194 = arith.constant 0 : index
    %372 = vector.load %arg5[%c1_192, %c0_193, %c0_194] : memref<2x128x128xbf16, #tpu.memory_space<vmem>>, vector<1x128x128xbf16>
    %373 = vector.shape_cast %372 : vector<1x128x128xbf16> to vector<128x128xbf16>
    %cst_195 = arith.constant dense<0.000000e+00> : vector<16x128xf32>
    %374 = tpu.matmul %371, %373, %cst_195 {dimension_numbers = #tpu.dot_dimension_numbers<[1], [0], [0], [1], [0, 0, 1, 1], [], []>} : vector<16x128xbf16>, vector<128x128xbf16>, vector<16x128xf32> -> vector<16x128xf32>
    %c1_196 = arith.constant 1 : index
    %c0_197 = arith.constant 0 : index
    %c0_198 = arith.constant 0 : index
    %375 = vector.load %arg6[%c1_196, %c0_197, %c0_198] : memref<2x1x128xf32, #tpu.memory_space<vmem>>, vector<1x1x128xf32>
    %376 = vector.shape_cast %375 : vector<1x1x128xf32> to vector<1x128xf32>
    %377 = vector.broadcast %376 : vector<1x128xf32> to vector<16x128xf32>
    %378 = arith.addf %374, %377 : vector<16x128xf32>
    %379 = arith.addf %282, %378 : vector<16x128xf32>
    %c1_199 = arith.constant 1 : index
    %c0_200 = arith.constant 0 : index
    %c0_201 = arith.constant 0 : index
    %380 = vector.load %arg7[%c1_199, %c0_200, %c0_201] : memref<2x1x128xf32, #tpu.memory_space<vmem>>, vector<1x1x128xf32>
    %381 = vector.shape_cast %380 : vector<1x1x128xf32> to vector<1x128xf32>
    %c1_202 = arith.constant 1 : index
    %c0_203 = arith.constant 0 : index
    %c0_204 = arith.constant 0 : index
    %382 = vector.load %arg8[%c1_202, %c0_203, %c0_204] : memref<2x1x128xf32, #tpu.memory_space<vmem>>, vector<1x1x128xf32>
    %383 = vector.shape_cast %382 : vector<1x1x128xf32> to vector<1x128xf32>
    %cst_205 = arith.constant dense<0.000000e+00> : vector<16xf32>
    %384 = vector.multi_reduction <add>, %379, %cst_205 [1] : vector<16x128xf32> to vector<16xf32>
    %385 = vector.shape_cast %384 : vector<16xf32> to vector<16x1xf32>
    %cst_206 = arith.constant 1.280000e+02 : f32
    %386 = vector.broadcast %cst_206 : f32 to vector<16x1xf32>
    %387 = arith.divf %385, %386 : vector<16x1xf32>
    %388 = vector.broadcast %387 : vector<16x1xf32> to vector<16x128xf32>
    %389 = arith.subf %379, %388 : vector<16x128xf32>
    %390 = arith.mulf %389, %389 : vector<16x128xf32>
    %cst_207 = arith.constant dense<0.000000e+00> : vector<16xf32>
    %391 = vector.multi_reduction <add>, %390, %cst_207 [1] : vector<16x128xf32> to vector<16xf32>
    %392 = vector.shape_cast %391 : vector<16xf32> to vector<16x1xf32>
    %cst_208 = arith.constant 1.280000e+02 : f32
    %393 = vector.broadcast %cst_208 : f32 to vector<16x1xf32>
    %394 = arith.divf %392, %393 : vector<16x1xf32>
    %cst_209 = arith.constant 9.99999974E-6 : f32
    %395 = vector.broadcast %cst_209 : f32 to vector<16x1xf32>
    %396 = arith.addf %394, %395 : vector<16x1xf32>
    %397 = math.rsqrt %396 : vector<16x1xf32>
    %398 = vector.broadcast %397 : vector<16x1xf32> to vector<16x128xf32>
    %399 = arith.mulf %389, %398 : vector<16x128xf32>
    %400 = vector.broadcast %381 : vector<1x128xf32> to vector<16x128xf32>
    %401 = arith.mulf %399, %400 : vector<16x128xf32>
    %402 = vector.broadcast %383 : vector<1x128xf32> to vector<16x128xf32>
    %403 = arith.addf %401, %402 : vector<16x128xf32>
    %404 = arith.truncf %403 : vector<16x128xf32> to vector<16x128xbf16>
    %c1_210 = arith.constant 1 : index
    %c0_211 = arith.constant 0 : index
    %c0_212 = arith.constant 0 : index
    %405 = vector.load %arg9[%c1_210, %c0_211, %c0_212] : memref<2x128x512xbf16, #tpu.memory_space<vmem>>, vector<1x128x512xbf16>
    %406 = vector.shape_cast %405 : vector<1x128x512xbf16> to vector<128x512xbf16>
    %cst_213 = arith.constant dense<0.000000e+00> : vector<16x512xf32>
    %407 = tpu.matmul %404, %406, %cst_213 {dimension_numbers = #tpu.dot_dimension_numbers<[1], [0], [0], [1], [0, 0, 1, 1], [], []>} : vector<16x128xbf16>, vector<128x512xbf16>, vector<16x512xf32> -> vector<16x512xf32>
    %c1_214 = arith.constant 1 : index
    %c0_215 = arith.constant 0 : index
    %c0_216 = arith.constant 0 : index
    %408 = vector.load %arg10[%c1_214, %c0_215, %c0_216] : memref<2x1x512xf32, #tpu.memory_space<vmem>>, vector<1x1x512xf32>
    %409 = vector.shape_cast %408 : vector<1x1x512xf32> to vector<1x512xf32>
    %410 = vector.broadcast %409 : vector<1x512xf32> to vector<16x512xf32>
    %411 = arith.addf %407, %410 : vector<16x512xf32>
    %cst_217 = arith.constant 0.000000e+00 : f32
    %412 = vector.broadcast %cst_217 : f32 to vector<16x512xf32>
    %413 = arith.maximumf %411, %412 : vector<16x512xf32>
    %414 = arith.truncf %413 : vector<16x512xf32> to vector<16x512xbf16>
    %c1_218 = arith.constant 1 : index
    %c0_219 = arith.constant 0 : index
    %c0_220 = arith.constant 0 : index
    %415 = vector.load %arg11[%c1_218, %c0_219, %c0_220] : memref<2x512x128xbf16, #tpu.memory_space<vmem>>, vector<1x512x128xbf16>
    %416 = vector.shape_cast %415 : vector<1x512x128xbf16> to vector<512x128xbf16>
    %cst_221 = arith.constant dense<0.000000e+00> : vector<16x128xf32>
    %417 = tpu.matmul %414, %416, %cst_221 {dimension_numbers = #tpu.dot_dimension_numbers<[1], [0], [0], [1], [0, 0, 1, 1], [], []>} : vector<16x512xbf16>, vector<512x128xbf16>, vector<16x128xf32> -> vector<16x128xf32>
    %c1_222 = arith.constant 1 : index
    %c0_223 = arith.constant 0 : index
    %c0_224 = arith.constant 0 : index
    %418 = vector.load %arg12[%c1_222, %c0_223, %c0_224] : memref<2x1x128xf32, #tpu.memory_space<vmem>>, vector<1x1x128xf32>
    %419 = vector.shape_cast %418 : vector<1x1x128xf32> to vector<1x128xf32>
    %420 = vector.broadcast %419 : vector<1x128xf32> to vector<16x128xf32>
    %421 = arith.addf %417, %420 : vector<16x128xf32>
    %422 = arith.addf %403, %421 : vector<16x128xf32>
    %c1_225 = arith.constant 1 : index
    %c0_226 = arith.constant 0 : index
    %c0_227 = arith.constant 0 : index
    %423 = vector.load %arg13[%c1_225, %c0_226, %c0_227] : memref<2x1x128xf32, #tpu.memory_space<vmem>>, vector<1x1x128xf32>
    %424 = vector.shape_cast %423 : vector<1x1x128xf32> to vector<1x128xf32>
    %c1_228 = arith.constant 1 : index
    %c0_229 = arith.constant 0 : index
    %c0_230 = arith.constant 0 : index
    %425 = vector.load %arg14[%c1_228, %c0_229, %c0_230] : memref<2x1x128xf32, #tpu.memory_space<vmem>>, vector<1x1x128xf32>
    %426 = vector.shape_cast %425 : vector<1x1x128xf32> to vector<1x128xf32>
    %cst_231 = arith.constant dense<0.000000e+00> : vector<16xf32>
    %427 = vector.multi_reduction <add>, %422, %cst_231 [1] : vector<16x128xf32> to vector<16xf32>
    %428 = vector.shape_cast %427 : vector<16xf32> to vector<16x1xf32>
    %cst_232 = arith.constant 1.280000e+02 : f32
    %429 = vector.broadcast %cst_232 : f32 to vector<16x1xf32>
    %430 = arith.divf %428, %429 : vector<16x1xf32>
    %431 = vector.broadcast %430 : vector<16x1xf32> to vector<16x128xf32>
    %432 = arith.subf %422, %431 : vector<16x128xf32>
    %433 = arith.mulf %432, %432 : vector<16x128xf32>
    %cst_233 = arith.constant dense<0.000000e+00> : vector<16xf32>
    %434 = vector.multi_reduction <add>, %433, %cst_233 [1] : vector<16x128xf32> to vector<16xf32>
    %435 = vector.shape_cast %434 : vector<16xf32> to vector<16x1xf32>
    %cst_234 = arith.constant 1.280000e+02 : f32
    %436 = vector.broadcast %cst_234 : f32 to vector<16x1xf32>
    %437 = arith.divf %435, %436 : vector<16x1xf32>
    %cst_235 = arith.constant 9.99999974E-6 : f32
    %438 = vector.broadcast %cst_235 : f32 to vector<16x1xf32>
    %439 = arith.addf %437, %438 : vector<16x1xf32>
    %440 = math.rsqrt %439 : vector<16x1xf32>
    %441 = vector.broadcast %440 : vector<16x1xf32> to vector<16x128xf32>
    %442 = arith.mulf %432, %441 : vector<16x128xf32>
    %443 = vector.broadcast %424 : vector<1x128xf32> to vector<16x128xf32>
    %444 = arith.mulf %442, %443 : vector<16x128xf32>
    %445 = vector.broadcast %426 : vector<1x128xf32> to vector<16x128xf32>
    %446 = arith.addf %444, %445 : vector<16x128xf32>
    %c0_236 = arith.constant 0 : index
    %c0_237 = arith.constant 0 : index
    %447 = vector.load %arg15[%c0_236, %c0_237] : memref<1x128xf32, #tpu.memory_space<vmem>>, vector<1x128xf32>
    %c0_238 = arith.constant 0 : index
    %c0_239 = arith.constant 0 : index
    %448 = vector.load %arg16[%c0_238, %c0_239] : memref<1x128xf32, #tpu.memory_space<vmem>>, vector<1x128xf32>
    %cst_240 = arith.constant dense<0.000000e+00> : vector<16xf32>
    %449 = vector.multi_reduction <add>, %446, %cst_240 [1] : vector<16x128xf32> to vector<16xf32>
    %450 = vector.shape_cast %449 : vector<16xf32> to vector<16x1xf32>
    %cst_241 = arith.constant 1.280000e+02 : f32
    %451 = vector.broadcast %cst_241 : f32 to vector<16x1xf32>
    %452 = arith.divf %450, %451 : vector<16x1xf32>
    %453 = vector.broadcast %452 : vector<16x1xf32> to vector<16x128xf32>
    %454 = arith.subf %446, %453 : vector<16x128xf32>
    %455 = arith.mulf %454, %454 : vector<16x128xf32>
    %cst_242 = arith.constant dense<0.000000e+00> : vector<16xf32>
    %456 = vector.multi_reduction <add>, %455, %cst_242 [1] : vector<16x128xf32> to vector<16xf32>
    %457 = vector.shape_cast %456 : vector<16xf32> to vector<16x1xf32>
    %cst_243 = arith.constant 1.280000e+02 : f32
    %458 = vector.broadcast %cst_243 : f32 to vector<16x1xf32>
    %459 = arith.divf %457, %458 : vector<16x1xf32>
    %cst_244 = arith.constant 9.99999974E-6 : f32
    %460 = vector.broadcast %cst_244 : f32 to vector<16x1xf32>
    %461 = arith.addf %459, %460 : vector<16x1xf32>
    %462 = math.rsqrt %461 : vector<16x1xf32>
    %463 = vector.broadcast %462 : vector<16x1xf32> to vector<16x128xf32>
    %464 = arith.mulf %454, %463 : vector<16x128xf32>
    %465 = vector.broadcast %447 : vector<1x128xf32> to vector<16x128xf32>
    %466 = arith.mulf %464, %465 : vector<16x128xf32>
    %467 = vector.broadcast %448 : vector<1x128xf32> to vector<16x128xf32>
    %468 = arith.addf %466, %467 : vector<16x128xf32>
    %469 = arith.truncf %468 : vector<16x128xf32> to vector<16x128xbf16>
    %c0_245 = arith.constant 0 : index
    %c0_246 = arith.constant 0 : index
    %470 = vector.load %arg17[%c0_245, %c0_246] : memref<128x128xbf16, #tpu.memory_space<vmem>>, vector<128x128xbf16>
    %cst_247 = arith.constant dense<0.000000e+00> : vector<16x128xf32>
    %471 = tpu.matmul %469, %470, %cst_247 {dimension_numbers = #tpu.dot_dimension_numbers<[1], [0], [0], [1], [0, 0, 1, 1], [], []>} : vector<16x128xbf16>, vector<128x128xbf16>, vector<16x128xf32> -> vector<16x128xf32>
    %c0_248 = arith.constant 0 : index
    %c0_249 = arith.constant 0 : index
    %472 = vector.load %arg18[%c0_248, %c0_249] : memref<1x128xf32, #tpu.memory_space<vmem>>, vector<1x128xf32>
    %473 = vector.broadcast %472 : vector<1x128xf32> to vector<16x128xf32>
    %474 = arith.addf %471, %473 : vector<16x128xf32>
    %c0_250 = arith.constant 0 : index
    %c0_251 = arith.constant 0 : index
    %c0_252 = arith.constant 0 : index
    %475 = vector.load %arg19[%c0_250, %c0_251, %c0_252] : memref<1x16x128xf32, #tpu.memory_space<vmem>>, vector<1x16x128xf32>
    %476 = vector.shape_cast %475 : vector<1x16x128xf32> to vector<16x128xf32>
    %477 = vector.shape_cast %474 : vector<16x128xf32> to vector<1x16x128xf32>
    tpu.vector_store %arg19[%c0_250, %c0_251, %c0_252], %477 {strides = array<i32>} : memref<1x16x128xf32, #tpu.memory_space<vmem>>, vector<1x16x128xf32>,
    return
  }
  func.func @transform_0(%arg0: i32, %arg1: memref<2x16xi32, #tpu.memory_space<smem>>) -> (i32, i32) {
    %c0_i32 = arith.constant 0 : i32
    %c0_i32_0 = arith.constant 0 : i32
    %c0_i32_1 = arith.constant 0 : i32
    return %c0_i32, %c0_i32_0 : i32, i32
  }
  func.func @transform_1(%arg0: i32, %arg1: memref<2x16xi32, #tpu.memory_space<smem>>) -> (i32, i32) {
    %c0_i32 = arith.constant 0 : i32
    %c0_i32_0 = arith.constant 0 : i32
    %c0_i32_1 = arith.constant 0 : i32
    return %c0_i32, %c0_i32_0 : i32, i32
  }
  func.func @transform_2(%arg0: i32, %arg1: memref<2x16xi32, #tpu.memory_space<smem>>) -> (i32, i32, i32) {
    %c0_i32 = arith.constant 0 : i32
    %c0_i32_0 = arith.constant 0 : i32
    %c0_i32_1 = arith.constant 0 : i32
    %c0_i32_2 = arith.constant 0 : i32
    return %c0_i32, %c0_i32_0, %c0_i32_1 : i32, i32, i32
  }
  func.func @transform_3(%arg0: i32, %arg1: memref<2x16xi32, #tpu.memory_space<smem>>) -> (i32, i32, i32) {
    %c0_i32 = arith.constant 0 : i32
    %c0_i32_0 = arith.constant 0 : i32
    %c0_i32_1 = arith.constant 0 : i32
    %c0_i32_2 = arith.constant 0 : i32
    return %c0_i32, %c0_i32_0, %c0_i32_1 : i32, i32, i32
  }
  func.func @transform_4(%arg0: i32, %arg1: memref<2x16xi32, #tpu.memory_space<smem>>) -> (i32, i32, i32) {
    %c0_i32 = arith.constant 0 : i32
    %c0_i32_0 = arith.constant 0 : i32
    %c0_i32_1 = arith.constant 0 : i32
    %c0_i32_2 = arith.constant 0 : i32
    return %c0_i32, %c0_i32_0, %c0_i32_1 : i32, i32, i32
  }
  func.func @transform_5(%arg0: i32, %arg1: memref<2x16xi32, #tpu.memory_space<smem>>) -> (i32, i32, i32) {
    %c0_i32 = arith.constant 0 : i32
    %c0_i32_0 = arith.constant 0 : i32
    %c0_i32_1 = arith.constant 0 : i32
    %c0_i32_2 = arith.constant 0 : i32
    return %c0_i32, %c0_i32_0, %c0_i32_1 : i32, i32, i32
  }
  func.func @transform_6(%arg0: i32, %arg1: memref<2x16xi32, #tpu.memory_space<smem>>) -> (i32, i32, i32) {
    %c0_i32 = arith.constant 0 : i32
    %c0_i32_0 = arith.constant 0 : i32
    %c0_i32_1 = arith.constant 0 : i32
    %c0_i32_2 = arith.constant 0 : i32
    return %c0_i32, %c0_i32_0, %c0_i32_1 : i32, i32, i32
  }
  func.func @transform_7(%arg0: i32, %arg1: memref<2x16xi32, #tpu.memory_space<smem>>) -> (i32, i32, i32) {
    %c0_i32 = arith.constant 0 : i32
    %c0_i32_0 = arith.constant 0 : i32
    %c0_i32_1 = arith.constant 0 : i32
    %c0_i32_2 = arith.constant 0 : i32
    return %c0_i32, %c0_i32_0, %c0_i32_1 : i32, i32, i32
  }
  func.func @transform_8(%arg0: i32, %arg1: memref<2x16xi32, #tpu.memory_space<smem>>) -> (i32, i32, i32) {
    %c0_i32 = arith.constant 0 : i32
    %c0_i32_0 = arith.constant 0 : i32
    %c0_i32_1 = arith.constant 0 : i32
    %c0_i32_2 = arith.constant 0 : i32
    return %c0_i32, %c0_i32_0, %c0_i32_1 : i32, i32, i32
  }
  func.func @transform_9(%arg0: i32, %arg1: memref<2x16xi32, #tpu.memory_space<smem>>) -> (i32, i32, i32) {
    %c0_i32 = arith.constant 0 : i32
    %c0_i32_0 = arith.constant 0 : i32
    %c0_i32_1 = arith.constant 0 : i32
    %c0_i32_2 = arith.constant 0 : i32
    return %c0_i32, %c0_i32_0, %c0_i32_1 : i32, i32, i32
  }
  func.func @transform_10(%arg0: i32, %arg1: memref<2x16xi32, #tpu.memory_space<smem>>) -> (i32, i32, i32) {
    %c0_i32 = arith.constant 0 : i32
    %c0_i32_0 = arith.constant 0 : i32
    %c0_i32_1 = arith.constant 0 : i32
    %c0_i32_2 = arith.constant 0 : i32
    return %c0_i32, %c0_i32_0, %c0_i32_1 : i32, i32, i32
  }
  func.func @transform_11(%arg0: i32, %arg1: memref<2x16xi32, #tpu.memory_space<smem>>) -> (i32, i32, i32) {
    %c0_i32 = arith.constant 0 : i32
    %c0_i32_0 = arith.constant 0 : i32
    %c0_i32_1 = arith.constant 0 : i32
    %c0_i32_2 = arith.constant 0 : i32
    return %c0_i32, %c0_i32_0, %c0_i32_1 : i32, i32, i32
  }
  func.func @transform_12(%arg0: i32, %arg1: memref<2x16xi32, #tpu.memory_space<smem>>) -> (i32, i32, i32) {
    %c0_i32 = arith.constant 0 : i32
    %c0_i32_0 = arith.constant 0 : i32
    %c0_i32_1 = arith.constant 0 : i32
    %c0_i32_2 = arith.constant 0 : i32
    return %c0_i32, %c0_i32_0, %c0_i32_1 : i32, i32, i32
  }
  func.func @transform_13(%arg0: i32, %arg1: memref<2x16xi32, #tpu.memory_space<smem>>) -> (i32, i32) {
    %c0_i32 = arith.constant 0 : i32
    %c0_i32_0 = arith.constant 0 : i32
    %c0_i32_1 = arith.constant 0 : i32
    return %c0_i32, %c0_i32_0 : i32, i32
  }
  func.func @transform_14(%arg0: i32, %arg1: memref<2x16xi32, #tpu.memory_space<smem>>) -> (i32, i32) {
    %c0_i32 = arith.constant 0 : i32
    %c0_i32_0 = arith.constant 0 : i32
    %c0_i32_1 = arith.constant 0 : i32
    return %c0_i32, %c0_i32_0 : i32, i32
  }
  func.func @transform_15(%arg0: i32, %arg1: memref<2x16xi32, #tpu.memory_space<smem>>) -> (i32, i32) {
    %c0_i32 = arith.constant 0 : i32
    %c0_i32_0 = arith.constant 0 : i32
    %c0_i32_1 = arith.constant 0 : i32
    return %c0_i32, %c0_i32_0 : i32, i32
  }
  func.func @transform_16(%arg0: i32, %arg1: memref<2x16xi32, #tpu.memory_space<smem>>) -> (i32, i32) {
    %c0_i32 = arith.constant 0 : i32
    %c0_i32_0 = arith.constant 0 : i32
    %c0_i32_1 = arith.constant 0 : i32
    return %c0_i32, %c0_i32_0 : i32, i32
  }
  func.func @transform_17(%arg0: i32, %arg1: memref<2x16xi32, #tpu.memory_space<smem>>) -> (i32, i32, i32) {
    %c0_i32 = arith.constant 0 : i32
    %c0_i32_0 = arith.constant 0 : i32
    %c0_i32_1 = arith.constant 0 : i32
    return %arg0, %c0_i32, %c0_i32_0 : i32, i32, i32
  }
}

</mosaic_0001>

<llo_original>
// kernel: gpt_forward_fn.1
$region0: #{gpt_forward_fn.1}
  #allocation0 [shape = 'u32[]', space=smem, size = 0x4, offset = 0x4, fixed_abs, tag = 'smem constant byte address 0x4 - core index']
  #allocation1 [shape = 'u32[144,128]{1,0:T(1,128)}', space=vmem, size = 0x12000, scoped, tag = 'internal scratch']
  #allocation2 [shape = 'f32[16,128]{1,0:T(8,128)}', space=vmem, size = 0x2000, scoped, tag = 'scratch operand']
  #allocation3 [shape = 'f32[16,128]{1,0:T(8,128)}', space=vmem, size = 0x2000, scoped, tag = 'scratch operand']
  #allocation4 [shape = 's32[1]{0}', space=sflag, size = 0x4, scoped, tag = 'scoped memory for gpt_forward_fn.1']
  #allocation5 [shape = 'u8[1024]{0}', space=smem, size = 0x400, scoped, tag = 'prefetched SMEM operand 0']
  %s0 = inlined_call_operand.vmem [shape: s32[2,16], index: 0, kind: input, shape index: {}]
  %s1 = inlined_call_operand.hbm [shape: f32[128,128], index: 1, kind: input, shape index: {}]
  %s2 = inlined_call_operand.vmem [shape: f32[16,128], index: 2, kind: input, shape index: {}]
  %s3 = inlined_call_operand.hbm [shape: bf16[2,128,384], index: 3, kind: input, shape index: {}]
  %s4 = inlined_call_operand.hbm [shape: bf16[2,128,128], index: 4, kind: input, shape index: {}]
  %s5 = inlined_call_operand.vmem [shape: f32[2,1,128], index: 5, kind: input, shape index: {}]
  %s6 = inlined_call_operand.vmem [shape: f32[2,1,128], index: 6, kind: input, shape index: {}]
  %s7 = inlined_call_operand.vmem [shape: f32[2,1,128], index: 7, kind: input, shape index: {}]
  %s8 = inlined_call_operand.hbm [shape: bf16[2,128,512], index: 8, kind: input, shape index: {}]
  %s9 = inlined_call_operand.hbm [shape: f32[2,1,512], index: 9, kind: input, shape index: {}]
  %s10 = inlined_call_operand.hbm [shape: bf16[2,512,128], index: 10, kind: input, shape index: {}]
  %s11 = inlined_call_operand.hbm [shape: f32[2,1,128], index: 11, kind: input, shape index: {}]
  %s12 = inlined_call_operand.vmem [shape: f32[2,1,128], index: 12, kind: input, shape index: {}]
  %s13 = inlined_call_operand.vmem [shape: f32[2,1,128], index: 13, kind: input, shape index: {}]
  %s14 = inlined_call_operand.vmem [shape: f32[1,128], index: 14, kind: input, shape index: {}]
  %s15 = inlined_call_operand.vmem [shape: f32[1,128], index: 15, kind: input, shape index: {}]
  %s16 = inlined_call_operand.hbm [shape: bf16[128,128], index: 16, kind: input, shape index: {}]
  %s17 = inlined_call_operand.hbm [shape: f32[1,128], index: 17, kind: input, shape index: {}]
  %s18 = inlined_call_operand.hbm [shape: f32[2,16,128], index: 18, kind: output, shape index: {}]
  %s19 = sld [smem:[#allocation0]]
  $region137: #{gpt_forward_fn.1} parent=0
    _
  %s21 = ssub.s32 1, %s19
  %s22 = scalar_select 0, %s21, %s19
  %s23 = sshll.u32 %s0, 4
  %s24 = int_to_ptr.vmem [resolvable:$true] %s23
  %26 = dma.vmem_to_smem %s24, 32, [#allocation5], [#allocation4]
  %27 = dma.done [#allocation4], 32
  %28 = sfence
  $region1: #{gpt_forward_fn.1} parent=0
    #allocation6 [shape = 'u8[65536]{0}', space=vmem, size = 0x10000, scoped, tag = 'input window, operand 1, single buffered']
    #allocation7 [shape = 's32[2]{0}', space=sflag, size = 0x8, scoped, tag = 'scoped memory for gpt_forward_fn.1']
    #allocation8 [shape = 's32[2]{0}', space=sflag, size = 0x8, scoped, tag = 'scoped memory for gpt_forward_fn.1']
    #allocation9 [shape = 'u8[196608]{0}', space=vmem, size = 0x30000, scoped, tag = 'input window, operand 3, single buffered']
    #allocation10 [shape = 's32[1]{0}', space=sflag, size = 0x4, scoped, tag = 'scoped memory for gpt_forward_fn.1']
    #allocation11 [shape = 'u8[65536]{0}', space=vmem, size = 0x10000, scoped, tag = 'input window, operand 4, single buffered']
    #allocation12 [shape = 'u8[262144]{0}', space=vmem, size = 0x40000, scoped, tag = 'input window, operand 8, single buffered']
    #allocation13 [shape = 's32[1]{0}', space=sflag, size = 0x4, scoped, tag = 'scoped memory for gpt_forward_fn.1']
    #allocation14 [shape = 'u8[4096]{0}', space=vmem, size = 0x1000, scoped, tag = 'input window, operand 9, single buffered']
    #allocation15 [shape = 'u8[262144]{0}', space=vmem, size = 0x40000, scoped, tag = 'input window, operand 10, single buffered']
    #allocation16 [shape = 's32[1]{0}', space=sflag, size = 0x4, scoped, tag = 'scoped memory for gpt_forward_fn.1']
    #allocation17 [shape = 'u8[1024]{0}', space=vmem, size = 0x400, scoped, tag = 'input window, operand 11, single buffered']
    #allocation18 [shape = 'u8[32768]{0}', space=vmem, size = 0x8000, scoped, tag = 'input window, operand 16, single buffered']
    #allocation19 [shape = 's32[1]{0}', space=sflag, size = 0x4, scoped, tag = 'scoped memory for gpt_forward_fn.1']
    #allocation20 [shape = 'u8[512]{0}', space=vmem, size = 0x400, scoped, tag = 'input window, operand 17, single buffered']
    #allocation21 [shape = 'u8[16384]{0}', space=vmem, size = 0x4000, scoped, tag = 'output window, operand 0']
    %29 = vsyncpa [#allocation7], 0
    %30 = vsyncpa [#allocation10], 0
    %31 = vsyncpa [#allocation13], 0
    %32 = vsyncpa [#allocation16], 0
    %33 = vsyncpa [#allocation19], 0
    %34 = vsyncpa [#allocation8], 0
    %s35 = scalar_lea.sflag [#allocation8], 1
    %36 = vsyncpa %s35, 0
    loop: start=0, step=1, limit=4
    $region2: #{gpt_forward_fn.1} parent=1 // loop_pre_header
      _
    $region3: #{gpt_forward_fn.1} parent=1 // loop_header
      %s38 = sphi 0, %s42
      %p39 = scmp.ge.s32.totalorder %s38, 4
      %s46 = sphi 0, %s46
      %s48 = sphi 0, %s46
      %s49 = sphi 0, %s48
      %s63 = sphi 0, %s49
      %s67 = sphi 0, %s67
      %s69 = sphi 0, %s67
      %s70 = sphi 0, %s69
      %s84 = sphi 0, %s70
      %s88 = sphi 0, %s88
      %s90 = sphi 0, %s88
      %s91 = sphi 0, %s90
      %s105 = sphi 0, %s91
      %s109 = sphi 0, %s109
      %s111 = sphi 0, %s109
      %s112 = sphi 0, %s111
      %s126 = sphi 0, %s112
      %s130 = sphi 0, %s130
      %s132 = sphi 0, %s130
      %s133 = sphi 0, %s132
      %s147 = sphi 0, %s133
      %s151 = sphi 0, %s151
      %s153 = sphi 0, %s151
      %s154 = sphi 0, %s153
      %s168 = sphi 0, %s154
      %s172 = sphi 0, %s172
      %s174 = sphi 0, %s172
      %s175 = sphi 0, %s174
      %s189 = sphi 0, %s175
      %s193 = sphi 0, %s193
      %s195 = sphi 0, %s193
      %s196 = sphi 0, %s195
      %s210 = sphi 0, %s196
      %s214 = sphi 0, %s214
      %s216 = sphi 0, %s214
      %s217 = sphi 0, %s216
      %s231 = sphi 0, %s217
      %s235 = sphi 0, %s235
      %s237 = sphi 0, %s235
      %s238 = sphi 0, %s237
      %s252 = sphi 0, %s238
      %s256 = sphi 0, %s256
      %s258 = sphi 0, %s256
      %s259 = sphi 0, %s258
      %s273 = sphi 0, %s259
      %s277 = sphi 0, %s277
      %s279 = sphi 0, %s277
      %s280 = sphi 0, %s279
      %s294 = sphi 0, %s280
      %s298 = sphi 0, %s298
      %s300 = sphi 0, %s298
      %s301 = sphi 0, %s300
      %s315 = sphi 0, %s301
      %s319 = sphi 0, %s319
      %s321 = sphi 0, %s319
      %s322 = sphi 0, %s321
      %s336 = sphi 0, %s322
      %s340 = sphi 0, %s340
      %s342 = sphi 0, %s340
      %s343 = sphi 0, %s342
      %s357 = sphi 0, %s343
      %s361 = sphi 0, %s361
      %s363 = sphi 0, %s361
      %s364 = sphi 0, %s363
      %s378 = sphi 0, %s364
      %s382 = sphi 0, %s382
      %s384 = sphi 0, %s382
      %s385 = sphi 0, %s384
      %s399 = sphi 0, %s385
      %s405 = sphi 0, %s407
      %s408 = sphi 0, %s405
      %s409 = sphi 0, %s408
      %s425 = sphi 0, %s409
    $region4: #{gpt_forward_fn.1} parent=1 // loop_header_branch
      %41 = sbr.rel (%p39) target = $region8
    $region5: #{gpt_forward_fn.1} parent=1 // loop_body
      %s43 = ssub.s32 %s38, 1
      %s44 = ssub.s32 %s38, 2
      %s45 = sadd.s32 %s38, 1
      %s47 = sadd.s32 %s46, 1
      %p50 = scmp.eq.s32.totalorder %s38, 1
      %p51 = scmp.ne.s32.totalorder %s46, %s48
      %p52 = scmp.eq.s32.totalorder %s38, 0
      %p53 = por %p51, %p52
      %p54 = scmp.ne.s32.totalorder %s46, %s48
      %p55 = scmp.eq.s32.totalorder %s43, 1
      %p56 = por %p54, %p55
      %p57 = scmp.ne.s32.totalorder %s48, %s49
      %p58 = scmp.eq.s32.totalorder %s43, 0
      %p59 = por %p57, %p58
      %p60 = scmp.ne.s32.totalorder %s48, %s49
      %p61 = scmp.eq.s32.totalorder %s44, 1
      %p62 = por %p60, %p61
      %p64 = scmp.ne.s32.totalorder %s49, %s63
      %p65 = scmp.eq.s32.totalorder %s44, 0
      %p66 = por %p64, %p65
      %s68 = sadd.s32 %s67, 1
      %p71 = scmp.eq.s32.totalorder %s38, 1
      %p72 = scmp.ne.s32.totalorder %s67, %s69
      %p73 = scmp.eq.s32.totalorder %s38, 0
      %p74 = por %p72, %p73
      %p75 = scmp.ne.s32.totalorder %s67, %s69
      %p76 = scmp.eq.s32.totalorder %s43, 1
      %p77 = por %p75, %p76
      %p78 = scmp.ne.s32.totalorder %s69, %s70
      %p79 = scmp.eq.s32.totalorder %s43, 0
      %p80 = por %p78, %p79
      %p81 = scmp.ne.s32.totalorder %s69, %s70
      %p82 = scmp.eq.s32.totalorder %s44, 1
      %p83 = por %p81, %p82
      %p85 = scmp.ne.s32.totalorder %s70, %s84
      %p86 = scmp.eq.s32.totalorder %s44, 0
      %p87 = por %p85, %p86
      %s89 = sadd.s32 %s88, 1
      %p92 = scmp.eq.s32.totalorder %s38, 1
      %p93 = scmp.ne.s32.totalorder %s88, %s90
      %p94 = scmp.eq.s32.totalorder %s38, 0
      %p95 = por %p93, %p94
      %p96 = scmp.ne.s32.totalorder %s88, %s90
      %p97 = scmp.eq.s32.totalorder %s43, 1
      %p98 = por %p96, %p97
      %p99 = scmp.ne.s32.totalorder %s90, %s91
      %p100 = scmp.eq.s32.totalorder %s43, 0
      %p101 = por %p99, %p100
      %p102 = scmp.ne.s32.totalorder %s90, %s91
      %p103 = scmp.eq.s32.totalorder %s44, 1
      %p104 = por %p102, %p103
      %p106 = scmp.ne.s32.totalorder %s91, %s105
      %p107 = scmp.eq.s32.totalorder %s44, 0
      %p108 = por %p106, %p107
      %s110 = sadd.s32 %s109, 1
      %p113 = scmp.eq.s32.totalorder %s38, 1
      %p114 = scmp.ne.s32.totalorder %s109, %s111
      %p115 = scmp.eq.s32.totalorder %s38, 0
      %p116 = por %p114, %p115
      %p117 = scmp.ne.s32.totalorder %s109, %s111
      %p118 = scmp.eq.s32.totalorder %s43, 1
      %p119 = por %p117, %p118
      %p120 = scmp.ne.s32.totalorder %s111, %s112
      %p121 = scmp.eq.s32.totalorder %s43, 0
      %p122 = por %p120, %p121
      %p123 = scmp.ne.s32.totalorder %s111, %s112
      %p124 = scmp.eq.s32.totalorder %s44, 1
      %p125 = por %p123, %p124
      %p127 = scmp.ne.s32.totalorder %s112, %s126
      %p128 = scmp.eq.s32.totalorder %s44, 0
      %p129 = por %p127, %p128
      %s131 = sadd.s32 %s130, 1
      %p134 = scmp.eq.s32.totalorder %s38, 1
      %p135 = scmp.ne.s32.totalorder %s130, %s132
      %p136 = scmp.eq.s32.totalorder %s38, 0
      %p137 = por %p135, %p136
      %p138 = scmp.ne.s32.totalorder %s130, %s132
      %p139 = scmp.eq.s32.totalorder %s43, 1
      %p140 = por %p138, %p139
      %p141 = scmp.ne.s32.totalorder %s132, %s133
      %p142 = scmp.eq.s32.totalorder %s43, 0
      %p143 = por %p141, %p142
      %p144 = scmp.ne.s32.totalorder %s132, %s133
      %p145 = scmp.eq.s32.totalorder %s44, 1
      %p146 = por %p144, %p145
      %p148 = scmp.ne.s32.totalorder %s133, %s147
      %p149 = scmp.eq.s32.totalorder %s44, 0
      %p150 = por %p148, %p149
      %s152 = sadd.s32 %s151, 1
      %p155 = scmp.eq.s32.totalorder %s38, 1
      %p156 = scmp.ne.s32.totalorder %s151, %s153
      %p157 = scmp.eq.s32.totalorder %s38, 0
      %p158 = por %p156, %p157
      %p159 = scmp.ne.s32.totalorder %s151, %s153
      %p160 = scmp.eq.s32.totalorder %s43, 1
      %p161 = por %p159, %p160
      %p162 = scmp.ne.s32.totalorder %s153, %s154
      %p163 = scmp.eq.s32.totalorder %s43, 0
      %p164 = por %p162, %p163
      %p165 = scmp.ne.s32.totalorder %s153, %s154
      %p166 = scmp.eq.s32.totalorder %s44, 1
      %p167 = por %p165, %p166
      %p169 = scmp.ne.s32.totalorder %s154, %s168
      %p170 = scmp.eq.s32.totalorder %s44, 0
      %p171 = por %p169, %p170
      %s173 = sadd.s32 %s172, 1
      %p176 = scmp.eq.s32.totalorder %s38, 1
      %p177 = scmp.ne.s32.totalorder %s172, %s174
      %p178 = scmp.eq.s32.totalorder %s38, 0
      %p179 = por %p177, %p178
      %p180 = scmp.ne.s32.totalorder %s172, %s174
      %p181 = scmp.eq.s32.totalorder %s43, 1
      %p182 = por %p180, %p181
      %p183 = scmp.ne.s32.totalorder %s174, %s175
      %p184 = scmp.eq.s32.totalorder %s43, 0
      %p185 = por %p183, %p184
      %p186 = scmp.ne.s32.totalorder %s174, %s175
      %p187 = scmp.eq.s32.totalorder %s44, 1
      %p188 = por %p186, %p187
      %p190 = scmp.ne.s32.totalorder %s175, %s189
      %p191 = scmp.eq.s32.totalorder %s44, 0
      %p192 = por %p190, %p191
      %s194 = sadd.s32 %s193, 1
      %p197 = scmp.eq.s32.totalorder %s38, 1
      %p198 = scmp.ne.s32.totalorder %s193, %s195
      %p199 = scmp.eq.s32.totalorder %s38, 0
      %p200 = por %p198, %p199
      %p201 = scmp.ne.s32.totalorder %s193, %s195
      %p202 = scmp.eq.s32.totalorder %s43, 1
      %p203 = por %p201, %p202
      %p204 = scmp.ne.s32.totalorder %s195, %s196
      %p205 = scmp.eq.s32.totalorder %s43, 0
      %p206 = por %p204, %p205
      %p207 = scmp.ne.s32.totalorder %s195, %s196
      %p208 = scmp.eq.s32.totalorder %s44, 1
      %p209 = por %p207, %p208
      %p211 = scmp.ne.s32.totalorder %s196, %s210
      %p212 = scmp.eq.s32.totalorder %s44, 0
      %p213 = por %p211, %p212
      %s215 = sadd.s32 %s214, 1
      %p218 = scmp.eq.s32.totalorder %s38, 1
      %p219 = scmp.ne.s32.totalorder %s214, %s216
      %p220 = scmp.eq.s32.totalorder %s38, 0
      %p221 = por %p219, %p220
      %p222 = scmp.ne.s32.totalorder %s214, %s216
      %p223 = scmp.eq.s32.totalorder %s43, 1
      %p224 = por %p222, %p223
      %p225 = scmp.ne.s32.totalorder %s216, %s217
      %p226 = scmp.eq.s32.totalorder %s43, 0
      %p227 = por %p225, %p226
      %p228 = scmp.ne.s32.totalorder %s216, %s217
      %p229 = scmp.eq.s32.totalorder %s44, 1
      %p230 = por %p228, %p229
      %p232 = scmp.ne.s32.totalorder %s217, %s231
      %p233 = scmp.eq.s32.totalorder %s44, 0
      %p234 = por %p232, %p233
      %s236 = sadd.s32 %s235, 1
      %p239 = scmp.eq.s32.totalorder %s38, 1
      %p240 = scmp.ne.s32.totalorder %s235, %s237
      %p241 = scmp.eq.s32.totalorder %s38, 0
      %p242 = por %p240, %p241
      %p243 = scmp.ne.s32.totalorder %s235, %s237
      %p244 = scmp.eq.s32.totalorder %s43, 1
      %p245 = por %p243, %p244
      %p246 = scmp.ne.s32.totalorder %s237, %s238
      %p247 = scmp.eq.s32.totalorder %s43, 0
      %p248 = por %p246, %p247
      %p249 = scmp.ne.s32.totalorder %s237, %s238
      %p250 = scmp.eq.s32.totalorder %s44, 1
      %p251 = por %p249, %p250
      %p253 = scmp.ne.s32.totalorder %s238, %s252
      %p254 = scmp.eq.s32.totalorder %s44, 0
      %p255 = por %p253, %p254
      %s257 = sadd.s32 %s256, 1
      %p260 = scmp.eq.s32.totalorder %s38, 1
      %p261 = scmp.ne.s32.totalorder %s256, %s258
      %p262 = scmp.eq.s32.totalorder %s38, 0
      %p263 = por %p261, %p262
      %p264 = scmp.ne.s32.totalorder %s256, %s258
      %p265 = scmp.eq.s32.totalorder %s43, 1
      %p266 = por %p264, %p265
      %p267 = scmp.ne.s32.totalorder %s258, %s259
      %p268 = scmp.eq.s32.totalorder %s43, 0
      %p269 = por %p267, %p268
      %p270 = scmp.ne.s32.totalorder %s258, %s259
      %p271 = scmp.eq.s32.totalorder %s44, 1
      %p272 = por %p270, %p271
      %p274 = scmp.ne.s32.totalorder %s259, %s273
      %p275 = scmp.eq.s32.totalorder %s44, 0
      %p276 = por %p274, %p275
      %s278 = sadd.s32 %s277, 1
      %p281 = scmp.eq.s32.totalorder %s38, 1
      %p282 = scmp.ne.s32.totalorder %s277, %s279
      %p283 = scmp.eq.s32.totalorder %s38, 0
      %p284 = por %p282, %p283
      %p285 = scmp.ne.s32.totalorder %s277, %s279
      %p286 = scmp.eq.s32.totalorder %s43, 1
      %p287 = por %p285, %p286
      %p288 = scmp.ne.s32.totalorder %s279, %s280
      %p289 = scmp.eq.s32.totalorder %s43, 0
      %p290 = por %p288, %p289
      %p291 = scmp.ne.s32.totalorder %s279, %s280
      %p292 = scmp.eq.s32.totalorder %s44, 1
      %p293 = por %p291, %p292
      %p295 = scmp.ne.s32.totalorder %s280, %s294
      %p296 = scmp.eq.s32.totalorder %s44, 0
      %p297 = por %p295, %p296
      %s299 = sadd.s32 %s298, 1
      %p302 = scmp.eq.s32.totalorder %s38, 1
      %p303 = scmp.ne.s32.totalorder %s298, %s300
      %p304 = scmp.eq.s32.totalorder %s38, 0
      %p305 = por %p303, %p304
      %p306 = scmp.ne.s32.totalorder %s298, %s300
      %p307 = scmp.eq.s32.totalorder %s43, 1
      %p308 = por %p306, %p307
      %p309 = scmp.ne.s32.totalorder %s300, %s301
      %p310 = scmp.eq.s32.totalorder %s43, 0
      %p311 = por %p309, %p310
      %p312 = scmp.ne.s32.totalorder %s300, %s301
      %p313 = scmp.eq.s32.totalorder %s44, 1
      %p314 = por %p312, %p313
      %p316 = scmp.ne.s32.totalorder %s301, %s315
      %p317 = scmp.eq.s32.totalorder %s44, 0
      %p318 = por %p316, %p317
      %s320 = sadd.s32 %s319, 1
      %p323 = scmp.eq.s32.totalorder %s38, 1
      %p324 = scmp.ne.s32.totalorder %s319, %s321
      %p325 = scmp.eq.s32.totalorder %s38, 0
      %p326 = por %p324, %p325
      %p327 = scmp.ne.s32.totalorder %s319, %s321
      %p328 = scmp.eq.s32.totalorder %s43, 1
      %p329 = por %p327, %p328
      %p330 = scmp.ne.s32.totalorder %s321, %s322
      %p331 = scmp.eq.s32.totalorder %s43, 0
      %p332 = por %p330, %p331
      %p333 = scmp.ne.s32.totalorder %s321, %s322
      %p334 = scmp.eq.s32.totalorder %s44, 1
      %p335 = por %p333, %p334
      %p337 = scmp.ne.s32.totalorder %s322, %s336
      %p338 = scmp.eq.s32.totalorder %s44, 0
      %p339 = por %p337, %p338
      %s341 = sadd.s32 %s340, 1
      %p344 = scmp.eq.s32.totalorder %s38, 1
      %p345 = scmp.ne.s32.totalorder %s340, %s342
      %p346 = scmp.eq.s32.totalorder %s38, 0
      %p347 = por %p345, %p346
      %p348 = scmp.ne.s32.totalorder %s340, %s342
      %p349 = scmp.eq.s32.totalorder %s43, 1
      %p350 = por %p348, %p349
      %p351 = scmp.ne.s32.totalorder %s342, %s343
      %p352 = scmp.eq.s32.totalorder %s43, 0
      %p353 = por %p351, %p352
      %p354 = scmp.ne.s32.totalorder %s342, %s343
      %p355 = scmp.eq.s32.totalorder %s44, 1
      %p356 = por %p354, %p355
      %p358 = scmp.ne.s32.totalorder %s343, %s357
      %p359 = scmp.eq.s32.totalorder %s44, 0
      %p360 = por %p358, %p359
      %s362 = sadd.s32 %s361, 1
      %p365 = scmp.eq.s32.totalorder %s38, 1
      %p366 = scmp.ne.s32.totalorder %s361, %s363
      %p367 = scmp.eq.s32.totalorder %s38, 0
      %p368 = por %p366, %p367
      %p369 = scmp.ne.s32.totalorder %s361, %s363
      %p370 = scmp.eq.s32.totalorder %s43, 1
      %p371 = por %p369, %p370
      %p372 = scmp.ne.s32.totalorder %s363, %s364
      %p373 = scmp.eq.s32.totalorder %s43, 0
      %p374 = por %p372, %p373
      %p375 = scmp.ne.s32.totalorder %s363, %s364
      %p376 = scmp.eq.s32.totalorder %s44, 1
      %p377 = por %p375, %p376
      %p379 = scmp.ne.s32.totalorder %s364, %s378
      %p380 = scmp.eq.s32.totalorder %s44, 0
      %p381 = por %p379, %p380
      %s383 = sadd.s32 %s382, 1
      %p386 = scmp.eq.s32.totalorder %s38, 1
      %p387 = scmp.ne.s32.totalorder %s382, %s384
      %p388 = scmp.eq.s32.totalorder %s38, 0
      %p389 = por %p387, %p388
      %p390 = scmp.ne.s32.totalorder %s382, %s384
      %p391 = scmp.eq.s32.totalorder %s43, 1
      %p392 = por %p390, %p391
      %p393 = scmp.ne.s32.totalorder %s384, %s385
      %p394 = scmp.eq.s32.totalorder %s43, 0
      %p395 = por %p393, %p394
      %p396 = scmp.ne.s32.totalorder %s384, %s385
      %p397 = scmp.eq.s32.totalorder %s44, 1
      %p398 = por %p396, %p397
      %p400 = scmp.ne.s32.totalorder %s385, %s399
      %p401 = scmp.eq.s32.totalorder %s44, 0
      %p402 = por %p400, %p401
      %s403 = ssub.s32 %s38, %s45
      %p404 = scmp.eq.s32.totalorder %s403, 0
      %s406 = sadd.s32 %s405, 1
      %s407 = scalar_select %p404, %s405, %s406
      %p410 = pneg %p404
      %p411 = scmp.eq.s32.totalorder %s38, 1
      %p412 = por %p410, %p411
      %p413 = scmp.ne.s32.totalorder %s405, %s408
      %p414 = scmp.eq.s32.totalorder %s38, 0
      %p415 = por %p413, %p414
      %p416 = scmp.ne.s32.totalorder %s405, %s408
      %p417 = scmp.eq.s32.totalorder %s43, 1
      %p418 = por %p416, %p417
      %p419 = scmp.ne.s32.totalorder %s408, %s409
      %p420 = scmp.eq.s32.totalorder %s43, 0
      %p421 = por %p419, %p420
      %p422 = scmp.ne.s32.totalorder %s408, %s409
      %p423 = scmp.eq.s32.totalorder %s44, 1
      %p424 = por %p422, %p423
      %p426 = scmp.ne.s32.totalorder %s409, %s425
      %p427 = scmp.eq.s32.totalorder %s44, 0
      %p428 = por %p426, %p427
      %p429 = scmp.le.s32.totalorder 1, %s38
      %p430 = scmp.lt.s32.totalorder %s38, 3
      %p431 = pnand %p429, %p430
      %p432 = pneg %p431
      // Predicated region
      $region9: #{gpt_forward_fn.1} parent=5 // pred_check
        _
      $region10: #{gpt_forward_fn.1} parent=5 // pred_check_branch
        %434 = sbr.rel (%p431) target = $region12
      $region11: #{gpt_forward_fn.1} parent=5 // pred_region
        %s435 = ssub.s32 %s38, 1
        // Predicated region
        $region13: #{gpt_forward_fn.1} parent=11 // pred_check
          %p436 = pneg %p59
        $region14: #{gpt_forward_fn.1} parent=11 // pred_check_branch
          %438 = sbr.rel (%p436) target = $region16
        $region15: #{gpt_forward_fn.1} parent=11 // pred_region
          %s440 = ssub.s32 2048, 2048
          %441 = vsyncadd [#allocation7], %s440
          %s442 = sshll.u32 [#allocation6], 4
          %s443 = int_to_ptr.vmem [resolvable:$true] %s442
          %448 = dma.hbm_to_vmem [thread:$0]  %s1, 2048, %s443, [#allocation7], 128, 128, 8
        $region16: #{gpt_forward_fn.1} parent=11 // pred_fallthru
          _
        // Predicated region
        $region17: #{gpt_forward_fn.1} parent=11 // pred_check
          %p449 = pneg %p80
        $region18: #{gpt_forward_fn.1} parent=11 // pred_check_branch
          %451 = sbr.rel (%p449) target = $region20
        $region19: #{gpt_forward_fn.1} parent=11 // pred_region
          _
        $region20: #{gpt_forward_fn.1} parent=11 // pred_fallthru
          _
        // Predicated region
        $region21: #{gpt_forward_fn.1} parent=11 // pred_check
          %p452 = pneg %p101
        $region22: #{gpt_forward_fn.1} parent=11 // pred_check_branch
          %454 = sbr.rel (%p452) target = $region24
        $region23: #{gpt_forward_fn.1} parent=11 // pred_region
          %s456 = ssub.s32 6144, 6144
          %457 = vsyncadd [#allocation10], %s456
          %s458 = sshll.u32 [#allocation9], 4
          %s459 = int_to_ptr.vmem [resolvable:$true] %s458
          %464 = dma.hbm_to_vmem [thread:$0]  %s3, 6144, %s459, [#allocation10], 192, 192, 12
        $region24: #{gpt_forward_fn.1} parent=11 // pred_fallthru
          _
        // Predicated region
        $region25: #{gpt_forward_fn.1} parent=11 // pred_check
          %p465 = pneg %p122
        $region26: #{gpt_forward_fn.1} parent=11 // pred_check_branch
          %467 = sbr.rel (%p465) target = $region28
        $region27: #{gpt_forward_fn.1} parent=11 // pred_region
          %s469 = ssub.s32 2048, 2048
          %470 = vsyncadd [#allocation10], %s469
          %s471 = sshll.u32 [#allocation11], 4
          %s472 = int_to_ptr.vmem [resolvable:$true] %s471
          %477 = dma.hbm_to_vmem [thread:$0]  %s4, 2048, %s472, [#allocation10], 64, 64, 4
        $region28: #{gpt_forward_fn.1} parent=11 // pred_fallthru
          _
        // Predicated region
        $region29: #{gpt_forward_fn.1} parent=11 // pred_check
          %p478 = pneg %p143
        $region30: #{gpt_forward_fn.1} parent=11 // pred_check_branch
          %480 = sbr.rel (%p478) target = $region32
        $region31: #{gpt_forward_fn.1} parent=11 // pred_region
          _
        $region32: #{gpt_forward_fn.1} parent=11 // pred_fallthru
          _
        // Predicated region
        $region33: #{gpt_forward_fn.1} parent=11 // pred_check
          %p481 = pneg %p164
        $region34: #{gpt_forward_fn.1} parent=11 // pred_check_branch
          %483 = sbr.rel (%p481) target = $region36
        $region35: #{gpt_forward_fn.1} parent=11 // pred_region
          _
        $region36: #{gpt_forward_fn.1} parent=11 // pred_fallthru
          _
        // Predicated region
        $region37: #{gpt_forward_fn.1} parent=11 // pred_check
          %p484 = pneg %p185
        $region38: #{gpt_forward_fn.1} parent=11 // pred_check_branch
          %486 = sbr.rel (%p484) target = $region40
        $region39: #{gpt_forward_fn.1} parent=11 // pred_region
          _
        $region40: #{gpt_forward_fn.1} parent=11 // pred_fallthru
          _
        // Predicated region
        $region41: #{gpt_forward_fn.1} parent=11 // pred_check
          %p487 = pneg %p206
        $region42: #{gpt_forward_fn.1} parent=11 // pred_check_branch
          %489 = sbr.rel (%p487) target = $region44
        $region43: #{gpt_forward_fn.1} parent=11 // pred_region
          %s491 = ssub.s32 8192, 8192
          %492 = vsyncadd [#allocation13], %s491
          %s493 = sshll.u32 [#allocation12], 4
          %s494 = int_to_ptr.vmem [resolvable:$true] %s493
          %499 = dma.hbm_to_vmem [thread:$0]  %s8, 8192, %s494, [#allocation13], 256, 256, 16
        $region44: #{gpt_forward_fn.1} parent=11 // pred_fallthru
          _
        // Predicated region
        $region45: #{gpt_forward_fn.1} parent=11 // pred_check
          %p500 = pneg %p227
        $region46: #{gpt_forward_fn.1} parent=11 // pred_check_branch
          %502 = sbr.rel (%p500) target = $region48
        $region47: #{gpt_forward_fn.1} parent=11 // pred_region
          %s504 = ssub.s32 128, 128
          %505 = vsyncadd [#allocation13], %s504
          %s506 = sshll.u32 [#allocation14], 4
          %s507 = int_to_ptr.vmem [resolvable:$true] %s506
          %512 = dma.hbm_to_vmem [thread:$0]  %s9, 128, %s507, [#allocation13], 64, 64, 4
        $region48: #{gpt_forward_fn.1} parent=11 // pred_fallthru
          _
        // Predicated region
        $region49: #{gpt_forward_fn.1} parent=11 // pred_check
          %p513 = pneg %p248
        $region50: #{gpt_forward_fn.1} parent=11 // pred_check_branch
          %515 = sbr.rel (%p513) target = $region52
        $region51: #{gpt_forward_fn.1} parent=11 // pred_region
          %s517 = ssub.s32 8192, 8192
          %518 = vsyncadd [#allocation16], %s517
          %s519 = sshll.u32 [#allocation15], 4
          %s520 = int_to_ptr.vmem [resolvable:$true] %s519
          %525 = dma.hbm_to_vmem [thread:$0]  %s10, 8192, %s520, [#allocation16], 64, 64, 4
        $region52: #{gpt_forward_fn.1} parent=11 // pred_fallthru
          _
        // Predicated region
        $region53: #{gpt_forward_fn.1} parent=11 // pred_check
          %p526 = pneg %p269
        $region54: #{gpt_forward_fn.1} parent=11 // pred_check_branch
          %528 = sbr.rel (%p526) target = $region56
        $region55: #{gpt_forward_fn.1} parent=11 // pred_region
          %s530 = ssub.s32 32, 32
          %531 = vsyncadd [#allocation16], %s530
          %s532 = sshll.u32 [#allocation17], 4
          %s533 = int_to_ptr.vmem [resolvable:$true] %s532
          %538 = dma.hbm_to_vmem [thread:$0]  %s11, 32, %s533, [#allocation16], 16, 16, 1
        $region56: #{gpt_forward_fn.1} parent=11 // pred_fallthru
          _
        // Predicated region
        $region57: #{gpt_forward_fn.1} parent=11 // pred_check
          %p539 = pneg %p290
        $region58: #{gpt_forward_fn.1} parent=11 // pred_check_branch
          %541 = sbr.rel (%p539) target = $region60
        $region59: #{gpt_forward_fn.1} parent=11 // pred_region
          _
        $region60: #{gpt_forward_fn.1} parent=11 // pred_fallthru
          _
        // Predicated region
        $region61: #{gpt_forward_fn.1} parent=11 // pred_check
          %p542 = pneg %p311
        $region62: #{gpt_forward_fn.1} parent=11 // pred_check_branch
          %544 = sbr.rel (%p542) target = $region64
        $region63: #{gpt_forward_fn.1} parent=11 // pred_region
          _
        $region64: #{gpt_forward_fn.1} parent=11 // pred_fallthru
          _
        // Predicated region
        $region65: #{gpt_forward_fn.1} parent=11 // pred_check
          %p545 = pneg %p332
        $region66: #{gpt_forward_fn.1} parent=11 // pred_check_branch
          %547 = sbr.rel (%p545) target = $region68
        $region67: #{gpt_forward_fn.1} parent=11 // pred_region
          _
        $region68: #{gpt_forward_fn.1} parent=11 // pred_fallthru
          _
        // Predicated region
        $region69: #{gpt_forward_fn.1} parent=11 // pred_check
          %p548 = pneg %p353
        $region70: #{gpt_forward_fn.1} parent=11 // pred_check_branch
          %550 = sbr.rel (%p548) target = $region72
        $region71: #{gpt_forward_fn.1} parent=11 // pred_region
          _
        $region72: #{gpt_forward_fn.1} parent=11 // pred_fallthru
          _
        // Predicated region
        $region73: #{gpt_forward_fn.1} parent=11 // pred_check
          %p551 = pneg %p374
        $region74: #{gpt_forward_fn.1} parent=11 // pred_check_branch
          %553 = sbr.rel (%p551) target = $region76
        $region75: #{gpt_forward_fn.1} parent=11 // pred_region
          %s555 = ssub.s32 1024, 1024
          %556 = vsyncadd [#allocation19], %s555
          %s557 = sshll.u32 [#allocation18], 4
          %s558 = int_to_ptr.vmem [resolvable:$true] %s557
          %563 = dma.hbm_to_vmem [thread:$0]  %s16, 1024, %s558, [#allocation19], 64, 64, 4
        $region76: #{gpt_forward_fn.1} parent=11 // pred_fallthru
          _
        // Predicated region
        $region77: #{gpt_forward_fn.1} parent=11 // pred_check
          %p564 = pneg %p395
        $region78: #{gpt_forward_fn.1} parent=11 // pred_check_branch
          %566 = sbr.rel (%p564) target = $region80
        $region79: #{gpt_forward_fn.1} parent=11 // pred_region
          %s568 = ssub.s32 16, 16
          %569 = vsyncadd [#allocation19], %s568
          %s571 = sshll.u32 [#allocation20], 4
          %s572 = int_to_ptr.vmem [resolvable:$true] %s571
          %574 = dma.hbm_to_vmem [thread:$0]  %s17, 16, %s572, [#allocation19]
        $region80: #{gpt_forward_fn.1} parent=11 // pred_fallthru
          _
      $region12: #{gpt_forward_fn.1} parent=5 // pred_fallthru
        _
      %p575 = scmp.lt.s32.totalorder %s38, 2
      // Predicated region
      $region81: #{gpt_forward_fn.1} parent=5 // pred_check
        %p576 = pneg %p575
      $region82: #{gpt_forward_fn.1} parent=5 // pred_check_branch
        %578 = sbr.rel (%p576) target = $region84
      $region83: #{gpt_forward_fn.1} parent=5 // pred_region
        _
      $region84: #{gpt_forward_fn.1} parent=5 // pred_fallthru
        _
      %p579 = scmp.le.s32.totalorder 1, %s38
      %p580 = scmp.lt.s32.totalorder %s38, 3
      %p581 = pnand %p579, %p580
      %p582 = pneg %p581
      // Predicated region
      $region85: #{gpt_forward_fn.1} parent=5 // pred_check
        _
      $region86: #{gpt_forward_fn.1} parent=5 // pred_check_branch
        %584 = sbr.rel (%p581) target = $region88
      $region87: #{gpt_forward_fn.1} parent=5 // pred_region
        %s585 = ssub.s32 %s38, 1
        // Predicated region
        $region89: #{gpt_forward_fn.1} parent=87 // pred_check
          %p586 = pneg %p59
        $region90: #{gpt_forward_fn.1} parent=87 // pred_check_branch
          %588 = sbr.rel (%p586) target = $region92
        $region91: #{gpt_forward_fn.1} parent=87 // pred_region
          %589 = dma.done [#allocation7], 2048
        $region92: #{gpt_forward_fn.1} parent=87 // pred_fallthru
          _
        // Predicated region
        $region93: #{gpt_forward_fn.1} parent=87 // pred_check
          %p590 = pneg %p101
        $region94: #{gpt_forward_fn.1} parent=87 // pred_check_branch
          %592 = sbr.rel (%p590) target = $region96
        $region95: #{gpt_forward_fn.1} parent=87 // pred_region
          %593 = dma.done [#allocation10], 6144
        $region96: #{gpt_forward_fn.1} parent=87 // pred_fallthru
          _
        // Predicated region
        $region97: #{gpt_forward_fn.1} parent=87 // pred_check
          %p594 = pneg %p122
        $region98: #{gpt_forward_fn.1} parent=87 // pred_check_branch
          %596 = sbr.rel (%p594) target = $region100
        $region99: #{gpt_forward_fn.1} parent=87 // pred_region
          %597 = dma.done [#allocation10], 2048
        $region100: #{gpt_forward_fn.1} parent=87 // pred_fallthru
          _
        // Predicated region
        $region101: #{gpt_forward_fn.1} parent=87 // pred_check
          %p598 = pneg %p206
        $region102: #{gpt_forward_fn.1} parent=87 // pred_check_branch
          %600 = sbr.rel (%p598) target = $region104
        $region103: #{gpt_forward_fn.1} parent=87 // pred_region
          %601 = dma.done [#allocation13], 8192
        $region104: #{gpt_forward_fn.1} parent=87 // pred_fallthru
          _
        // Predicated region
        $region105: #{gpt_forward_fn.1} parent=87 // pred_check
          %p602 = pneg %p227
        $region106: #{gpt_forward_fn.1} parent=87 // pred_check_branch
          %604 = sbr.rel (%p602) target = $region108
        $region107: #{gpt_forward_fn.1} parent=87 // pred_region
          %605 = dma.done [#allocation13], 128
        $region108: #{gpt_forward_fn.1} parent=87 // pred_fallthru
          _
        // Predicated region
        $region109: #{gpt_forward_fn.1} parent=87 // pred_check
          %p606 = pneg %p248
        $region110: #{gpt_forward_fn.1} parent=87 // pred_check_branch
          %608 = sbr.rel (%p606) target = $region112
        $region111: #{gpt_forward_fn.1} parent=87 // pred_region
          %609 = dma.done [#allocation16], 8192
        $region112: #{gpt_forward_fn.1} parent=87 // pred_fallthru
          _
        // Predicated region
        $region113: #{gpt_forward_fn.1} parent=87 // pred_check
          %p610 = pneg %p269
        $region114: #{gpt_forward_fn.1} parent=87 // pred_check_branch
          %612 = sbr.rel (%p610) target = $region116
        $region115: #{gpt_forward_fn.1} parent=87 // pred_region
          %613 = dma.done [#allocation16], 32
        $region116: #{gpt_forward_fn.1} parent=87 // pred_fallthru
          _
        // Predicated region
        $region117: #{gpt_forward_fn.1} parent=87 // pred_check
          %p614 = pneg %p374
        $region118: #{gpt_forward_fn.1} parent=87 // pred_check_branch
          %616 = sbr.rel (%p614) target = $region120
        $region119: #{gpt_forward_fn.1} parent=87 // pred_region
          %617 = dma.done [#allocation19], 1024
        $region120: #{gpt_forward_fn.1} parent=87 // pred_fallthru
          _
        // Predicated region
        $region121: #{gpt_forward_fn.1} parent=87 // pred_check
          %p618 = pneg %p395
        $region122: #{gpt_forward_fn.1} parent=87 // pred_check_branch
          %620 = sbr.rel (%p618) target = $region124
        $region123: #{gpt_forward_fn.1} parent=87 // pred_region
          %621 = dma.done [#allocation19], 16
        $region124: #{gpt_forward_fn.1} parent=87 // pred_fallthru
          _
        %p622 = pneg %p59
        %p623 = pneg %p56
        %p624 = pneg %p80
        %p625 = pneg %p77
        %p626 = pneg %p101
        %p627 = pneg %p98
        %p628 = pneg %p122
        %p629 = pneg %p119
        %p630 = pneg %p143
        %p631 = pneg %p140
        %p632 = pneg %p164
        %p633 = pneg %p161
        %p634 = pneg %p185
        %p635 = pneg %p182
        %p636 = pneg %p206
        %p637 = pneg %p203
        %p638 = pneg %p227
        %p639 = pneg %p224
        %p640 = pneg %p248
        %p641 = pneg %p245
        %p642 = pneg %p269
        %p643 = pneg %p266
        %p644 = pneg %p290
        %p645 = pneg %p287
        %p646 = pneg %p311
        %p647 = pneg %p308
        %p648 = pneg %p332
        %p649 = pneg %p329
        %p650 = pneg %p353
        %p651 = pneg %p350
        %p652 = pneg %p374
        %p653 = pneg %p371
        %p654 = pneg %p395
        %p655 = pneg %p392
        %p656 = pneg %p421
        %p657 = pneg %p418
        %s658 = sand.u32 %s408, 1
        %s659 = scalar_lea.sflag [#allocation8], %s658
        %s660 = sand.u32 %s408, 1
        %s661 = smul.addr %s660, 16
        %s662 = scalar_lea.vmem [#allocation21], %s661
        %s664 = smul.u32 %s43, 128
        %s665 = sld [smem:[#allocation5 + %s664]]
        %s666 = scalar_lea.vmem [#allocation6], %s665
        %v667 = vld [vmem:[%s666] sm:$0x1]
        %v668 = vld [vmem:[%s2] sm:$0x1]
        %v669 = vadd.f32 %v667, %v668
        %670 = vst [vmem:[#allocation2] sm:$0x1] %v669
        %s671 = sadd.s32 %s664, 1
        %s672 = sld [smem:[#allocation5 + %s671]]
        %s673 = scalar_lea.vmem [#allocation6], %s672
        %v674 = vld [vmem:[%s673] sm:$0x1]
        %v675 = vld [vmem:[%s2 + $0x1] sm:$0x1]
        %v676 = vadd.f32 %v674, %v675
        %677 = vst [vmem:[#allocation2 + $0x1] sm:$0x1] %v676
        %s678 = sadd.s32 %s664, 2
        %s679 = sld [smem:[#allocation5 + %s678]]
        %s680 = scalar_lea.vmem [#allocation6], %s679
        %v681 = vld [vmem:[%s680] sm:$0x1]
        %v682 = vld [vmem:[%s2 + $0x2] sm:$0x1]
        %v683 = vadd.f32 %v681, %v682
        %684 = vst [vmem:[#allocation2 + $0x2] sm:$0x1] %v683
        %s685 = sadd.s32 %s664, 3
        %s686 = sld [smem:[#allocation5 + %s685]]
        %s687 = scalar_lea.vmem [#allocation6], %s686
        %v688 = vld [vmem:[%s687] sm:$0x1]
        %v689 = vld [vmem:[%s2 + $0x3] sm:$0x1]
        %v690 = vadd.f32 %v688, %v689
        %691 = vst [vmem:[#allocation2 + $0x3] sm:$0x1] %v690
        %s692 = sadd.s32 %s664, 4
        %s693 = sld [smem:[#allocation5 + %s692]]
        %s694 = scalar_lea.vmem [#allocation6], %s693
        %v695 = vld [vmem:[%s694] sm:$0x1]
        %v696 = vld [vmem:[%s2 + $0x4] sm:$0x1]
        %v697 = vadd.f32 %v695, %v696
        %698 = vst [vmem:[#allocation2 + $0x4] sm:$0x1] %v697
        %s699 = sadd.s32 %s664, 5
        %s700 = sld [smem:[#allocation5 + %s699]]
        %s701 = scalar_lea.vmem [#allocation6], %s700
        %v702 = vld [vmem:[%s701] sm:$0x1]
        %v703 = vld [vmem:[%s2 + $0x5] sm:$0x1]
        %v704 = vadd.f32 %v702, %v703
        %705 = vst [vmem:[#allocation2 + $0x5] sm:$0x1] %v704
        %s706 = sadd.s32 %s664, 6
        %s707 = sld [smem:[#allocation5 + %s706]]
        %s708 = scalar_lea.vmem [#allocation6], %s707
        %v709 = vld [vmem:[%s708] sm:$0x1]
        %v710 = vld [vmem:[%s2 + $0x6] sm:$0x1]
        %v711 = vadd.f32 %v709, %v710
        %712 = vst [vmem:[#allocation2 + $0x6] sm:$0x1] %v711
        %s713 = sadd.s32 %s664, 7
        %s714 = sld [smem:[#allocation5 + %s713]]
        %s715 = scalar_lea.vmem [#allocation6], %s714
        %v716 = vld [vmem:[%s715] sm:$0x1]
        %v717 = vld [vmem:[%s2 + $0x7] sm:$0x1]
        %v718 = vadd.f32 %v716, %v717
        %719 = vst [vmem:[#allocation2 + $0x7] sm:$0x1] %v718
        %s720 = sadd.s32 %s664, 8
        %s721 = sld [smem:[#allocation5 + %s720]]
        %s722 = scalar_lea.vmem [#allocation6], %s721
        %v723 = vld [vmem:[%s722] sm:$0x1]
        %v724 = vld [vmem:[%s2 + $0x8] sm:$0x1]
        %v725 = vadd.f32 %v723, %v724
        %726 = vst [vmem:[#allocation2 + $0x8] sm:$0x1] %v725
        %s727 = sadd.s32 %s664, 9
        %s728 = sld [smem:[#allocation5 + %s727]]
        %s729 = scalar_lea.vmem [#allocation6], %s728
        %v730 = vld [vmem:[%s729] sm:$0x1]
        %v731 = vld [vmem:[%s2 + $0x9] sm:$0x1]
        %v732 = vadd.f32 %v730, %v731
        %733 = vst [vmem:[#allocation2 + $0x9] sm:$0x1] %v732
        %s734 = sadd.s32 %s664, 10
        %s735 = sld [smem:[#allocation5 + %s734]]
        %s736 = scalar_lea.vmem [#allocation6], %s735
        %v737 = vld [vmem:[%s736] sm:$0x1]
        %v738 = vld [vmem:[%s2 + $0xa] sm:$0x1]
        %v739 = vadd.f32 %v737, %v738
        %740 = vst [vmem:[#allocation2 + $0xa] sm:$0x1] %v739
        %s741 = sadd.s32 %s664, 11
        %s742 = sld [smem:[#allocation5 + %s741]]
        %s743 = scalar_lea.vmem [#allocation6], %s742
        %v744 = vld [vmem:[%s743] sm:$0x1]
        %v745 = vld [vmem:[%s2 + $0xb] sm:$0x1]
        %v746 = vadd.f32 %v744, %v745
        %747 = vst [vmem:[#allocation2 + $0xb] sm:$0x1] %v746
        %s748 = sadd.s32 %s664, 12
        %s749 = sld [smem:[#allocation5 + %s748]]
        %s750 = scalar_lea.vmem [#allocation6], %s749
        %v751 = vld [vmem:[%s750] sm:$0x1]
        %v752 = vld [vmem:[%s2 + $0xc] sm:$0x1]
        %v753 = vadd.f32 %v751, %v752
        %754 = vst [vmem:[#allocation2 + $0xc] sm:$0x1] %v753
        %s755 = sadd.s32 %s664, 13
        %s756 = sld [smem:[#allocation5 + %s755]]
        %s757 = scalar_lea.vmem [#allocation6], %s756
        %v758 = vld [vmem:[%s757] sm:$0x1]
        %v759 = vld [vmem:[%s2 + $0xd] sm:$0x1]
        %v760 = vadd.f32 %v758, %v759
        %761 = vst [vmem:[#allocation2 + $0xd] sm:$0x1] %v760
        %s762 = sadd.s32 %s664, 14
        %s763 = sld [smem:[#allocation5 + %s762]]
        %s764 = scalar_lea.vmem [#allocation6], %s763
        %v765 = vld [vmem:[%s764] sm:$0x1]
        %v766 = vld [vmem:[%s2 + $0xe] sm:$0x1]
        %v767 = vadd.f32 %v765, %v766
        %768 = vst [vmem:[#allocation2 + $0xe] sm:$0x1] %v767
        %s769 = sadd.s32 %s664, 15
        %s770 = sld [smem:[#allocation5 + %s769]]
        %s771 = scalar_lea.vmem [#allocation6], %s770
        %v772 = vld [vmem:[%s771] sm:$0x1]
        %v773 = vld [vmem:[%s2 + $0xf] sm:$0x1]
        %v774 = vadd.f32 %v772, %v773
        %775 = vst [vmem:[#allocation2 + $0xf] sm:$0x1] %v774
        %v776 = vld [vmem:[#allocation2] sm:$0xff]
        %v777 = vld [vmem:[#allocation2 + $0x8] sm:$0xff]
        %v778 = vlaneseq
        %v779 = vshrl.u32 %v778, 7
        %v780 = vadd.s32 %v779, 8
        %v781 = vlaneseq
        %v782 = vand.u32 %v781, 127
        %vm783 = vcmp.le.s32.totalorder %v782, %v779
        %vm784 = vcmp.le.s32.totalorder %v782, %v780
        %v785 = vsel %vm783, 0.0, -1e+30
        %v786 = vsel %vm784, 0.0, -1e+30
        %v787 = vpack.c.bf16 %v777, %v776
        %v788 = vld [vmem:[#allocation9] sm:$0xff]
        %v789 = vld [vmem:[#allocation9 + $0x8] sm:$0xf]
        %v790 = vld [vmem:[#allocation9 + $0xc] sm:$0xff]
        %v791 = vld [vmem:[#allocation9 + $0x14] sm:$0xf]
        %v792 = vld [vmem:[#allocation9 + $0x18] sm:$0xff]
        %v793 = vld [vmem:[#allocation9 + $0x20] sm:$0xf]
        %v794 = vld [vmem:[#allocation9 + $0x24] sm:$0xff]
        %v795 = vld [vmem:[#allocation9 + $0x2c] sm:$0xf]
        %v796 = vld [vmem:[#allocation9 + $0x30] sm:$0xff]
        %v797 = vld [vmem:[#allocation9 + $0x38] sm:$0xf]
        %v798 = vld [vmem:[#allocation9 + $0x3c] sm:$0xff]
        %v799 = vld [vmem:[#allocation9 + $0x44] sm:$0xf]
        %v800 = vld [vmem:[#allocation9 + $0x48] sm:$0xff]
        %v801 = vld [vmem:[#allocation9 + $0x50] sm:$0xf]
        %v802 = vld [vmem:[#allocation9 + $0x54] sm:$0xff]
        %v803 = vld [vmem:[#allocation9 + $0x5c] sm:$0xf]
        %v804 = vld [vmem:[#allocation9 + $0x60] sm:$0xff]
        %v805 = vld [vmem:[#allocation9 + $0x68] sm:$0xf]
        %v806 = vld [vmem:[#allocation9 + $0x6c] sm:$0xff]
        %v807 = vld [vmem:[#allocation9 + $0x74] sm:$0xf]
        %v808 = vld [vmem:[#allocation9 + $0x78] sm:$0xff]
        %v809 = vld [vmem:[#allocation9 + $0x80] sm:$0xf]
        %v810 = vld [vmem:[#allocation9 + $0x84] sm:$0xff]
        %v811 = vld [vmem:[#allocation9 + $0x8c] sm:$0xf]
        %v812 = vld [vmem:[#allocation9 + $0x90] sm:$0xff]
        %v813 = vld [vmem:[#allocation9 + $0x98] sm:$0xf]
        %v814 = vld [vmem:[#allocation9 + $0x9c] sm:$0xff]
        %v815 = vld [vmem:[#allocation9 + $0xa4] sm:$0xf]
        %v816 = vld [vmem:[#allocation9 + $0xa8] sm:$0xff]
        %v817 = vld [vmem:[#allocation9 + $0xb0] sm:$0xf]
        %v818 = vld [vmem:[#allocation9 + $0xb4] sm:$0xff]
        %v819 = vld [vmem:[#allocation9 + $0xbc] sm:$0xf]
        %v852 = vunpack.c.l.b16 %v788
        %v853 = vunpack.c.h.b16 %v788
        %v854 = vunpack.c.l.b16 %v789
        %v855 = vunpack.c.l.b16 %v790
        %v856 = vunpack.c.h.b16 %v790
        %v857 = vunpack.c.l.b16 %v791
        %v858 = vunpack.c.l.b16 %v792
        %v859 = vunpack.c.h.b16 %v792
        %v860 = vunpack.c.l.b16 %v793
        %v861 = vunpack.c.l.b16 %v794
        %v862 = vunpack.c.h.b16 %v794
        %v863 = vunpack.c.l.b16 %v795
        %v864 = vunpack.c.l.b16 %v796
        %v865 = vunpack.c.h.b16 %v796
        %v866 = vunpack.c.l.b16 %v797
        %v867 = vunpack.c.l.b16 %v798
        %v868 = vunpack.c.h.b16 %v798
        %v869 = vunpack.c.l.b16 %v799
        %v870 = vunpack.c.l.b16 %v800
        %v871 = vunpack.c.h.b16 %v800
        %v872 = vunpack.c.l.b16 %v801
        %v873 = vunpack.c.l.b16 %v802
        %v874 = vunpack.c.h.b16 %v802
        %v875 = vunpack.c.l.b16 %v803
        %v876 = vunpack.c.l.b16 %v804
        %v877 = vunpack.c.h.b16 %v804
        %v878 = vunpack.c.l.b16 %v805
        %v879 = vunpack.c.l.b16 %v806
        %v880 = vunpack.c.h.b16 %v806
        %v881 = vunpack.c.l.b16 %v807
        %v882 = vunpack.c.l.b16 %v808
        %v883 = vunpack.c.h.b16 %v808
        %v884 = vunpack.c.l.b16 %v809
        %v885 = vunpack.c.l.b16 %v810
        %v886 = vunpack.c.h.b16 %v810
        %v887 = vunpack.c.l.b16 %v811
        %v888 = vunpack.c.l.b16 %v812
        %v889 = vunpack.c.h.b16 %v812
        %v890 = vunpack.c.l.b16 %v813
        %v891 = vunpack.c.l.b16 %v814
        %v892 = vunpack.c.h.b16 %v814
        %v893 = vunpack.c.l.b16 %v815
        %v894 = vunpack.c.l.b16 %v816
        %v895 = vunpack.c.h.b16 %v816
        %v896 = vunpack.c.l.b16 %v817
        %v897 = vunpack.c.l.b16 %v818
        %v898 = vunpack.c.h.b16 %v818
        %v899 = vunpack.c.l.b16 %v819
        %v900 = vpack.c.b16 %v855, %v852
        %v901 = vpack.c.b16 %v856, %v853
        %v902 = vpack.c.b16 %v857, %v854
        %v903 = vpack.c.b16 %v861, %v858
        %v904 = vpack.c.b16 %v862, %v859
        %v905 = vpack.c.b16 %v863, %v860
        %v906 = vpack.c.b16 %v867, %v864
        %v907 = vpack.c.b16 %v868, %v865
        %v908 = vpack.c.b16 %v869, %v866
        %v909 = vpack.c.b16 %v873, %v870
        %v910 = vpack.c.b16 %v874, %v871
        %v911 = vpack.c.b16 %v875, %v872
        %v912 = vpack.c.b16 %v879, %v876
        %v913 = vpack.c.b16 %v880, %v877
        %v914 = vpack.c.b16 %v881, %v878
        %v915 = vpack.c.b16 %v885, %v882
        %v916 = vpack.c.b16 %v886, %v883
        %v917 = vpack.c.b16 %v887, %v884
        %v918 = vpack.c.b16 %v891, %v888
        %v919 = vpack.c.b16 %v892, %v889
        %v920 = vpack.c.b16 %v893, %v890
        %v921 = vpack.c.b16 %v897, %v894
        %v922 = vpack.c.b16 %v898, %v895
        %v923 = vpack.c.b16 %v899, %v896
        %948 = vmatprep.subr.bf16.mxu0 %v901
        %949 = vmatpush1.bf16.msra.mxu0 %v900
        %950 = vmatprep.subr.bf16.mxu0 %v904
        %951 = vmatpush1.bf16.msra.mxu0 %v903
        %952 = vmatprep.subr.bf16.mxu0 %v907
        %953 = vmatpush1.bf16.msra.mxu0 %v906
        %954 = vmatprep.subr.bf16.mxu0 %v910
        %955 = vmatpush1.bf16.msra.mxu0 %v909
        %956 = vmatprep.subr.bf16.mxu0 %v913
        %957 = vmatpush1.bf16.msra.mxu0 %v912
        %958 = vmatprep.subr.bf16.mxu0 %v916
        %959 = vmatpush1.bf16.msra.mxu0 %v915
        %960 = vmatprep.subr.bf16.mxu0 %v919
        %961 = vmatpush1.bf16.msra.mxu0 %v918
        %962 = vmatprep.subr.bf16.mxu0 %v922
        %963 = vmatpush1.bf16.msra.mxu0 %v921
        %964 = vmatprep.subr.bf16.mxu0 0
        %965 = vmatpush1.bf16.msra.mxu0 0
        %966 = vmatprep.subr.bf16.mxu0 0
        %967 = vmatpush1.bf16.msra.mxu0 0
        %968 = vmatprep.subr.bf16.mxu0 0
        %969 = vmatpush1.bf16.msra.mxu0 0
        %970 = vmatprep.subr.bf16.mxu0 0
        %971 = vmatpush1.bf16.msra.mxu0 0
        %972 = vmatprep.subr.bf16.mxu0 0
        %973 = vmatpush1.bf16.msra.mxu0 0
        %974 = vmatprep.subr.bf16.mxu0 0
        %975 = vmatpush1.bf16.msra.mxu0 0
        %976 = vmatprep.subr.bf16.mxu0 0
        %977 = vmatpush1.bf16.msra.mxu0 0
        %978 = vmatprep.subr.bf16.mxu0 0
        %979 = vmatpush1.bf16.msra.mxu0 0
        %980 = vmatprep.mubr.bf16.mxu0 0
        %981 = vmatmul.mubr.bf16.gmra.mrb[0].mxu0 %v787
        %v982 = vpop.f32.mrb[0].mxu0
        %v983 = vadd.f32 0.0, %v982
        %v984 = vpop.f32.mrb[0].mxu0
        %v985 = vadd.f32 0.0, %v984
        %v986 = vpop.f32.mrb[0].mxu0
        %v987 = vadd.f32 0.0, %v986
        %v988 = vpop.f32.mrb[0].mxu0
        %v989 = vadd.f32 0.0, %v988
        %990 = vdwg.mxu0
        %991 = vmatprep.subr.bf16.mxu0 0
        %992 = vmatpush1.bf16.msra.mxu0 %v902
        %993 = vmatprep.subr.bf16.mxu0 0
        %994 = vmatpush1.bf16.msra.mxu0 %v905
        %995 = vmatprep.subr.bf16.mxu0 0
        %996 = vmatpush1.bf16.msra.mxu0 %v908
        %997 = vmatprep.subr.bf16.mxu0 0
        %998 = vmatpush1.bf16.msra.mxu0 %v911
        %999 = vmatprep.subr.bf16.mxu0 0
        %1000 = vmatpush1.bf16.msra.mxu0 %v914
        %1001 = vmatprep.subr.bf16.mxu0 0
        %1002 = vmatpush1.bf16.msra.mxu0 %v917
        %1003 = vmatprep.subr.bf16.mxu0 0
        %1004 = vmatpush1.bf16.msra.mxu0 %v920
        %1005 = vmatprep.subr.bf16.mxu0 0
        %1006 = vmatpush1.bf16.msra.mxu0 %v923
        %1007 = vmatprep.subr.bf16.mxu0 0
        %1008 = vmatpush1.bf16.msra.mxu0 0
        %1009 = vmatprep.subr.bf16.mxu0 0
        %1010 = vmatpush1.bf16.msra.mxu0 0
        %1011 = vmatprep.subr.bf16.mxu0 0
        %1012 = vmatpush1.bf16.msra.mxu0 0
        %1013 = vmatprep.subr.bf16.mxu0 0
        %1014 = vmatpush1.bf16.msra.mxu0 0
        %1015 = vmatprep.subr.bf16.mxu0 0
        %1016 = vmatpush1.bf16.msra.mxu0 0
        %1017 = vmatprep.subr.bf16.mxu0 0
        %1018 = vmatpush1.bf16.msra.mxu0 0
        %1019 = vmatprep.subr.bf16.mxu0 0
        %1020 = vmatpush1.bf16.msra.mxu0 0
        %1021 = vmatprep.subr.bf16.mxu0 0
        %1022 = vmatpush1.bf16.msra.mxu0 0
        %1023 = vmatprep.mubr.bf16.mxu0 0
        %1024 = vmatmul.mubr.bf16.gmra.mrb[0].mxu0 %v787
        %v1025 = vpop.f32.mrb[0].mxu0
        %v1026 = vadd.f32 0.0, %v1025
        %v1027 = vpop.f32.mrb[0].mxu0
        %v1028 = vpop.f32.mrb[0].mxu0
        %v1029 = vadd.f32 0.0, %v1028
        %v1030 = vpop.f32.mrb[0].mxu0
        %1031 = vdwg.mxu0
        %vm1032 = vcmask 261120
        %v1034 = vsel %vm1032, %v983, 0
        %v1037 = vsel %vm1032, %v987, 0
        %v1040 = vsel %vm1032, %v985, 0
        %v1043 = vsel %vm1032, %v989, 0
        %1045 = vmatprep.subr.mxu0 0.0
        %1046 = vmatpush1.xpose.msra.mxu0 %v1040
        %1047 = vmatprep.subr.mxu0 0.0
        %1048 = vmatpush1.xpose.msra.mxu0 %v1043
        %1049 = vmatprep.subr.mxu0 0.0
        %1050 = vmatpush1.xpose.msra.mxu0 0.0
        %1051 = vmatprep.subr.mxu0 0.0
        %1052 = vmatpush1.xpose.msra.mxu0 0.0
        %1053 = vmatprep.subr.mxu0 0.0
        %1054 = vmatpush1.xpose.msra.mxu0 0.0
        %1055 = vmatprep.subr.mxu0 0.0
        %1056 = vmatpush1.xpose.msra.mxu0 0.0
        %1057 = vmatprep.subr.mxu0 0.0
        %1058 = vmatpush1.xpose.msra.mxu0 0.0
        %1059 = vmatprep.subr.mxu0 0.0
        %1060 = vmatpush1.xpose.msra.mxu0 0.0
        %1061 = vmatprep.subr.mxu0 0.0
        %1062 = vmatpush1.xpose.msra.mxu0 0.0
        %1063 = vmatprep.subr.mxu0 0.0
        %1064 = vmatpush1.xpose.msra.mxu0 0.0
        %1065 = vmatprep.subr.mxu0 0.0
        %1066 = vmatpush1.xpose.msra.mxu0 0.0
        %1067 = vmatprep.subr.mxu0 0.0
        %1068 = vmatpush1.xpose.msra.mxu0 0.0
        %1069 = vmatprep.subr.mxu0 0.0
        %1070 = vmatpush1.xpose.msra.mxu0 0.0
        %1071 = vmatprep.subr.mxu0 0.0
        %1072 = vmatpush1.xpose.msra.mxu0 0.0
        %1073 = vmatprep.subr.mxu0 0.0
        %1074 = vmatpush1.xpose.msra.mxu0 0.0
        %1075 = vmatprep.subr.mxu0 0.0
        %1076 = vmatpush1.xpose.msra.mxu0 0.0
        %1077 = vmatprep.subr.mxu0 0.0
        %1078 = vmatpush1.xpose.msra.mxu0 0.0
        %1079 = vmatprep.subr.mxu0 0.0
        %1080 = vmatpush1.xpose.msra.mxu0 0.0
        %1081 = vmatprep.subr.mxu0 0.0
        %1082 = vmatpush1.xpose.msra.mxu0 0.0
        %1083 = vmatprep.subr.mxu0 0.0
        %1084 = vmatpush1.xpose.msra.mxu0 0.0
        %1085 = vmatprep.subr.mxu0 0.0
        %1086 = vmatpush1.xpose.msra.mxu0 0.0
        %1087 = vmatprep.subr.mxu0 0.0
        %1088 = vmatpush1.xpose.msra.mxu0 0.0
        %1089 = vmatprep.subr.mxu0 0.0
        %1090 = vmatpush1.xpose.msra.mxu0 0.0
        %1091 = vmatprep.subr.mxu0 0.0
        %1092 = vmatpush1.xpose.msra.mxu0 0.0
        %1093 = vmatprep.subr.mxu0 0.0
        %1094 = vmatpush1.xpose.msra.mxu0 0.0
        %1095 = vmatprep.subr.mxu0 0.0
        %1096 = vmatpush1.xpose.msra.mxu0 0.0
        %1097 = vmatprep.subr.mxu0 0.0
        %1098 = vmatpush1.xpose.msra.mxu0 0.0
        %1099 = vmatprep.subr.mxu0 0.0
        %1100 = vmatpush1.xpose.msra.mxu0 0.0
        %1101 = vmatprep.subr.mxu0 0.0
        %1102 = vmatpush1.xpose.msra.mxu0 0.0
        %1103 = vmatprep.subr.mxu0 0.0
        %1104 = vmatpush1.xpose.msra.mxu0 0.0
        %1105 = vmatprep.subr.mxu0 0.0
        %1106 = vmatpush1.xpose.msra.mxu0 0.0
        %1107 = vmatprep.subr.mxu0 0.0
        %1108 = vmatpush1.xpose.msra.mxu0 0.0
        %1109 = vmatprep.mubr.f32.mxu0 0.0
        %1110 = vmatmul.mubr.f32.gmra.mrb[0].mxu0 %v1034
        %v1111 = vpop.f32.mrb[0].mxu0
        %v1112 = vadd.f32 0.0, %v1111
        %v1113 = vpop.f32.mrb[0].mxu0
        %1114 = vmatprep.mubr.f32.mxu0 0.0
        %1115 = vmatmul.mubr.f32.gmra.mrb[0].mxu0 %v1037
        %v1116 = vpop.f32.mrb[0].mxu0
        %v1117 = vadd.f32 0.0, %v1116
        %v1118 = vpop.f32.mrb[0].mxu0
        %1119 = vdwg.mxu0
        %v1120 = vmul.f32 %v1112, 0.17677669
        %v1121 = vmul.f32 %v1117, 0.17677669
        %v1122 = vadd.f32 %v1120, %v785
        %v1123 = vadd.f32 %v1121, %v786
        %vm1124 = vcmask 130048
        %v1125 = vsel %vm1124, %v1122, -inf
        %1126 = vmax.xlane.f32.xlu0 %v1125
        %v1127 = vpop.xlane.xlu0 %1126
        %v1128 = vsel %vm1124, %v1123, -inf
        %1129 = vmax.xlane.f32.xlu0 %v1128
        %v1130 = vpop.xlane.xlu0 %1129
        %v1131 = vsub.f32 %v1122, %v1127
        %v1132 = vsub.f32 %v1123, %v1130
        %v1133 = vmul.f32 %v1131, 1.442695
        %v1134 = vpow.pop %v1133
        %v1135 = vmul.f32 %v1132, 1.442695
        %v1136 = vpow.pop %v1135
        %v1137 = vsel %vm1124, %v1134, 0.0
        %1138 = vadd.xlane.f32.xlu0 %v1137
        %v1139 = vpop.xlane.xlu0 %1138
        %v1140 = vsel %vm1124, %v1136, 0.0
        %1141 = vadd.xlane.f32.xlu0 %v1140
        %v1142 = vpop.xlane.xlu0 %1141
        %v1143 = vrcp.pop %v1139
        %v1144 = vrcp.pop %v1142
        %v1145 = vmul.f32 %v1134, %v1143
        %v1146 = vmul.f32 %v1136, %v1144
        %v1148 = vsel %vm1124, %v1145, 0
        %v1151 = vsel %vm1124, %v1146, 0
        %1153 = vmatprep.subr.mxu0 0.0
        %1154 = vmatpush1.msra.mxu0 %v1026
        %1155 = vmatprep.subr.mxu0 0.0
        %1156 = vmatpush1.msra.mxu0 %v1029
        %1157 = vmatprep.subr.mxu0 0.0
        %1158 = vmatpush1.msra.mxu0 0.0
        %1159 = vmatprep.subr.mxu0 0.0
        %1160 = vmatpush1.msra.mxu0 0.0
        %1161 = vmatprep.subr.mxu0 0.0
        %1162 = vmatpush1.msra.mxu0 0.0
        %1163 = vmatprep.subr.mxu0 0.0
        %1164 = vmatpush1.msra.mxu0 0.0
        %1165 = vmatprep.subr.mxu0 0.0
        %1166 = vmatpush1.msra.mxu0 0.0
        %1167 = vmatprep.subr.mxu0 0.0
        %1168 = vmatpush1.msra.mxu0 0.0
        %1169 = vmatprep.subr.mxu0 0.0
        %1170 = vmatpush1.msra.mxu0 0.0
        %1171 = vmatprep.subr.mxu0 0.0
        %1172 = vmatpush1.msra.mxu0 0.0
        %1173 = vmatprep.subr.mxu0 0.0
        %1174 = vmatpush1.msra.mxu0 0.0
        %1175 = vmatprep.subr.mxu0 0.0
        %1176 = vmatpush1.msra.mxu0 0.0
        %1177 = vmatprep.subr.mxu0 0.0
        %1178 = vmatpush1.msra.mxu0 0.0
        %1179 = vmatprep.subr.mxu0 0.0
        %1180 = vmatpush1.msra.mxu0 0.0
        %1181 = vmatprep.subr.mxu0 0.0
        %1182 = vmatpush1.msra.mxu0 0.0
        %1183 = vmatprep.subr.mxu0 0.0
        %1184 = vmatpush1.msra.mxu0 0.0
        %1185 = vmatprep.subr.mxu0 0.0
        %1186 = vmatpush1.msra.mxu0 0.0
        %1187 = vmatprep.subr.mxu0 0.0
        %1188 = vmatpush1.msra.mxu0 0.0
        %1189 = vmatprep.subr.mxu0 0.0
        %1190 = vmatpush1.msra.mxu0 0.0
        %1191 = vmatprep.subr.mxu0 0.0
        %1192 = vmatpush1.msra.mxu0 0.0
        %1193 = vmatprep.subr.mxu0 0.0
        %1194 = vmatpush1.msra.mxu0 0.0
        %1195 = vmatprep.subr.mxu0 0.0
        %1196 = vmatpush1.msra.mxu0 0.0
        %1197 = vmatprep.subr.mxu0 0.0
        %1198 = vmatpush1.msra.mxu0 0.0
        %1199 = vmatprep.subr.mxu0 0.0
        %1200 = vmatpush1.msra.mxu0 0.0
        %1201 = vmatprep.subr.mxu0 0.0
        %1202 = vmatpush1.msra.mxu0 0.0
        %1203 = vmatprep.subr.mxu0 0.0
        %1204 = vmatpush1.msra.mxu0 0.0
        %1205 = vmatprep.subr.mxu0 0.0
        %1206 = vmatpush1.msra.mxu0 0.0
        %1207 = vmatprep.subr.mxu0 0.0
        %1208 = vmatpush1.msra.mxu0 0.0
        %1209 = vmatprep.subr.mxu0 0.0
        %1210 = vmatpush1.msra.mxu0 0.0
        %1211 = vmatprep.subr.mxu0 0.0
        %1212 = vmatpush1.msra.mxu0 0.0
        %1213 = vmatprep.subr.mxu0 0.0
        %1214 = vmatpush1.msra.mxu0 0.0
        %1215 = vmatprep.subr.mxu0 0.0
        %1216 = vmatpush1.msra.mxu0 0.0
        %1217 = vmatprep.mubr.f32.mxu0 0.0
        %1218 = vmatmul.mubr.f32.gmra.mrb[0].mxu0 %v1148
        %v1219 = vpop.f32.mrb[0].mxu0
        %v1220 = vadd.f32 0.0, %v1219
        %v1221 = vpop.f32.mrb[0].mxu0
        %1222 = vmatprep.mubr.f32.mxu0 0.0
        %1223 = vmatmul.mubr.f32.gmra.mrb[0].mxu0 %v1151
        %v1224 = vpop.f32.mrb[0].mxu0
        %v1225 = vadd.f32 0.0, %v1224
        %v1226 = vpop.f32.mrb[0].mxu0
        %1227 = vdwg.mxu0
        %1228 = vst.msk [vmem:[#allocation3] sm:$0xff] %vm1032, %v1220
        %1229 = vst.msk [vmem:[#allocation3 + $0x8] sm:$0xff] %vm1032, %v1225
        %1230 = vrot.lane.b32.xlu0 %v983, 96
        %v1231 = vpop.permute.xlu0 %1230
        %1232 = vrot.lane.b32.xlu0 %v987, 96
        %v1233 = vpop.permute.xlu0 %1232
        %1234 = vrot.lane.b32.xlu0 %v985, 96
        %v1235 = vpop.permute.xlu0 %1234
        %1236 = vrot.lane.b32.xlu0 %v989, 96
        %v1237 = vpop.permute.xlu0 %1236
        %v1238 = vsel %vm1032, %v1231, 0
        %v1240 = vsel %vm1032, %v1233, 0
        %v1242 = vsel %vm1032, %v1235, 0
        %v1244 = vsel %vm1032, %v1237, 0
        %1246 = vmatprep.subr.mxu0 0.0
        %1247 = vmatpush1.xpose.msra.mxu0 %v1242
        %1248 = vmatprep.subr.mxu0 0.0
        %1249 = vmatpush1.xpose.msra.mxu0 %v1244
        %1250 = vmatprep.subr.mxu0 0.0
        %1251 = vmatpush1.xpose.msra.mxu0 0.0
        %1252 = vmatprep.subr.mxu0 0.0
        %1253 = vmatpush1.xpose.msra.mxu0 0.0
        %1254 = vmatprep.subr.mxu0 0.0
        %1255 = vmatpush1.xpose.msra.mxu0 0.0
        %1256 = vmatprep.subr.mxu0 0.0
        %1257 = vmatpush1.xpose.msra.mxu0 0.0
        %1258 = vmatprep.subr.mxu0 0.0
        %1259 = vmatpush1.xpose.msra.mxu0 0.0
        %1260 = vmatprep.subr.mxu0 0.0
        %1261 = vmatpush1.xpose.msra.mxu0 0.0
        %1262 = vmatprep.subr.mxu0 0.0
        %1263 = vmatpush1.xpose.msra.mxu0 0.0
        %1264 = vmatprep.subr.mxu0 0.0
        %1265 = vmatpush1.xpose.msra.mxu0 0.0
        %1266 = vmatprep.subr.mxu0 0.0
        %1267 = vmatpush1.xpose.msra.mxu0 0.0
        %1268 = vmatprep.subr.mxu0 0.0
        %1269 = vmatpush1.xpose.msra.mxu0 0.0
        %1270 = vmatprep.subr.mxu0 0.0
        %1271 = vmatpush1.xpose.msra.mxu0 0.0
        %1272 = vmatprep.subr.mxu0 0.0
        %1273 = vmatpush1.xpose.msra.mxu0 0.0
        %1274 = vmatprep.subr.mxu0 0.0
        %1275 = vmatpush1.xpose.msra.mxu0 0.0
        %1276 = vmatprep.subr.mxu0 0.0
        %1277 = vmatpush1.xpose.msra.mxu0 0.0
        %1278 = vmatprep.subr.mxu0 0.0
        %1279 = vmatpush1.xpose.msra.mxu0 0.0
        %1280 = vmatprep.subr.mxu0 0.0
        %1281 = vmatpush1.xpose.msra.mxu0 0.0
        %1282 = vmatprep.subr.mxu0 0.0
        %1283 = vmatpush1.xpose.msra.mxu0 0.0
        %1284 = vmatprep.subr.mxu0 0.0
        %1285 = vmatpush1.xpose.msra.mxu0 0.0
        %1286 = vmatprep.subr.mxu0 0.0
        %1287 = vmatpush1.xpose.msra.mxu0 0.0
        %1288 = vmatprep.subr.mxu0 0.0
        %1289 = vmatpush1.xpose.msra.mxu0 0.0
        %1290 = vmatprep.subr.mxu0 0.0
        %1291 = vmatpush1.xpose.msra.mxu0 0.0
        %1292 = vmatprep.subr.mxu0 0.0
        %1293 = vmatpush1.xpose.msra.mxu0 0.0
        %1294 = vmatprep.subr.mxu0 0.0
        %1295 = vmatpush1.xpose.msra.mxu0 0.0
        %1296 = vmatprep.subr.mxu0 0.0
        %1297 = vmatpush1.xpose.msra.mxu0 0.0
        %1298 = vmatprep.subr.mxu0 0.0
        %1299 = vmatpush1.xpose.msra.mxu0 0.0
        %1300 = vmatprep.subr.mxu0 0.0
        %1301 = vmatpush1.xpose.msra.mxu0 0.0
        %1302 = vmatprep.subr.mxu0 0.0
        %1303 = vmatpush1.xpose.msra.mxu0 0.0
        %1304 = vmatprep.subr.mxu0 0.0
        %1305 = vmatpush1.xpose.msra.mxu0 0.0
        %1306 = vmatprep.subr.mxu0 0.0
        %1307 = vmatpush1.xpose.msra.mxu0 0.0
        %1308 = vmatprep.subr.mxu0 0.0
        %1309 = vmatpush1.xpose.msra.mxu0 0.0
        %1310 = vmatprep.mubr.f32.mxu0 0.0
        %1311 = vmatmul.mubr.f32.gmra.mrb[0].mxu0 %v1238
        %v1312 = vpop.f32.mrb[0].mxu0
        %v1313 = vadd.f32 0.0, %v1312
        %v1314 = vpop.f32.mrb[0].mxu0
        %1315 = vmatprep.mubr.f32.mxu0 0.0
        %1316 = vmatmul.mubr.f32.gmra.mrb[0].mxu0 %v1240
        %v1317 = vpop.f32.mrb[0].mxu0
        %v1318 = vadd.f32 0.0, %v1317
        %v1319 = vpop.f32.mrb[0].mxu0
        %1320 = vdwg.mxu0
        %v1321 = vmul.f32 %v1313, 0.17677669
        %v1322 = vmul.f32 %v1318, 0.17677669
        %v1323 = vadd.f32 %v1321, %v785
        %v1324 = vadd.f32 %v1322, %v786
        %v1325 = vsel %vm1124, %v1323, -inf
        %1326 = vmax.xlane.f32.xlu0 %v1325
        %v1327 = vpop.xlane.xlu0 %1326
        %v1328 = vsel %vm1124, %v1324, -inf
        %1329 = vmax.xlane.f32.xlu0 %v1328
        %v1330 = vpop.xlane.xlu0 %1329
        %v1331 = vsub.f32 %v1323, %v1327
        %v1332 = vsub.f32 %v1324, %v1330
        %v1333 = vmul.f32 %v1331, 1.442695
        %v1334 = vpow.pop %v1333
        %v1335 = vmul.f32 %v1332, 1.442695
        %v1336 = vpow.pop %v1335
        %v1337 = vsel %vm1124, %v1334, 0.0
        %1338 = vadd.xlane.f32.xlu0 %v1337
        %v1339 = vpop.xlane.xlu0 %1338
        %v1340 = vsel %vm1124, %v1336, 0.0
        %1341 = vadd.xlane.f32.xlu0 %v1340
        %v1342 = vpop.xlane.xlu0 %1341
        %v1343 = vrcp.pop %v1339
        %v1344 = vrcp.pop %v1342
        %v1345 = vmul.f32 %v1334, %v1343
        %v1346 = vmul.f32 %v1336, %v1344
        %1349 = vrot.lane.b32.xlu0 %v1026, 96
        %v1350 = vpop.permute.xlu0 %1349
        %1351 = vrot.lane.b32.xlu0 %v1029, 96
        %v1352 = vpop.permute.xlu0 %1351
        %v1356 = vsel %vm1124, %v1345, 0
        %v1359 = vsel %vm1124, %v1346, 0
        %1361 = vmatprep.subr.mxu0 0.0
        %1362 = vmatpush1.msra.mxu0 %v1350
        %1363 = vmatprep.subr.mxu0 0.0
        %1364 = vmatpush1.msra.mxu0 %v1352
        %1365 = vmatprep.subr.mxu0 0.0
        %1366 = vmatpush1.msra.mxu0 0.0
        %1367 = vmatprep.subr.mxu0 0.0
        %1368 = vmatpush1.msra.mxu0 0.0
        %1369 = vmatprep.subr.mxu0 0.0
        %1370 = vmatpush1.msra.mxu0 0.0
        %1371 = vmatprep.subr.mxu0 0.0
        %1372 = vmatpush1.msra.mxu0 0.0
        %1373 = vmatprep.subr.mxu0 0.0
        %1374 = vmatpush1.msra.mxu0 0.0
        %1375 = vmatprep.subr.mxu0 0.0
        %1376 = vmatpush1.msra.mxu0 0.0
        %1377 = vmatprep.subr.mxu0 0.0
        %1378 = vmatpush1.msra.mxu0 0.0
        %1379 = vmatprep.subr.mxu0 0.0
        %1380 = vmatpush1.msra.mxu0 0.0
        %1381 = vmatprep.subr.mxu0 0.0
        %1382 = vmatpush1.msra.mxu0 0.0
        %1383 = vmatprep.subr.mxu0 0.0
        %1384 = vmatpush1.msra.mxu0 0.0
        %1385 = vmatprep.subr.mxu0 0.0
        %1386 = vmatpush1.msra.mxu0 0.0
        %1387 = vmatprep.subr.mxu0 0.0
        %1388 = vmatpush1.msra.mxu0 0.0
        %1389 = vmatprep.subr.mxu0 0.0
        %1390 = vmatpush1.msra.mxu0 0.0
        %1391 = vmatprep.subr.mxu0 0.0
        %1392 = vmatpush1.msra.mxu0 0.0
        %1393 = vmatprep.subr.mxu0 0.0
        %1394 = vmatpush1.msra.mxu0 0.0
        %1395 = vmatprep.subr.mxu0 0.0
        %1396 = vmatpush1.msra.mxu0 0.0
        %1397 = vmatprep.subr.mxu0 0.0
        %1398 = vmatpush1.msra.mxu0 0.0
        %1399 = vmatprep.subr.mxu0 0.0
        %1400 = vmatpush1.msra.mxu0 0.0
        %1401 = vmatprep.subr.mxu0 0.0
        %1402 = vmatpush1.msra.mxu0 0.0
        %1403 = vmatprep.subr.mxu0 0.0
        %1404 = vmatpush1.msra.mxu0 0.0
        %1405 = vmatprep.subr.mxu0 0.0
        %1406 = vmatpush1.msra.mxu0 0.0
        %1407 = vmatprep.subr.mxu0 0.0
        %1408 = vmatpush1.msra.mxu0 0.0
        %1409 = vmatprep.subr.mxu0 0.0
        %1410 = vmatpush1.msra.mxu0 0.0
        %1411 = vmatprep.subr.mxu0 0.0
        %1412 = vmatpush1.msra.mxu0 0.0
        %1413 = vmatprep.subr.mxu0 0.0
        %1414 = vmatpush1.msra.mxu0 0.0
        %1415 = vmatprep.subr.mxu0 0.0
        %1416 = vmatpush1.msra.mxu0 0.0
        %1417 = vmatprep.subr.mxu0 0.0
        %1418 = vmatpush1.msra.mxu0 0.0
        %1419 = vmatprep.subr.mxu0 0.0
        %1420 = vmatpush1.msra.mxu0 0.0
        %1421 = vmatprep.subr.mxu0 0.0
        %1422 = vmatpush1.msra.mxu0 0.0
        %1423 = vmatprep.subr.mxu0 0.0
        %1424 = vmatpush1.msra.mxu0 0.0
        %1425 = vmatprep.mubr.f32.mxu0 0.0
        %1426 = vmatmul.mubr.f32.gmra.mrb[0].mxu0 %v1356
        %v1427 = vpop.f32.mrb[0].mxu0
        %v1428 = vadd.f32 0.0, %v1427
        %v1429 = vpop.f32.mrb[0].mxu0
        %1430 = vmatprep.mubr.f32.mxu0 0.0
        %1431 = vmatmul.mubr.f32.gmra.mrb[0].mxu0 %v1359
        %v1432 = vpop.f32.mrb[0].mxu0
        %v1433 = vadd.f32 0.0, %v1432
        %v1434 = vpop.f32.mrb[0].mxu0
        %1435 = vdwg.mxu0
        %1438 = vrot.lane.b32.xlu0 %v1428, 32
        %v1439 = vpop.permute.xlu0 %1438
        %1440 = vrot.lane.b32.xlu0 %v1433, 32
        %v1441 = vpop.permute.xlu0 %1440
        %vm1444 = vcmask 523520
        %1445 = vst.msk [vmem:[#allocation3] sm:$0xff] %vm1444, %v1439
        %1446 = vst.msk [vmem:[#allocation3 + $0x8] sm:$0xff] %vm1444, %v1441
        %1447 = vrot.lane.b32.xlu0 %v983, 64
        %v1448 = vpop.permute.xlu0 %1447
        %1449 = vrot.lane.b32.xlu0 %v987, 64
        %v1450 = vpop.permute.xlu0 %1449
        %1451 = vrot.lane.b32.xlu0 %v985, 64
        %v1452 = vpop.permute.xlu0 %1451
        %1453 = vrot.lane.b32.xlu0 %v989, 64
        %v1454 = vpop.permute.xlu0 %1453
        %v1455 = vsel %vm1032, %v1448, 0
        %v1457 = vsel %vm1032, %v1450, 0
        %v1459 = vsel %vm1032, %v1452, 0
        %v1461 = vsel %vm1032, %v1454, 0
        %1463 = vmatprep.subr.mxu0 0.0
        %1464 = vmatpush1.xpose.msra.mxu0 %v1459
        %1465 = vmatprep.subr.mxu0 0.0
        %1466 = vmatpush1.xpose.msra.mxu0 %v1461
        %1467 = vmatprep.subr.mxu0 0.0
        %1468 = vmatpush1.xpose.msra.mxu0 0.0
        %1469 = vmatprep.subr.mxu0 0.0
        %1470 = vmatpush1.xpose.msra.mxu0 0.0
        %1471 = vmatprep.subr.mxu0 0.0
        %1472 = vmatpush1.xpose.msra.mxu0 0.0
        %1473 = vmatprep.subr.mxu0 0.0
        %1474 = vmatpush1.xpose.msra.mxu0 0.0
        %1475 = vmatprep.subr.mxu0 0.0
        %1476 = vmatpush1.xpose.msra.mxu0 0.0
        %1477 = vmatprep.subr.mxu0 0.0
        %1478 = vmatpush1.xpose.msra.mxu0 0.0
        %1479 = vmatprep.subr.mxu0 0.0
        %1480 = vmatpush1.xpose.msra.mxu0 0.0
        %1481 = vmatprep.subr.mxu0 0.0
        %1482 = vmatpush1.xpose.msra.mxu0 0.0
        %1483 = vmatprep.subr.mxu0 0.0
        %1484 = vmatpush1.xpose.msra.mxu0 0.0
        %1485 = vmatprep.subr.mxu0 0.0
        %1486 = vmatpush1.xpose.msra.mxu0 0.0
        %1487 = vmatprep.subr.mxu0 0.0
        %1488 = vmatpush1.xpose.msra.mxu0 0.0
        %1489 = vmatprep.subr.mxu0 0.0
        %1490 = vmatpush1.xpose.msra.mxu0 0.0
        %1491 = vmatprep.subr.mxu0 0.0
        %1492 = vmatpush1.xpose.msra.mxu0 0.0
        %1493 = vmatprep.subr.mxu0 0.0
        %1494 = vmatpush1.xpose.msra.mxu0 0.0
        %1495 = vmatprep.subr.mxu0 0.0
        %1496 = vmatpush1.xpose.msra.mxu0 0.0
        %1497 = vmatprep.subr.mxu0 0.0
        %1498 = vmatpush1.xpose.msra.mxu0 0.0
        %1499 = vmatprep.subr.mxu0 0.0
        %1500 = vmatpush1.xpose.msra.mxu0 0.0
        %1501 = vmatprep.subr.mxu0 0.0
        %1502 = vmatpush1.xpose.msra.mxu0 0.0
        %1503 = vmatprep.subr.mxu0 0.0
        %1504 = vmatpush1.xpose.msra.mxu0 0.0
        %1505 = vmatprep.subr.mxu0 0.0
        %1506 = vmatpush1.xpose.msra.mxu0 0.0
        %1507 = vmatprep.subr.mxu0 0.0
        %1508 = vmatpush1.xpose.msra.mxu0 0.0
        %1509 = vmatprep.subr.mxu0 0.0
        %1510 = vmatpush1.xpose.msra.mxu0 0.0
        %1511 = vmatprep.subr.mxu0 0.0
        %1512 = vmatpush1.xpose.msra.mxu0 0.0
        %1513 = vmatprep.subr.mxu0 0.0
        %1514 = vmatpush1.xpose.msra.mxu0 0.0
        %1515 = vmatprep.subr.mxu0 0.0
        %1516 = vmatpush1.xpose.msra.mxu0 0.0
        %1517 = vmatprep.subr.mxu0 0.0
        %1518 = vmatpush1.xpose.msra.mxu0 0.0
        %1519 = vmatprep.subr.mxu0 0.0
        %1520 = vmatpush1.xpose.msra.mxu0 0.0
        %1521 = vmatprep.subr.mxu0 0.0
        %1522 = vmatpush1.xpose.msra.mxu0 0.0
        %1523 = vmatprep.subr.mxu0 0.0
        %1524 = vmatpush1.xpose.msra.mxu0 0.0
        %1525 = vmatprep.subr.mxu0 0.0
        %1526 = vmatpush1.xpose.msra.mxu0 0.0
        %1527 = vmatprep.mubr.f32.mxu0 0.0
        %1528 = vmatmul.mubr.f32.gmra.mrb[0].mxu0 %v1455
        %v1529 = vpop.f32.mrb[0].mxu0
        %v1530 = vadd.f32 0.0, %v1529
        %v1531 = vpop.f32.mrb[0].mxu0
        %1532 = vmatprep.mubr.f32.mxu0 0.0
        %1533 = vmatmul.mubr.f32.gmra.mrb[0].mxu0 %v1457
        %v1534 = vpop.f32.mrb[0].mxu0
        %v1535 = vadd.f32 0.0, %v1534
        %v1536 = vpop.f32.mrb[0].mxu0
        %1537 = vdwg.mxu0
        %v1538 = vmul.f32 %v1530, 0.17677669
        %v1539 = vmul.f32 %v1535, 0.17677669
        %v1540 = vadd.f32 %v1538, %v785
        %v1541 = vadd.f32 %v1539, %v786
        %v1542 = vsel %vm1124, %v1540, -inf
        %1543 = vmax.xlane.f32.xlu0 %v1542
        %v1544 = vpop.xlane.xlu0 %1543
        %v1545 = vsel %vm1124, %v1541, -inf
        %1546 = vmax.xlane.f32.xlu0 %v1545
        %v1547 = vpop.xlane.xlu0 %1546
        %v1548 = vsub.f32 %v1540, %v1544
        %v1549 = vsub.f32 %v1541, %v1547
        %v1550 = vmul.f32 %v1548, 1.442695
        %v1551 = vpow.pop %v1550
        %v1552 = vmul.f32 %v1549, 1.442695
        %v1553 = vpow.pop %v1552
        %v1554 = vsel %vm1124, %v1551, 0.0
        %1555 = vadd.xlane.f32.xlu0 %v1554
        %v1556 = vpop.xlane.xlu0 %1555
        %v1557 = vsel %vm1124, %v1553, 0.0
        %1558 = vadd.xlane.f32.xlu0 %v1557
        %v1559 = vpop.xlane.xlu0 %1558
        %v1560 = vrcp.pop %v1556
        %v1561 = vrcp.pop %v1559
        %v1562 = vmul.f32 %v1551, %v1560
        %v1563 = vmul.f32 %v1553, %v1561
        %1564 = vrot.lane.b32.xlu0 %v1026, 64
        %v1565 = vpop.permute.xlu0 %1564
        %1566 = vrot.lane.b32.xlu0 %v1029, 64
        %v1567 = vpop.permute.xlu0 %1566
        %v1571 = vsel %vm1124, %v1562, 0
        %v1574 = vsel %vm1124, %v1563, 0
        %1576 = vmatprep.subr.mxu0 0.0
        %1577 = vmatpush1.msra.mxu0 %v1565
        %1578 = vmatprep.subr.mxu0 0.0
        %1579 = vmatpush1.msra.mxu0 %v1567
        %1580 = vmatprep.subr.mxu0 0.0
        %1581 = vmatpush1.msra.mxu0 0.0
        %1582 = vmatprep.subr.mxu0 0.0
        %1583 = vmatpush1.msra.mxu0 0.0
        %1584 = vmatprep.subr.mxu0 0.0
        %1585 = vmatpush1.msra.mxu0 0.0
        %1586 = vmatprep.subr.mxu0 0.0
        %1587 = vmatpush1.msra.mxu0 0.0
        %1588 = vmatprep.subr.mxu0 0.0
        %1589 = vmatpush1.msra.mxu0 0.0
        %1590 = vmatprep.subr.mxu0 0.0
        %1591 = vmatpush1.msra.mxu0 0.0
        %1592 = vmatprep.subr.mxu0 0.0
        %1593 = vmatpush1.msra.mxu0 0.0
        %1594 = vmatprep.subr.mxu0 0.0
        %1595 = vmatpush1.msra.mxu0 0.0
        %1596 = vmatprep.subr.mxu0 0.0
        %1597 = vmatpush1.msra.mxu0 0.0
        %1598 = vmatprep.subr.mxu0 0.0
        %1599 = vmatpush1.msra.mxu0 0.0
        %1600 = vmatprep.subr.mxu0 0.0
        %1601 = vmatpush1.msra.mxu0 0.0
        %1602 = vmatprep.subr.mxu0 0.0
        %1603 = vmatpush1.msra.mxu0 0.0
        %1604 = vmatprep.subr.mxu0 0.0
        %1605 = vmatpush1.msra.mxu0 0.0
        %1606 = vmatprep.subr.mxu0 0.0
        %1607 = vmatpush1.msra.mxu0 0.0
        %1608 = vmatprep.subr.mxu0 0.0
        %1609 = vmatpush1.msra.mxu0 0.0
        %1610 = vmatprep.subr.mxu0 0.0
        %1611 = vmatpush1.msra.mxu0 0.0
        %1612 = vmatprep.subr.mxu0 0.0
        %1613 = vmatpush1.msra.mxu0 0.0
        %1614 = vmatprep.subr.mxu0 0.0
        %1615 = vmatpush1.msra.mxu0 0.0
        %1616 = vmatprep.subr.mxu0 0.0
        %1617 = vmatpush1.msra.mxu0 0.0
        %1618 = vmatprep.subr.mxu0 0.0
        %1619 = vmatpush1.msra.mxu0 0.0
        %1620 = vmatprep.subr.mxu0 0.0
        %1621 = vmatpush1.msra.mxu0 0.0
        %1622 = vmatprep.subr.mxu0 0.0
        %1623 = vmatpush1.msra.mxu0 0.0
        %1624 = vmatprep.subr.mxu0 0.0
        %1625 = vmatpush1.msra.mxu0 0.0
        %1626 = vmatprep.subr.mxu0 0.0
        %1627 = vmatpush1.msra.mxu0 0.0
        %1628 = vmatprep.subr.mxu0 0.0
        %1629 = vmatpush1.msra.mxu0 0.0
        %1630 = vmatprep.subr.mxu0 0.0
        %1631 = vmatpush1.msra.mxu0 0.0
        %1632 = vmatprep.subr.mxu0 0.0
        %1633 = vmatpush1.msra.mxu0 0.0
        %1634 = vmatprep.subr.mxu0 0.0
        %1635 = vmatpush1.msra.mxu0 0.0
        %1636 = vmatprep.subr.mxu0 0.0
        %1637 = vmatpush1.msra.mxu0 0.0
        %1638 = vmatprep.subr.mxu0 0.0
        %1639 = vmatpush1.msra.mxu0 0.0
        %1640 = vmatprep.mubr.f32.mxu0 0.0
        %1641 = vmatmul.mubr.f32.gmra.mrb[0].mxu0 %v1571
        %v1642 = vpop.f32.mrb[0].mxu0
        %v1643 = vadd.f32 0.0, %v1642
        %v1644 = vpop.f32.mrb[0].mxu0
        %1645 = vmatprep.mubr.f32.mxu0 0.0
        %1646 = vmatmul.mubr.f32.gmra.mrb[0].mxu0 %v1574
        %v1647 = vpop.f32.mrb[0].mxu0
        %v1648 = vadd.f32 0.0, %v1647
        %v1649 = vpop.f32.mrb[0].mxu0
        %1650 = vdwg.mxu0
        %1653 = vrot.lane.b32.xlu0 %v1643, 64
        %v1654 = vpop.permute.xlu0 %1653
        %1655 = vrot.lane.b32.xlu0 %v1648, 64
        %v1656 = vpop.permute.xlu0 %1655
        %vm1659 = vcmask 785920
        %1660 = vst.msk [vmem:[#allocation3] sm:$0xff] %vm1659, %v1654
        %1661 = vst.msk [vmem:[#allocation3 + $0x8] sm:$0xff] %vm1659, %v1656
        %1662 = vrot.lane.b32.xlu0 %v983, 32
        %v1663 = vpop.permute.xlu0 %1662
        %1664 = vrot.lane.b32.xlu0 %v987, 32
        %v1665 = vpop.permute.xlu0 %1664
        %1666 = vrot.lane.b32.xlu0 %v985, 32
        %v1667 = vpop.permute.xlu0 %1666
        %1668 = vrot.lane.b32.xlu0 %v989, 32
        %v1669 = vpop.permute.xlu0 %1668
        %v1670 = vsel %vm1032, %v1663, 0
        %v1672 = vsel %vm1032, %v1665, 0
        %v1674 = vsel %vm1032, %v1667, 0
        %v1676 = vsel %vm1032, %v1669, 0
        %1678 = vmatprep.subr.mxu0 0.0
        %1679 = vmatpush1.xpose.msra.mxu0 %v1674
        %1680 = vmatprep.subr.mxu0 0.0
        %1681 = vmatpush1.xpose.msra.mxu0 %v1676
        %1682 = vmatprep.subr.mxu0 0.0
        %1683 = vmatpush1.xpose.msra.mxu0 0.0
        %1684 = vmatprep.subr.mxu0 0.0
        %1685 = vmatpush1.xpose.msra.mxu0 0.0
        %1686 = vmatprep.subr.mxu0 0.0
        %1687 = vmatpush1.xpose.msra.mxu0 0.0
        %1688 = vmatprep.subr.mxu0 0.0
        %1689 = vmatpush1.xpose.msra.mxu0 0.0
        %1690 = vmatprep.subr.mxu0 0.0
        %1691 = vmatpush1.xpose.msra.mxu0 0.0
        %1692 = vmatprep.subr.mxu0 0.0
        %1693 = vmatpush1.xpose.msra.mxu0 0.0
        %1694 = vmatprep.subr.mxu0 0.0
        %1695 = vmatpush1.xpose.msra.mxu0 0.0
        %1696 = vmatprep.subr.mxu0 0.0
        %1697 = vmatpush1.xpose.msra.mxu0 0.0
        %1698 = vmatprep.subr.mxu0 0.0
        %1699 = vmatpush1.xpose.msra.mxu0 0.0
        %1700 = vmatprep.subr.mxu0 0.0
        %1701 = vmatpush1.xpose.msra.mxu0 0.0
        %1702 = vmatprep.subr.mxu0 0.0
        %1703 = vmatpush1.xpose.msra.mxu0 0.0
        %1704 = vmatprep.subr.mxu0 0.0
        %1705 = vmatpush1.xpose.msra.mxu0 0.0
        %1706 = vmatprep.subr.mxu0 0.0
        %1707 = vmatpush1.xpose.msra.mxu0 0.0
        %1708 = vmatprep.subr.mxu0 0.0
        %1709 = vmatpush1.xpose.msra.mxu0 0.0
        %1710 = vmatprep.subr.mxu0 0.0
        %1711 = vmatpush1.xpose.msra.mxu0 0.0
        %1712 = vmatprep.subr.mxu0 0.0
        %1713 = vmatpush1.xpose.msra.mxu0 0.0
        %1714 = vmatprep.subr.mxu0 0.0
        %1715 = vmatpush1.xpose.msra.mxu0 0.0
        %1716 = vmatprep.subr.mxu0 0.0
        %1717 = vmatpush1.xpose.msra.mxu0 0.0
        %1718 = vmatprep.subr.mxu0 0.0
        %1719 = vmatpush1.xpose.msra.mxu0 0.0
        %1720 = vmatprep.subr.mxu0 0.0
        %1721 = vmatpush1.xpose.msra.mxu0 0.0
        %1722 = vmatprep.subr.mxu0 0.0
        %1723 = vmatpush1.xpose.msra.mxu0 0.0
        %1724 = vmatprep.subr.mxu0 0.0
        %1725 = vmatpush1.xpose.msra.mxu0 0.0
        %1726 = vmatprep.subr.mxu0 0.0
        %1727 = vmatpush1.xpose.msra.mxu0 0.0
        %1728 = vmatprep.subr.mxu0 0.0
        %1729 = vmatpush1.xpose.msra.mxu0 0.0
        %1730 = vmatprep.subr.mxu0 0.0
        %1731 = vmatpush1.xpose.msra.mxu0 0.0
        %1732 = vmatprep.subr.mxu0 0.0
        %1733 = vmatpush1.xpose.msra.mxu0 0.0
        %1734 = vmatprep.subr.mxu0 0.0
        %1735 = vmatpush1.xpose.msra.mxu0 0.0
        %1736 = vmatprep.subr.mxu0 0.0
        %1737 = vmatpush1.xpose.msra.mxu0 0.0
        %1738 = vmatprep.subr.mxu0 0.0
        %1739 = vmatpush1.xpose.msra.mxu0 0.0
        %1740 = vmatprep.subr.mxu0 0.0
        %1741 = vmatpush1.xpose.msra.mxu0 0.0
        %1742 = vmatprep.mubr.f32.mxu0 0.0
        %1743 = vmatmul.mubr.f32.gmra.mrb[0].mxu0 %v1670
        %v1744 = vpop.f32.mrb[0].mxu0
        %v1745 = vadd.f32 0.0, %v1744
        %v1746 = vpop.f32.mrb[0].mxu0
        %1747 = vmatprep.mubr.f32.mxu0 0.0
        %1748 = vmatmul.mubr.f32.gmra.mrb[0].mxu0 %v1672
        %v1749 = vpop.f32.mrb[0].mxu0
        %v1750 = vadd.f32 0.0, %v1749
        %v1751 = vpop.f32.mrb[0].mxu0
        %1752 = vdwg.mxu0
        %v1753 = vmul.f32 %v1745, 0.17677669
        %v1754 = vmul.f32 %v1750, 0.17677669
        %v1755 = vadd.f32 %v1753, %v785
        %v1756 = vadd.f32 %v1754, %v786
        %v1757 = vsel %vm1124, %v1755, -inf
        %1758 = vmax.xlane.f32.xlu0 %v1757
        %v1759 = vpop.xlane.xlu0 %1758
        %v1760 = vsel %vm1124, %v1756, -inf
        %1761 = vmax.xlane.f32.xlu0 %v1760
        %v1762 = vpop.xlane.xlu0 %1761
        %v1763 = vsub.f32 %v1755, %v1759
        %v1764 = vsub.f32 %v1756, %v1762
        %v1765 = vmul.f32 %v1763, 1.442695
        %v1766 = vpow.pop %v1765
        %v1767 = vmul.f32 %v1764, 1.442695
        %v1768 = vpow.pop %v1767
        %v1769 = vsel %vm1124, %v1766, 0.0
        %1770 = vadd.xlane.f32.xlu0 %v1769
        %v1771 = vpop.xlane.xlu0 %1770
        %v1772 = vsel %vm1124, %v1768, 0.0
        %1773 = vadd.xlane.f32.xlu0 %v1772
        %v1774 = vpop.xlane.xlu0 %1773
        %v1775 = vrcp.pop %v1771
        %v1776 = vrcp.pop %v1774
        %v1777 = vmul.f32 %v1766, %v1775
        %v1778 = vmul.f32 %v1768, %v1776
        %1779 = vrot.lane.b32.xlu0 %v1026, 32
        %v1780 = vpop.permute.xlu0 %1779
        %1781 = vrot.lane.b32.xlu0 %v1029, 32
        %v1782 = vpop.permute.xlu0 %1781
        %v1786 = vsel %vm1124, %v1777, 0
        %v1789 = vsel %vm1124, %v1778, 0
        %1791 = vmatprep.subr.mxu0 0.0
        %1792 = vmatpush1.msra.mxu0 %v1780
        %1793 = vmatprep.subr.mxu0 0.0
        %1794 = vmatpush1.msra.mxu0 %v1782
        %1795 = vmatprep.subr.mxu0 0.0
        %1796 = vmatpush1.msra.mxu0 0.0
        %1797 = vmatprep.subr.mxu0 0.0
        %1798 = vmatpush1.msra.mxu0 0.0
        %1799 = vmatprep.subr.mxu0 0.0
        %1800 = vmatpush1.msra.mxu0 0.0
        %1801 = vmatprep.subr.mxu0 0.0
        %1802 = vmatpush1.msra.mxu0 0.0
        %1803 = vmatprep.subr.mxu0 0.0
        %1804 = vmatpush1.msra.mxu0 0.0
        %1805 = vmatprep.subr.mxu0 0.0
        %1806 = vmatpush1.msra.mxu0 0.0
        %1807 = vmatprep.subr.mxu0 0.0
        %1808 = vmatpush1.msra.mxu0 0.0
        %1809 = vmatprep.subr.mxu0 0.0
        %1810 = vmatpush1.msra.mxu0 0.0
        %1811 = vmatprep.subr.mxu0 0.0
        %1812 = vmatpush1.msra.mxu0 0.0
        %1813 = vmatprep.subr.mxu0 0.0
        %1814 = vmatpush1.msra.mxu0 0.0
        %1815 = vmatprep.subr.mxu0 0.0
        %1816 = vmatpush1.msra.mxu0 0.0
        %1817 = vmatprep.subr.mxu0 0.0
        %1818 = vmatpush1.msra.mxu0 0.0
        %1819 = vmatprep.subr.mxu0 0.0
        %1820 = vmatpush1.msra.mxu0 0.0
        %1821 = vmatprep.subr.mxu0 0.0
        %1822 = vmatpush1.msra.mxu0 0.0
        %1823 = vmatprep.subr.mxu0 0.0
        %1824 = vmatpush1.msra.mxu0 0.0
        %1825 = vmatprep.subr.mxu0 0.0
        %1826 = vmatpush1.msra.mxu0 0.0
        %1827 = vmatprep.subr.mxu0 0.0
        %1828 = vmatpush1.msra.mxu0 0.0
        %1829 = vmatprep.subr.mxu0 0.0
        %1830 = vmatpush1.msra.mxu0 0.0
        %1831 = vmatprep.subr.mxu0 0.0
        %1832 = vmatpush1.msra.mxu0 0.0
        %1833 = vmatprep.subr.mxu0 0.0
        %1834 = vmatpush1.msra.mxu0 0.0
        %1835 = vmatprep.subr.mxu0 0.0
        %1836 = vmatpush1.msra.mxu0 0.0
        %1837 = vmatprep.subr.mxu0 0.0
        %1838 = vmatpush1.msra.mxu0 0.0
        %1839 = vmatprep.subr.mxu0 0.0
        %1840 = vmatpush1.msra.mxu0 0.0
        %1841 = vmatprep.subr.mxu0 0.0
        %1842 = vmatpush1.msra.mxu0 0.0
        %1843 = vmatprep.subr.mxu0 0.0
        %1844 = vmatpush1.msra.mxu0 0.0
        %1845 = vmatprep.subr.mxu0 0.0
        %1846 = vmatpush1.msra.mxu0 0.0
        %1847 = vmatprep.subr.mxu0 0.0
        %1848 = vmatpush1.msra.mxu0 0.0
        %1849 = vmatprep.subr.mxu0 0.0
        %1850 = vmatpush1.msra.mxu0 0.0
        %1851 = vmatprep.subr.mxu0 0.0
        %1852 = vmatpush1.msra.mxu0 0.0
        %1853 = vmatprep.subr.mxu0 0.0
        %1854 = vmatpush1.msra.mxu0 0.0
        %1855 = vmatprep.mubr.f32.mxu0 0.0
        %1856 = vmatmul.mubr.f32.gmra.mrb[0].mxu0 %v1786
        %v1857 = vpop.f32.mrb[0].mxu0
        %v1858 = vadd.f32 0.0, %v1857
        %v1859 = vpop.f32.mrb[0].mxu0
        %1860 = vmatprep.mubr.f32.mxu0 0.0
        %1861 = vmatmul.mubr.f32.gmra.mrb[0].mxu0 %v1789
        %v1862 = vpop.f32.mrb[0].mxu0
        %v1863 = vadd.f32 0.0, %v1862
        %v1864 = vpop.f32.mrb[0].mxu0
        %1865 = vdwg.mxu0
        %1868 = vrot.lane.b32.xlu0 %v1858, 96
        %v1869 = vpop.permute.xlu0 %1868
        %1870 = vrot.lane.b32.xlu0 %v1863, 96
        %v1871 = vpop.permute.xlu0 %1870
        %vm1874 = vcmask 1048320
        %1875 = vst.msk [vmem:[#allocation3] sm:$0xff] %vm1874, %v1869
        %1876 = vst.msk [vmem:[#allocation3 + $0x8] sm:$0xff] %vm1874, %v1871
        %v1877 = vld [vmem:[#allocation3] sm:$0xff]
        %v1878 = vld [vmem:[#allocation3 + $0x8] sm:$0xff]
        %v1879 = vpack.c.bf16 %v1878, %v1877
        %v1880 = vld [vmem:[#allocation11] sm:$0xf]
        %v1881 = vld [vmem:[#allocation11 + $0x4] sm:$0xf]
        %v1882 = vld [vmem:[#allocation11 + $0x8] sm:$0xf]
        %v1883 = vld [vmem:[#allocation11 + $0xc] sm:$0xf]
        %v1884 = vld [vmem:[#allocation11 + $0x10] sm:$0xf]
        %v1885 = vld [vmem:[#allocation11 + $0x14] sm:$0xf]
        %v1886 = vld [vmem:[#allocation11 + $0x18] sm:$0xf]
        %v1887 = vld [vmem:[#allocation11 + $0x1c] sm:$0xf]
        %v1888 = vld [vmem:[#allocation11 + $0x20] sm:$0xf]
        %v1889 = vld [vmem:[#allocation11 + $0x24] sm:$0xf]
        %v1890 = vld [vmem:[#allocation11 + $0x28] sm:$0xf]
        %v1891 = vld [vmem:[#allocation11 + $0x2c] sm:$0xf]
        %v1892 = vld [vmem:[#allocation11 + $0x30] sm:$0xf]
        %v1893 = vld [vmem:[#allocation11 + $0x34] sm:$0xf]
        %v1894 = vld [vmem:[#allocation11 + $0x38] sm:$0xf]
        %v1895 = vld [vmem:[#allocation11 + $0x3c] sm:$0xf]
        %v1896 = vld [vmem:[%s5] sm:$0x1]
        %v1898 = vlaneseq
        %v1899 = vshrl.u32 %v1898, 7
        %v1900 = vsub.s32 0, %v1899
        %v1901 = vrot.slane %v1896, %v1900
        %v1919 = vunpack.c.l.b16 %v1880
        %v1920 = vunpack.c.l.b16 %v1881
        %v1921 = vunpack.c.l.b16 %v1882
        %v1922 = vunpack.c.l.b16 %v1883
        %v1923 = vunpack.c.l.b16 %v1884
        %v1924 = vunpack.c.l.b16 %v1885
        %v1925 = vunpack.c.l.b16 %v1886
        %v1926 = vunpack.c.l.b16 %v1887
        %v1927 = vunpack.c.l.b16 %v1888
        %v1928 = vunpack.c.l.b16 %v1889
        %v1929 = vunpack.c.l.b16 %v1890
        %v1930 = vunpack.c.l.b16 %v1891
        %v1931 = vunpack.c.l.b16 %v1892
        %v1932 = vunpack.c.l.b16 %v1893
        %v1933 = vunpack.c.l.b16 %v1894
        %v1934 = vunpack.c.l.b16 %v1895
        %v1935 = vpack.c.b16 %v1920, %v1919
        %v1936 = vpack.c.b16 %v1922, %v1921
        %v1937 = vpack.c.b16 %v1924, %v1923
        %v1938 = vpack.c.b16 %v1926, %v1925
        %v1939 = vpack.c.b16 %v1928, %v1927
        %v1940 = vpack.c.b16 %v1930, %v1929
        %v1941 = vpack.c.b16 %v1932, %v1931
        %v1942 = vpack.c.b16 %v1934, %v1933
        %1951 = vmatprep.subr.bf16.mxu0 0
        %1952 = vmatpush1.bf16.msra.mxu0 %v1935
        %1953 = vmatprep.subr.bf16.mxu0 0
        %1954 = vmatpush1.bf16.msra.mxu0 %v1936
        %1955 = vmatprep.subr.bf16.mxu0 0
        %1956 = vmatpush1.bf16.msra.mxu0 %v1937
        %1957 = vmatprep.subr.bf16.mxu0 0
        %1958 = vmatpush1.bf16.msra.mxu0 %v1938
        %1959 = vmatprep.subr.bf16.mxu0 0
        %1960 = vmatpush1.bf16.msra.mxu0 %v1939
        %1961 = vmatprep.subr.bf16.mxu0 0
        %1962 = vmatpush1.bf16.msra.mxu0 %v1940
        %1963 = vmatprep.subr.bf16.mxu0 0
        %1964 = vmatpush1.bf16.msra.mxu0 %v1941
        %1965 = vmatprep.subr.bf16.mxu0 0
        %1966 = vmatpush1.bf16.msra.mxu0 %v1942
        %1967 = vmatprep.subr.bf16.mxu0 0
        %1968 = vmatpush1.bf16.msra.mxu0 0
        %1969 = vmatprep.subr.bf16.mxu0 0
        %1970 = vmatpush1.bf16.msra.mxu0 0
        %1971 = vmatprep.subr.bf16.mxu0 0
        %1972 = vmatpush1.bf16.msra.mxu0 0
        %1973 = vmatprep.subr.bf16.mxu0 0
        %1974 = vmatpush1.bf16.msra.mxu0 0
        %1975 = vmatprep.subr.bf16.mxu0 0
        %1976 = vmatpush1.bf16.msra.mxu0 0
        %1977 = vmatprep.subr.bf16.mxu0 0
        %1978 = vmatpush1.bf16.msra.mxu0 0
        %1979 = vmatprep.subr.bf16.mxu0 0
        %1980 = vmatpush1.bf16.msra.mxu0 0
        %1981 = vmatprep.subr.bf16.mxu0 0
        %1982 = vmatpush1.bf16.msra.mxu0 0
        %1983 = vmatprep.mubr.bf16.mxu0 0
        %1984 = vmatmul.mubr.bf16.gmra.mrb[0].mxu0 %v1879
        %v1985 = vpop.f32.mrb[0].mxu0
        %v1986 = vadd.f32 %v1901, %v1985
        %v1987 = vpop.f32.mrb[0].mxu0
        %v1988 = vpop.f32.mrb[0].mxu0
        %v1989 = vadd.f32 %v1901, %v1988
        %v1990 = vpop.f32.mrb[0].mxu0
        %1991 = vdwg.mxu0
        %v1992 = vadd.f32 %v776, %v1986
        %v1993 = vadd.f32 %v777, %v1989
        %v1994 = vld [vmem:[%s6] sm:$0x1]
        %v1995 = vld [vmem:[%s7] sm:$0x1]
        %1996 = vadd.xlane.f32.xlu0 %v1992
        %v1997 = vpop.xlane.xlu0 %1996
        %1998 = vadd.xlane.f32.xlu0 %v1993
        %v1999 = vpop.xlane.xlu0 %1998
        %v2000 = vrcp.pop 128.0
        %v2001 = vmul.f32 %v1997, %v2000
        %v2002 = vmul.f32 %v1999, %v2000
        %v2003 = vsub.f32 %v1992, %v2001
        %v2004 = vsub.f32 %v1993, %v2002
        %v2005 = vmul.f32 %v2003, %v2003
        %v2006 = vmul.f32 %v2004, %v2004
        %2007 = vadd.xlane.f32.xlu0 %v2005
        %v2008 = vpop.xlane.xlu0 %2007
        %2009 = vadd.xlane.f32.xlu0 %v2006
        %v2010 = vpop.xlane.xlu0 %2009
        %v2011 = vmul.f32 %v2008, %v2000
        %v2012 = vmul.f32 %v2010, %v2000
        %v2013 = vadd.f32 %v2011, 1e-05
        %v2014 = vadd.f32 %v2012, 1e-05
        %v2015 = vrsqrt.pop %v2013
        %v2016 = vrsqrt.pop %v2014
        %v2017 = vmul.f32 %v2003, %v2015
        %v2018 = vmul.f32 %v2004, %v2016
        %v2020 = vlaneseq
        %v2021 = vshrl.u32 %v2020, 7
        %v2022 = vsub.s32 0, %v2021
        %v2023 = vrot.slane %v1994, %v2022
        %v2025 = vmul.f32 %v2017, %v2023
        %v2026 = vmul.f32 %v2018, %v2023
        %v2028 = vlaneseq
        %v2029 = vshrl.u32 %v2028, 7
        %v2030 = vsub.s32 0, %v2029
        %v2031 = vrot.slane %v1995, %v2030
        %v2033 = vadd.f32 %v2025, %v2031
        %v2034 = vadd.f32 %v2026, %v2031
        %v2035 = vpack.c.bf16 %v2034, %v2033
        %v2036 = vld [vmem:[#allocation12] sm:$0xff]
        %v2037 = vld [vmem:[#allocation12 + $0x8] sm:$0xff]
        %v2038 = vld [vmem:[#allocation12 + $0x10] sm:$0xff]
        %v2039 = vld [vmem:[#allocation12 + $0x18] sm:$0xff]
        %v2040 = vld [vmem:[#allocation12 + $0x20] sm:$0xff]
        %v2041 = vld [vmem:[#allocation12 + $0x28] sm:$0xff]
        %v2042 = vld [vmem:[#allocation12 + $0x30] sm:$0xff]
        %v2043 = vld [vmem:[#allocation12 + $0x38] sm:$0xff]
        %v2044 = vld [vmem:[#allocation12 + $0x40] sm:$0xff]
        %v2045 = vld [vmem:[#allocation12 + $0x48] sm:$0xff]
        %v2046 = vld [vmem:[#allocation12 + $0x50] sm:$0xff]
        %v2047 = vld [vmem:[#allocation12 + $0x58] sm:$0xff]
        %v2048 = vld [vmem:[#allocation12 + $0x60] sm:$0xff]
        %v2049 = vld [vmem:[#allocation12 + $0x68] sm:$0xff]
        %v2050 = vld [vmem:[#allocation12 + $0x70] sm:$0xff]
        %v2051 = vld [vmem:[#allocation12 + $0x78] sm:$0xff]
        %v2052 = vld [vmem:[#allocation12 + $0x80] sm:$0xff]
        %v2053 = vld [vmem:[#allocation12 + $0x88] sm:$0xff]
        %v2054 = vld [vmem:[#allocation12 + $0x90] sm:$0xff]
        %v2055 = vld [vmem:[#allocation12 + $0x98] sm:$0xff]
        %v2056 = vld [vmem:[#allocation12 + $0xa0] sm:$0xff]
        %v2057 = vld [vmem:[#allocation12 + $0xa8] sm:$0xff]
        %v2058 = vld [vmem:[#allocation12 + $0xb0] sm:$0xff]
        %v2059 = vld [vmem:[#allocation12 + $0xb8] sm:$0xff]
        %v2060 = vld [vmem:[#allocation12 + $0xc0] sm:$0xff]
        %v2061 = vld [vmem:[#allocation12 + $0xc8] sm:$0xff]
        %v2062 = vld [vmem:[#allocation12 + $0xd0] sm:$0xff]
        %v2063 = vld [vmem:[#allocation12 + $0xd8] sm:$0xff]
        %v2064 = vld [vmem:[#allocation12 + $0xe0] sm:$0xff]
        %v2065 = vld [vmem:[#allocation12 + $0xe8] sm:$0xff]
        %v2066 = vld [vmem:[#allocation12 + $0xf0] sm:$0xff]
        %v2067 = vld [vmem:[#allocation12 + $0xf8] sm:$0xff]
        %v2068 = vld [vmem:[#allocation14] sm:$0xf]
        %v2070 = vlaneseq
        %v2071 = vshrl.u32 %v2070, 7
        %v2072 = vsub.s32 0, %v2071
        %v2073 = vrot.slane %v2068, %v2072
        %v2074 = vlaneseq
        %v2075 = vshrl.u32 %v2074, 7
        %v2076 = vsub.s32 1, %v2075
        %v2077 = vrot.slane %v2068, %v2076
        %v2078 = vlaneseq
        %v2079 = vshrl.u32 %v2078, 7
        %v2080 = vsub.s32 2, %v2079
        %v2081 = vrot.slane %v2068, %v2080
        %v2082 = vlaneseq
        %v2083 = vshrl.u32 %v2082, 7
        %v2084 = vsub.s32 3, %v2083
        %v2085 = vrot.slane %v2068, %v2084
        %v2122 = vunpack.c.l.b16 %v2036
        %v2123 = vunpack.c.h.b16 %v2036
        %v2124 = vunpack.c.l.b16 %v2037
        %v2125 = vunpack.c.h.b16 %v2037
        %v2126 = vunpack.c.l.b16 %v2038
        %v2127 = vunpack.c.h.b16 %v2038
        %v2128 = vunpack.c.l.b16 %v2039
        %v2129 = vunpack.c.h.b16 %v2039
        %v2130 = vunpack.c.l.b16 %v2040
        %v2131 = vunpack.c.h.b16 %v2040
        %v2132 = vunpack.c.l.b16 %v2041
        %v2133 = vunpack.c.h.b16 %v2041
        %v2134 = vunpack.c.l.b16 %v2042
        %v2135 = vunpack.c.h.b16 %v2042
        %v2136 = vunpack.c.l.b16 %v2043
        %v2137 = vunpack.c.h.b16 %v2043
        %v2138 = vunpack.c.l.b16 %v2044
        %v2139 = vunpack.c.h.b16 %v2044
        %v2140 = vunpack.c.l.b16 %v2045
        %v2141 = vunpack.c.h.b16 %v2045
        %v2142 = vunpack.c.l.b16 %v2046
        %v2143 = vunpack.c.h.b16 %v2046
        %v2144 = vunpack.c.l.b16 %v2047
        %v2145 = vunpack.c.h.b16 %v2047
        %v2146 = vunpack.c.l.b16 %v2048
        %v2147 = vunpack.c.h.b16 %v2048
        %v2148 = vunpack.c.l.b16 %v2049
        %v2149 = vunpack.c.h.b16 %v2049
        %v2150 = vunpack.c.l.b16 %v2050
        %v2151 = vunpack.c.h.b16 %v2050
        %v2152 = vunpack.c.l.b16 %v2051
        %v2153 = vunpack.c.h.b16 %v2051
        %v2154 = vunpack.c.l.b16 %v2052
        %v2155 = vunpack.c.h.b16 %v2052
        %v2156 = vunpack.c.l.b16 %v2053
        %v2157 = vunpack.c.h.b16 %v2053
        %v2158 = vunpack.c.l.b16 %v2054
        %v2159 = vunpack.c.h.b16 %v2054
        %v2160 = vunpack.c.l.b16 %v2055
        %v2161 = vunpack.c.h.b16 %v2055
        %v2162 = vunpack.c.l.b16 %v2056
        %v2163 = vunpack.c.h.b16 %v2056
        %v2164 = vunpack.c.l.b16 %v2057
        %v2165 = vunpack.c.h.b16 %v2057
        %v2166 = vunpack.c.l.b16 %v2058
        %v2167 = vunpack.c.h.b16 %v2058
        %v2168 = vunpack.c.l.b16 %v2059
        %v2169 = vunpack.c.h.b16 %v2059
        %v2170 = vunpack.c.l.b16 %v2060
        %v2171 = vunpack.c.h.b16 %v2060
        %v2172 = vunpack.c.l.b16 %v2061
        %v2173 = vunpack.c.h.b16 %v2061
        %v2174 = vunpack.c.l.b16 %v2062
        %v2175 = vunpack.c.h.b16 %v2062
        %v2176 = vunpack.c.l.b16 %v2063
        %v2177 = vunpack.c.h.b16 %v2063
        %v2178 = vunpack.c.l.b16 %v2064
        %v2179 = vunpack.c.h.b16 %v2064
        %v2180 = vunpack.c.l.b16 %v2065
        %v2181 = vunpack.c.h.b16 %v2065
        %v2182 = vunpack.c.l.b16 %v2066
        %v2183 = vunpack.c.h.b16 %v2066
        %v2184 = vunpack.c.l.b16 %v2067
        %v2185 = vunpack.c.h.b16 %v2067
        %v2186 = vpack.c.b16 %v2126, %v2122
        %v2187 = vpack.c.b16 %v2127, %v2123
        %v2188 = vpack.c.b16 %v2128, %v2124
        %v2189 = vpack.c.b16 %v2129, %v2125
        %v2190 = vpack.c.b16 %v2134, %v2130
        %v2191 = vpack.c.b16 %v2135, %v2131
        %v2192 = vpack.c.b16 %v2136, %v2132
        %v2193 = vpack.c.b16 %v2137, %v2133
        %v2194 = vpack.c.b16 %v2142, %v2138
        %v2195 = vpack.c.b16 %v2143, %v2139
        %v2196 = vpack.c.b16 %v2144, %v2140
        %v2197 = vpack.c.b16 %v2145, %v2141
        %v2198 = vpack.c.b16 %v2150, %v2146
        %v2199 = vpack.c.b16 %v2151, %v2147
        %v2200 = vpack.c.b16 %v2152, %v2148
        %v2201 = vpack.c.b16 %v2153, %v2149
        %v2202 = vpack.c.b16 %v2158, %v2154
        %v2203 = vpack.c.b16 %v2159, %v2155
        %v2204 = vpack.c.b16 %v2160, %v2156
        %v2205 = vpack.c.b16 %v2161, %v2157
        %v2206 = vpack.c.b16 %v2166, %v2162
        %v2207 = vpack.c.b16 %v2167, %v2163
        %v2208 = vpack.c.b16 %v2168, %v2164
        %v2209 = vpack.c.b16 %v2169, %v2165
        %v2210 = vpack.c.b16 %v2174, %v2170
        %v2211 = vpack.c.b16 %v2175, %v2171
        %v2212 = vpack.c.b16 %v2176, %v2172
        %v2213 = vpack.c.b16 %v2177, %v2173
        %v2214 = vpack.c.b16 %v2182, %v2178
        %v2215 = vpack.c.b16 %v2183, %v2179
        %v2216 = vpack.c.b16 %v2184, %v2180
        %v2217 = vpack.c.b16 %v2185, %v2181
        %2250 = vmatprep.subr.bf16.mxu0 %v2187
        %2251 = vmatpush1.bf16.msra.mxu0 %v2186
        %2252 = vmatprep.subr.bf16.mxu0 %v2191
        %2253 = vmatpush1.bf16.msra.mxu0 %v2190
        %2254 = vmatprep.subr.bf16.mxu0 %v2195
        %2255 = vmatpush1.bf16.msra.mxu0 %v2194
        %2256 = vmatprep.subr.bf16.mxu0 %v2199
        %2257 = vmatpush1.bf16.msra.mxu0 %v2198
        %2258 = vmatprep.subr.bf16.mxu0 %v2203
        %2259 = vmatpush1.bf16.msra.mxu0 %v2202
        %2260 = vmatprep.subr.bf16.mxu0 %v2207
        %2261 = vmatpush1.bf16.msra.mxu0 %v2206
        %2262 = vmatprep.subr.bf16.mxu0 %v2211
        %2263 = vmatpush1.bf16.msra.mxu0 %v2210
        %2264 = vmatprep.subr.bf16.mxu0 %v2215
        %2265 = vmatpush1.bf16.msra.mxu0 %v2214
        %2266 = vmatprep.subr.bf16.mxu0 0
        %2267 = vmatpush1.bf16.msra.mxu0 0
        %2268 = vmatprep.subr.bf16.mxu0 0
        %2269 = vmatpush1.bf16.msra.mxu0 0
        %2270 = vmatprep.subr.bf16.mxu0 0
        %2271 = vmatpush1.bf16.msra.mxu0 0
        %2272 = vmatprep.subr.bf16.mxu0 0
        %2273 = vmatpush1.bf16.msra.mxu0 0
        %2274 = vmatprep.subr.bf16.mxu0 0
        %2275 = vmatpush1.bf16.msra.mxu0 0
        %2276 = vmatprep.subr.bf16.mxu0 0
        %2277 = vmatpush1.bf16.msra.mxu0 0
        %2278 = vmatprep.subr.bf16.mxu0 0
        %2279 = vmatpush1.bf16.msra.mxu0 0
        %2280 = vmatprep.subr.bf16.mxu0 0
        %2281 = vmatpush1.bf16.msra.mxu0 0
        %2282 = vmatprep.mubr.bf16.mxu0 0
        %2283 = vmatmul.mubr.bf16.gmra.mrb[0].mxu0 %v2035
        %v2284 = vpop.f32.mrb[0].mxu0
        %v2285 = vadd.f32 %v2073, %v2284
        %v2286 = vpop.f32.mrb[0].mxu0
        %v2287 = vadd.f32 %v2077, %v2286
        %v2288 = vpop.f32.mrb[0].mxu0
        %v2289 = vadd.f32 %v2073, %v2288
        %v2290 = vpop.f32.mrb[0].mxu0
        %v2291 = vadd.f32 %v2077, %v2290
        %2292 = vdwg.mxu0
        %2293 = vmatprep.subr.bf16.mxu0 %v2189
        %2294 = vmatpush1.bf16.msra.mxu0 %v2188
        %2295 = vmatprep.subr.bf16.mxu0 %v2193
        %2296 = vmatpush1.bf16.msra.mxu0 %v2192
        %2297 = vmatprep.subr.bf16.mxu0 %v2197
        %2298 = vmatpush1.bf16.msra.mxu0 %v2196
        %2299 = vmatprep.subr.bf16.mxu0 %v2201
        %2300 = vmatpush1.bf16.msra.mxu0 %v2200
        %2301 = vmatprep.subr.bf16.mxu0 %v2205
        %2302 = vmatpush1.bf16.msra.mxu0 %v2204
        %2303 = vmatprep.subr.bf16.mxu0 %v2209
        %2304 = vmatpush1.bf16.msra.mxu0 %v2208
        %2305 = vmatprep.subr.bf16.mxu0 %v2213
        %2306 = vmatpush1.bf16.msra.mxu0 %v2212
        %2307 = vmatprep.subr.bf16.mxu0 %v2217
        %2308 = vmatpush1.bf16.msra.mxu0 %v2216
        %2309 = vmatprep.subr.bf16.mxu0 0
        %2310 = vmatpush1.bf16.msra.mxu0 0
        %2311 = vmatprep.subr.bf16.mxu0 0
        %2312 = vmatpush1.bf16.msra.mxu0 0
        %2313 = vmatprep.subr.bf16.mxu0 0
        %2314 = vmatpush1.bf16.msra.mxu0 0
        %2315 = vmatprep.subr.bf16.mxu0 0
        %2316 = vmatpush1.bf16.msra.mxu0 0
        %2317 = vmatprep.subr.bf16.mxu0 0
        %2318 = vmatpush1.bf16.msra.mxu0 0
        %2319 = vmatprep.subr.bf16.mxu0 0
        %2320 = vmatpush1.bf16.msra.mxu0 0
        %2321 = vmatprep.subr.bf16.mxu0 0
        %2322 = vmatpush1.bf16.msra.mxu0 0
        %2323 = vmatprep.subr.bf16.mxu0 0
        %2324 = vmatpush1.bf16.msra.mxu0 0
        %2325 = vmatprep.mubr.bf16.mxu0 0
        %2326 = vmatmul.mubr.bf16.gmra.mrb[0].mxu0 %v2035
        %v2327 = vpop.f32.mrb[0].mxu0
        %v2328 = vadd.f32 %v2081, %v2327
        %v2329 = vpop.f32.mrb[0].mxu0
        %v2330 = vadd.f32 %v2085, %v2329
        %v2331 = vpop.f32.mrb[0].mxu0
        %v2332 = vadd.f32 %v2081, %v2331
        %v2333 = vpop.f32.mrb[0].mxu0
        %v2334 = vadd.f32 %v2085, %v2333
        %2335 = vdwg.mxu0
        %v2336 = vmax.f32 %v2285, 0.0
        %v2337 = vmax.f32 %v2287, 0.0
        %v2338 = vmax.f32 %v2328, 0.0
        %v2339 = vmax.f32 %v2330, 0.0
        %v2340 = vmax.f32 %v2289, 0.0
        %v2341 = vmax.f32 %v2291, 0.0
        %v2342 = vmax.f32 %v2332, 0.0
        %v2343 = vmax.f32 %v2334, 0.0
        %v2344 = vpack.c.bf16 %v2340, %v2336
        %v2345 = vpack.c.bf16 %v2341, %v2337
        %v2346 = vpack.c.bf16 %v2342, %v2338
        %v2347 = vpack.c.bf16 %v2343, %v2339
        %v2348 = vld [vmem:[#allocation15] sm:$0xf]
        %v2349 = vld [vmem:[#allocation15 + $0x4] sm:$0xf]
        %v2350 = vld [vmem:[#allocation15 + $0x8] sm:$0xf]
        %v2351 = vld [vmem:[#allocation15 + $0xc] sm:$0xf]
        %v2352 = vld [vmem:[#allocation15 + $0x10] sm:$0xf]
        %v2353 = vld [vmem:[#allocation15 + $0x14] sm:$0xf]
        %v2354 = vld [vmem:[#allocation15 + $0x18] sm:$0xf]
        %v2355 = vld [vmem:[#allocation15 + $0x1c] sm:$0xf]
        %v2356 = vld [vmem:[#allocation15 + $0x20] sm:$0xf]
        %v2357 = vld [vmem:[#allocation15 + $0x24] sm:$0xf]
        %v2358 = vld [vmem:[#allocation15 + $0x28] sm:$0xf]
        %v2359 = vld [vmem:[#allocation15 + $0x2c] sm:$0xf]
        %v2360 = vld [vmem:[#allocation15 + $0x30] sm:$0xf]
        %v2361 = vld [vmem:[#allocation15 + $0x34] sm:$0xf]
        %v2362 = vld [vmem:[#allocation15 + $0x38] sm:$0xf]
        %v2363 = vld [vmem:[#allocation15 + $0x3c] sm:$0xf]
        %v2364 = vld [vmem:[#allocation15 + $0x40] sm:$0xf]
        %v2365 = vld [vmem:[#allocation15 + $0x44] sm:$0xf]
        %v2366 = vld [vmem:[#allocation15 + $0x48] sm:$0xf]
        %v2367 = vld [vmem:[#allocation15 + $0x4c] sm:$0xf]
        %v2368 = vld [vmem:[#allocation15 + $0x50] sm:$0xf]
        %v2369 = vld [vmem:[#allocation15 + $0x54] sm:$0xf]
        %v2370 = vld [vmem:[#allocation15 + $0x58] sm:$0xf]
        %v2371 = vld [vmem:[#allocation15 + $0x5c] sm:$0xf]
        %v2372 = vld [vmem:[#allocation15 + $0x60] sm:$0xf]
        %v2373 = vld [vmem:[#allocation15 + $0x64] sm:$0xf]
        %v2374 = vld [vmem:[#allocation15 + $0x68] sm:$0xf]
        %v2375 = vld [vmem:[#allocation15 + $0x6c] sm:$0xf]
        %v2376 = vld [vmem:[#allocation15 + $0x70] sm:$0xf]
        %v2377 = vld [vmem:[#allocation15 + $0x74] sm:$0xf]
        %v2378 = vld [vmem:[#allocation15 + $0x78] sm:$0xf]
        %v2379 = vld [vmem:[#allocation15 + $0x7c] sm:$0xf]
        %v2380 = vld [vmem:[#allocation15 + $0x80] sm:$0xf]
        %v2381 = vld [vmem:[#allocation15 + $0x84] sm:$0xf]
        %v2382 = vld [vmem:[#allocation15 + $0x88] sm:$0xf]
        %v2383 = vld [vmem:[#allocation15 + $0x8c] sm:$0xf]
        %v2384 = vld [vmem:[#allocation15 + $0x90] sm:$0xf]
        %v2385 = vld [vmem:[#allocation15 + $0x94] sm:$0xf]
        %v2386 = vld [vmem:[#allocation15 + $0x98] sm:$0xf]
        %v2387 = vld [vmem:[#allocation15 + $0x9c] sm:$0xf]
        %v2388 = vld [vmem:[#allocation15 + $0xa0] sm:$0xf]
        %v2389 = vld [vmem:[#allocation15 + $0xa4] sm:$0xf]
        %v2390 = vld [vmem:[#allocation15 + $0xa8] sm:$0xf]
        %v2391 = vld [vmem:[#allocation15 + $0xac] sm:$0xf]
        %v2392 = vld [vmem:[#allocation15 + $0xb0] sm:$0xf]
        %v2393 = vld [vmem:[#allocation15 + $0xb4] sm:$0xf]
        %v2394 = vld [vmem:[#allocation15 + $0xb8] sm:$0xf]
        %v2395 = vld [vmem:[#allocation15 + $0xbc] sm:$0xf]
        %v2396 = vld [vmem:[#allocation15 + $0xc0] sm:$0xf]
        %v2397 = vld [vmem:[#allocation15 + $0xc4] sm:$0xf]
        %v2398 = vld [vmem:[#allocation15 + $0xc8] sm:$0xf]
        %v2399 = vld [vmem:[#allocation15 + $0xcc] sm:$0xf]
        %v2400 = vld [vmem:[#allocation15 + $0xd0] sm:$0xf]
        %v2401 = vld [vmem:[#allocation15 + $0xd4] sm:$0xf]
        %v2402 = vld [vmem:[#allocation15 + $0xd8] sm:$0xf]
        %v2403 = vld [vmem:[#allocation15 + $0xdc] sm:$0xf]
        %v2404 = vld [vmem:[#allocation15 + $0xe0] sm:$0xf]
        %v2405 = vld [vmem:[#allocation15 + $0xe4] sm:$0xf]
        %v2406 = vld [vmem:[#allocation15 + $0xe8] sm:$0xf]
        %v2407 = vld [vmem:[#allocation15 + $0xec] sm:$0xf]
        %v2408 = vld [vmem:[#allocation15 + $0xf0] sm:$0xf]
        %v2409 = vld [vmem:[#allocation15 + $0xf4] sm:$0xf]
        %v2410 = vld [vmem:[#allocation15 + $0xf8] sm:$0xf]
        %v2411 = vld [vmem:[#allocation15 + $0xfc] sm:$0xf]
        %v2412 = vld [vmem:[#allocation17] sm:$0x1]
        %v2414 = vlaneseq
        %v2415 = vshrl.u32 %v2414, 7
        %v2416 = vsub.s32 0, %v2415
        %v2417 = vrot.slane %v2412, %v2416
        %v2483 = vunpack.c.l.b16 %v2348
        %v2484 = vunpack.c.l.b16 %v2349
        %v2485 = vunpack.c.l.b16 %v2350
        %v2486 = vunpack.c.l.b16 %v2351
        %v2487 = vunpack.c.l.b16 %v2352
        %v2488 = vunpack.c.l.b16 %v2353
        %v2489 = vunpack.c.l.b16 %v2354
        %v2490 = vunpack.c.l.b16 %v2355
        %v2491 = vunpack.c.l.b16 %v2356
        %v2492 = vunpack.c.l.b16 %v2357
        %v2493 = vunpack.c.l.b16 %v2358
        %v2494 = vunpack.c.l.b16 %v2359
        %v2495 = vunpack.c.l.b16 %v2360
        %v2496 = vunpack.c.l.b16 %v2361
        %v2497 = vunpack.c.l.b16 %v2362
        %v2498 = vunpack.c.l.b16 %v2363
        %v2499 = vunpack.c.l.b16 %v2364
        %v2500 = vunpack.c.l.b16 %v2365
        %v2501 = vunpack.c.l.b16 %v2366
        %v2502 = vunpack.c.l.b16 %v2367
        %v2503 = vunpack.c.l.b16 %v2368
        %v2504 = vunpack.c.l.b16 %v2369
        %v2505 = vunpack.c.l.b16 %v2370
        %v2506 = vunpack.c.l.b16 %v2371
        %v2507 = vunpack.c.l.b16 %v2372
        %v2508 = vunpack.c.l.b16 %v2373
        %v2509 = vunpack.c.l.b16 %v2374
        %v2510 = vunpack.c.l.b16 %v2375
        %v2511 = vunpack.c.l.b16 %v2376
        %v2512 = vunpack.c.l.b16 %v2377
        %v2513 = vunpack.c.l.b16 %v2378
        %v2514 = vunpack.c.l.b16 %v2379
        %v2515 = vunpack.c.l.b16 %v2380
        %v2516 = vunpack.c.l.b16 %v2381
        %v2517 = vunpack.c.l.b16 %v2382
        %v2518 = vunpack.c.l.b16 %v2383
        %v2519 = vunpack.c.l.b16 %v2384
        %v2520 = vunpack.c.l.b16 %v2385
        %v2521 = vunpack.c.l.b16 %v2386
        %v2522 = vunpack.c.l.b16 %v2387
        %v2523 = vunpack.c.l.b16 %v2388
        %v2524 = vunpack.c.l.b16 %v2389
        %v2525 = vunpack.c.l.b16 %v2390
        %v2526 = vunpack.c.l.b16 %v2391
        %v2527 = vunpack.c.l.b16 %v2392
        %v2528 = vunpack.c.l.b16 %v2393
        %v2529 = vunpack.c.l.b16 %v2394
        %v2530 = vunpack.c.l.b16 %v2395
        %v2531 = vunpack.c.l.b16 %v2396
        %v2532 = vunpack.c.l.b16 %v2397
        %v2533 = vunpack.c.l.b16 %v2398
        %v2534 = vunpack.c.l.b16 %v2399
        %v2535 = vunpack.c.l.b16 %v2400
        %v2536 = vunpack.c.l.b16 %v2401
        %v2537 = vunpack.c.l.b16 %v2402
        %v2538 = vunpack.c.l.b16 %v2403
        %v2539 = vunpack.c.l.b16 %v2404
        %v2540 = vunpack.c.l.b16 %v2405
        %v2541 = vunpack.c.l.b16 %v2406
        %v2542 = vunpack.c.l.b16 %v2407
        %v2543 = vunpack.c.l.b16 %v2408
        %v2544 = vunpack.c.l.b16 %v2409
        %v2545 = vunpack.c.l.b16 %v2410
        %v2546 = vunpack.c.l.b16 %v2411
        %v2547 = vpack.c.b16 %v2484, %v2483
        %v2548 = vpack.c.b16 %v2486, %v2485
        %v2549 = vpack.c.b16 %v2488, %v2487
        %v2550 = vpack.c.b16 %v2490, %v2489
        %v2551 = vpack.c.b16 %v2492, %v2491
        %v2552 = vpack.c.b16 %v2494, %v2493
        %v2553 = vpack.c.b16 %v2496, %v2495
        %v2554 = vpack.c.b16 %v2498, %v2497
        %v2555 = vpack.c.b16 %v2500, %v2499
        %v2556 = vpack.c.b16 %v2502, %v2501
        %v2557 = vpack.c.b16 %v2504, %v2503
        %v2558 = vpack.c.b16 %v2506, %v2505
        %v2559 = vpack.c.b16 %v2508, %v2507
        %v2560 = vpack.c.b16 %v2510, %v2509
        %v2561 = vpack.c.b16 %v2512, %v2511
        %v2562 = vpack.c.b16 %v2514, %v2513
        %v2563 = vpack.c.b16 %v2516, %v2515
        %v2564 = vpack.c.b16 %v2518, %v2517
        %v2565 = vpack.c.b16 %v2520, %v2519
        %v2566 = vpack.c.b16 %v2522, %v2521
        %v2567 = vpack.c.b16 %v2524, %v2523
        %v2568 = vpack.c.b16 %v2526, %v2525
        %v2569 = vpack.c.b16 %v2528, %v2527
        %v2570 = vpack.c.b16 %v2530, %v2529
        %v2571 = vpack.c.b16 %v2532, %v2531
        %v2572 = vpack.c.b16 %v2534, %v2533
        %v2573 = vpack.c.b16 %v2536, %v2535
        %v2574 = vpack.c.b16 %v2538, %v2537
        %v2575 = vpack.c.b16 %v2540, %v2539
        %v2576 = vpack.c.b16 %v2542, %v2541
        %v2577 = vpack.c.b16 %v2544, %v2543
        %v2578 = vpack.c.b16 %v2546, %v2545
        %2611 = vmatprep.subr.bf16.mxu0 0
        %2612 = vmatpush1.bf16.msra.mxu0 %v2547
        %2613 = vmatprep.subr.bf16.mxu0 0
        %2614 = vmatpush1.bf16.msra.mxu0 %v2548
        %2615 = vmatprep.subr.bf16.mxu0 0
        %2616 = vmatpush1.bf16.msra.mxu0 %v2549
        %2617 = vmatprep.subr.bf16.mxu0 0
        %2618 = vmatpush1.bf16.msra.mxu0 %v2550
        %2619 = vmatprep.subr.bf16.mxu0 0
        %2620 = vmatpush1.bf16.msra.mxu0 %v2551
        %2621 = vmatprep.subr.bf16.mxu0 0
        %2622 = vmatpush1.bf16.msra.mxu0 %v2552
        %2623 = vmatprep.subr.bf16.mxu0 0
        %2624 = vmatpush1.bf16.msra.mxu0 %v2553
        %2625 = vmatprep.subr.bf16.mxu0 0
        %2626 = vmatpush1.bf16.msra.mxu0 %v2554
        %2627 = vmatprep.subr.bf16.mxu0 0
        %2628 = vmatpush1.bf16.msra.mxu0 %v2555
        %2629 = vmatprep.subr.bf16.mxu0 0
        %2630 = vmatpush1.bf16.msra.mxu0 %v2556
        %2631 = vmatprep.subr.bf16.mxu0 0
        %2632 = vmatpush1.bf16.msra.mxu0 %v2557
        %2633 = vmatprep.subr.bf16.mxu0 0
        %2634 = vmatpush1.bf16.msra.mxu0 %v2558
        %2635 = vmatprep.subr.bf16.mxu0 0
        %2636 = vmatpush1.bf16.msra.mxu0 %v2559
        %2637 = vmatprep.subr.bf16.mxu0 0
        %2638 = vmatpush1.bf16.msra.mxu0 %v2560
        %2639 = vmatprep.subr.bf16.mxu0 0
        %2640 = vmatpush1.bf16.msra.mxu0 %v2561
        %2641 = vmatprep.subr.bf16.mxu0 0
        %2642 = vmatpush1.bf16.msra.mxu0 %v2562
        %2643 = vmatprep.mubr.bf16.mxu0 %v2345
        %2644 = vmatmul.mubr.bf16.gmra.mrb[0].mxu0 %v2344
        %v2645 = vpop.f32.mrb[0].mxu0
        %v2646 = vadd.f32 %v2417, %v2645
        %v2647 = vpop.f32.mrb[0].mxu0
        %v2648 = vpop.f32.mrb[0].mxu0
        %v2649 = vadd.f32 %v2417, %v2648
        %v2650 = vpop.f32.mrb[0].mxu0
        %2651 = vdwg.mxu0
        %2652 = vmatprep.subr.bf16.mxu0 0
        %2653 = vmatpush1.bf16.msra.mxu0 %v2563
        %2654 = vmatprep.subr.bf16.mxu0 0
        %2655 = vmatpush1.bf16.msra.mxu0 %v2564
        %2656 = vmatprep.subr.bf16.mxu0 0
        %2657 = vmatpush1.bf16.msra.mxu0 %v2565
        %2658 = vmatprep.subr.bf16.mxu0 0
        %2659 = vmatpush1.bf16.msra.mxu0 %v2566
        %2660 = vmatprep.subr.bf16.mxu0 0
        %2661 = vmatpush1.bf16.msra.mxu0 %v2567
        %2662 = vmatprep.subr.bf16.mxu0 0
        %2663 = vmatpush1.bf16.msra.mxu0 %v2568
        %2664 = vmatprep.subr.bf16.mxu0 0
        %2665 = vmatpush1.bf16.msra.mxu0 %v2569
        %2666 = vmatprep.subr.bf16.mxu0 0
        %2667 = vmatpush1.bf16.msra.mxu0 %v2570
        %2668 = vmatprep.subr.bf16.mxu0 0
        %2669 = vmatpush1.bf16.msra.mxu0 %v2571
        %2670 = vmatprep.subr.bf16.mxu0 0
        %2671 = vmatpush1.bf16.msra.mxu0 %v2572
        %2672 = vmatprep.subr.bf16.mxu0 0
        %2673 = vmatpush1.bf16.msra.mxu0 %v2573
        %2674 = vmatprep.subr.bf16.mxu0 0
        %2675 = vmatpush1.bf16.msra.mxu0 %v2574
        %2676 = vmatprep.subr.bf16.mxu0 0
        %2677 = vmatpush1.bf16.msra.mxu0 %v2575
        %2678 = vmatprep.subr.bf16.mxu0 0
        %2679 = vmatpush1.bf16.msra.mxu0 %v2576
        %2680 = vmatprep.subr.bf16.mxu0 0
        %2681 = vmatpush1.bf16.msra.mxu0 %v2577
        %2682 = vmatprep.subr.bf16.mxu0 0
        %2683 = vmatpush1.bf16.msra.mxu0 %v2578
        %2684 = vmatprep.mubr.bf16.mxu0 %v2347
        %2685 = vmatmul.mubr.bf16.gmra.mrb[0].mxu0 %v2346
        %v2686 = vpop.f32.mrb[0].mxu0
        %v2687 = vadd.f32 %v2646, %v2686
        %v2688 = vpop.f32.mrb[0].mxu0
        %v2689 = vpop.f32.mrb[0].mxu0
        %v2690 = vadd.f32 %v2649, %v2689
        %v2691 = vpop.f32.mrb[0].mxu0
        %2692 = vdwg.mxu0
        %v2693 = vadd.f32 %v2033, %v2687
        %v2694 = vadd.f32 %v2034, %v2690
        %v2695 = vld [vmem:[%s12] sm:$0x1]
        %v2696 = vld [vmem:[%s13] sm:$0x1]
        %2697 = vadd.xlane.f32.xlu0 %v2693
        %v2698 = vpop.xlane.xlu0 %2697
        %2699 = vadd.xlane.f32.xlu0 %v2694
        %v2700 = vpop.xlane.xlu0 %2699
        %v2701 = vmul.f32 %v2698, %v2000
        %v2702 = vmul.f32 %v2700, %v2000
        %v2703 = vsub.f32 %v2693, %v2701
        %v2704 = vsub.f32 %v2694, %v2702
        %v2705 = vmul.f32 %v2703, %v2703
        %v2706 = vmul.f32 %v2704, %v2704
        %2707 = vadd.xlane.f32.xlu0 %v2705
        %v2708 = vpop.xlane.xlu0 %2707
        %2709 = vadd.xlane.f32.xlu0 %v2706
        %v2710 = vpop.xlane.xlu0 %2709
        %v2711 = vmul.f32 %v2708, %v2000
        %v2712 = vmul.f32 %v2710, %v2000
        %v2713 = vadd.f32 %v2711, 1e-05
        %v2714 = vadd.f32 %v2712, 1e-05
        %v2715 = vrsqrt.pop %v2713
        %v2716 = vrsqrt.pop %v2714
        %v2717 = vmul.f32 %v2703, %v2715
        %v2718 = vmul.f32 %v2704, %v2716
        %v2720 = vlaneseq
        %v2721 = vshrl.u32 %v2720, 7
        %v2722 = vsub.s32 0, %v2721
        %v2723 = vrot.slane %v2695, %v2722
        %v2725 = vmul.f32 %v2717, %v2723
        %v2726 = vmul.f32 %v2718, %v2723
        %v2728 = vlaneseq
        %v2729 = vshrl.u32 %v2728, 7
        %v2730 = vsub.s32 0, %v2729
        %v2731 = vrot.slane %v2696, %v2730
        %v2733 = vadd.f32 %v2725, %v2731
        %v2734 = vadd.f32 %v2726, %v2731
        %v2735 = vpack.c.bf16 %v2734, %v2733
        %s2736 = scalar_lea.vmem [#allocation9], 192
        %v2737 = vld [vmem:[%s2736] sm:$0xff]
        %v2738 = vld [vmem:[%s2736 + $0x8] sm:$0xf]
        %v2739 = vld [vmem:[%s2736 + $0xc] sm:$0xff]
        %v2740 = vld [vmem:[%s2736 + $0x14] sm:$0xf]
        %v2741 = vld [vmem:[%s2736 + $0x18] sm:$0xff]
        %v2742 = vld [vmem:[%s2736 + $0x20] sm:$0xf]
        %v2743 = vld [vmem:[%s2736 + $0x24] sm:$0xff]
        %v2744 = vld [vmem:[%s2736 + $0x2c] sm:$0xf]
        %v2745 = vld [vmem:[%s2736 + $0x30] sm:$0xff]
        %v2746 = vld [vmem:[%s2736 + $0x38] sm:$0xf]
        %v2747 = vld [vmem:[%s2736 + $0x3c] sm:$0xff]
        %v2748 = vld [vmem:[%s2736 + $0x44] sm:$0xf]
        %v2749 = vld [vmem:[%s2736 + $0x48] sm:$0xff]
        %v2750 = vld [vmem:[%s2736 + $0x50] sm:$0xf]
        %v2751 = vld [vmem:[%s2736 + $0x54] sm:$0xff]
        %v2752 = vld [vmem:[%s2736 + $0x5c] sm:$0xf]
        %v2753 = vld [vmem:[%s2736 + $0x60] sm:$0xff]
        %v2754 = vld [vmem:[%s2736 + $0x68] sm:$0xf]
        %v2755 = vld [vmem:[%s2736 + $0x6c] sm:$0xff]
        %v2756 = vld [vmem:[%s2736 + $0x74] sm:$0xf]
        %v2757 = vld [vmem:[%s2736 + $0x78] sm:$0xff]
        %v2758 = vld [vmem:[%s2736 + $0x80] sm:$0xf]
        %v2759 = vld [vmem:[%s2736 + $0x84] sm:$0xff]
        %v2760 = vld [vmem:[%s2736 + $0x8c] sm:$0xf]
        %v2761 = vld [vmem:[%s2736 + $0x90] sm:$0xff]
        %v2762 = vld [vmem:[%s2736 + $0x98] sm:$0xf]
        %v2763 = vld [vmem:[%s2736 + $0x9c] sm:$0xff]
        %v2764 = vld [vmem:[%s2736 + $0xa4] sm:$0xf]
        %v2765 = vld [vmem:[%s2736 + $0xa8] sm:$0xff]
        %v2766 = vld [vmem:[%s2736 + $0xb0] sm:$0xf]
        %v2767 = vld [vmem:[%s2736 + $0xb4] sm:$0xff]
        %v2768 = vld [vmem:[%s2736 + $0xbc] sm:$0xf]
        %v2801 = vunpack.c.l.b16 %v2737
        %v2802 = vunpack.c.h.b16 %v2737
        %v2803 = vunpack.c.l.b16 %v2738
        %v2804 = vunpack.c.l.b16 %v2739
        %v2805 = vunpack.c.h.b16 %v2739
        %v2806 = vunpack.c.l.b16 %v2740
        %v2807 = vunpack.c.l.b16 %v2741
        %v2808 = vunpack.c.h.b16 %v2741
        %v2809 = vunpack.c.l.b16 %v2742
        %v2810 = vunpack.c.l.b16 %v2743
        %v2811 = vunpack.c.h.b16 %v2743
        %v2812 = vunpack.c.l.b16 %v2744
        %v2813 = vunpack.c.l.b16 %v2745
        %v2814 = vunpack.c.h.b16 %v2745
        %v2815 = vunpack.c.l.b16 %v2746
        %v2816 = vunpack.c.l.b16 %v2747
        %v2817 = vunpack.c.h.b16 %v2747
        %v2818 = vunpack.c.l.b16 %v2748
        %v2819 = vunpack.c.l.b16 %v2749
        %v2820 = vunpack.c.h.b16 %v2749
        %v2821 = vunpack.c.l.b16 %v2750
        %v2822 = vunpack.c.l.b16 %v2751
        %v2823 = vunpack.c.h.b16 %v2751
        %v2824 = vunpack.c.l.b16 %v2752
        %v2825 = vunpack.c.l.b16 %v2753
        %v2826 = vunpack.c.h.b16 %v2753
        %v2827 = vunpack.c.l.b16 %v2754
        %v2828 = vunpack.c.l.b16 %v2755
        %v2829 = vunpack.c.h.b16 %v2755
        %v2830 = vunpack.c.l.b16 %v2756
        %v2831 = vunpack.c.l.b16 %v2757
        %v2832 = vunpack.c.h.b16 %v2757
        %v2833 = vunpack.c.l.b16 %v2758
        %v2834 = vunpack.c.l.b16 %v2759
        %v2835 = vunpack.c.h.b16 %v2759
        %v2836 = vunpack.c.l.b16 %v2760
        %v2837 = vunpack.c.l.b16 %v2761
        %v2838 = vunpack.c.h.b16 %v2761
        %v2839 = vunpack.c.l.b16 %v2762
        %v2840 = vunpack.c.l.b16 %v2763
        %v2841 = vunpack.c.h.b16 %v2763
        %v2842 = vunpack.c.l.b16 %v2764
        %v2843 = vunpack.c.l.b16 %v2765
        %v2844 = vunpack.c.h.b16 %v2765
        %v2845 = vunpack.c.l.b16 %v2766
        %v2846 = vunpack.c.l.b16 %v2767
        %v2847 = vunpack.c.h.b16 %v2767
        %v2848 = vunpack.c.l.b16 %v2768
        %v2849 = vpack.c.b16 %v2804, %v2801
        %v2850 = vpack.c.b16 %v2805, %v2802
        %v2851 = vpack.c.b16 %v2806, %v2803
        %v2852 = vpack.c.b16 %v2810, %v2807
        %v2853 = vpack.c.b16 %v2811, %v2808
        %v2854 = vpack.c.b16 %v2812, %v2809
        %v2855 = vpack.c.b16 %v2816, %v2813
        %v2856 = vpack.c.b16 %v2817, %v2814
        %v2857 = vpack.c.b16 %v2818, %v2815
        %v2858 = vpack.c.b16 %v2822, %v2819
        %v2859 = vpack.c.b16 %v2823, %v2820
        %v2860 = vpack.c.b16 %v2824, %v2821
        %v2861 = vpack.c.b16 %v2828, %v2825
        %v2862 = vpack.c.b16 %v2829, %v2826
        %v2863 = vpack.c.b16 %v2830, %v2827
        %v2864 = vpack.c.b16 %v2834, %v2831
        %v2865 = vpack.c.b16 %v2835, %v2832
        %v2866 = vpack.c.b16 %v2836, %v2833
        %v2867 = vpack.c.b16 %v2840, %v2837
        %v2868 = vpack.c.b16 %v2841, %v2838
        %v2869 = vpack.c.b16 %v2842, %v2839
        %v2870 = vpack.c.b16 %v2846, %v2843
        %v2871 = vpack.c.b16 %v2847, %v2844
        %v2872 = vpack.c.b16 %v2848, %v2845
        %2897 = vmatprep.subr.bf16.mxu0 %v2850
        %2898 = vmatpush1.bf16.msra.mxu0 %v2849
        %2899 = vmatprep.subr.bf16.mxu0 %v2853
        %2900 = vmatpush1.bf16.msra.mxu0 %v2852
        %2901 = vmatprep.subr.bf16.mxu0 %v2856
        %2902 = vmatpush1.bf16.msra.mxu0 %v2855
        %2903 = vmatprep.subr.bf16.mxu0 %v2859
        %2904 = vmatpush1.bf16.msra.mxu0 %v2858
        %2905 = vmatprep.subr.bf16.mxu0 %v2862
        %2906 = vmatpush1.bf16.msra.mxu0 %v2861
        %2907 = vmatprep.subr.bf16.mxu0 %v2865
        %2908 = vmatpush1.bf16.msra.mxu0 %v2864
        %2909 = vmatprep.subr.bf16.mxu0 %v2868
        %2910 = vmatpush1.bf16.msra.mxu0 %v2867
        %2911 = vmatprep.subr.bf16.mxu0 %v2871
        %2912 = vmatpush1.bf16.msra.mxu0 %v2870
        %2913 = vmatprep.subr.bf16.mxu0 0
        %2914 = vmatpush1.bf16.msra.mxu0 0
        %2915 = vmatprep.subr.bf16.mxu0 0
        %2916 = vmatpush1.bf16.msra.mxu0 0
        %2917 = vmatprep.subr.bf16.mxu0 0
        %2918 = vmatpush1.bf16.msra.mxu0 0
        %2919 = vmatprep.subr.bf16.mxu0 0
        %2920 = vmatpush1.bf16.msra.mxu0 0
        %2921 = vmatprep.subr.bf16.mxu0 0
        %2922 = vmatpush1.bf16.msra.mxu0 0
        %2923 = vmatprep.subr.bf16.mxu0 0
        %2924 = vmatpush1.bf16.msra.mxu0 0
        %2925 = vmatprep.subr.bf16.mxu0 0
        %2926 = vmatpush1.bf16.msra.mxu0 0
        %2927 = vmatprep.subr.bf16.mxu0 0
        %2928 = vmatpush1.bf16.msra.mxu0 0
        %2929 = vmatprep.mubr.bf16.mxu0 0
        %2930 = vmatmul.mubr.bf16.gmra.mrb[0].mxu0 %v2735
        %v2931 = vpop.f32.mrb[0].mxu0
        %v2932 = vadd.f32 0.0, %v2931
        %v2933 = vpop.f32.mrb[0].mxu0
        %v2934 = vadd.f32 0.0, %v2933
        %v2935 = vpop.f32.mrb[0].mxu0
        %v2936 = vadd.f32 0.0, %v2935
        %v2937 = vpop.f32.mrb[0].mxu0
        %v2938 = vadd.f32 0.0, %v2937
        %2939 = vdwg.mxu0
        %2940 = vmatprep.subr.bf16.mxu0 0
        %2941 = vmatpush1.bf16.msra.mxu0 %v2851
        %2942 = vmatprep.subr.bf16.mxu0 0
        %2943 = vmatpush1.bf16.msra.mxu0 %v2854
        %2944 = vmatprep.subr.bf16.mxu0 0
        %2945 = vmatpush1.bf16.msra.mxu0 %v2857
        %2946 = vmatprep.subr.bf16.mxu0 0
        %2947 = vmatpush1.bf16.msra.mxu0 %v2860
        %2948 = vmatprep.subr.bf16.mxu0 0
        %2949 = vmatpush1.bf16.msra.mxu0 %v2863
        %2950 = vmatprep.subr.bf16.mxu0 0
        %2951 = vmatpush1.bf16.msra.mxu0 %v2866
        %2952 = vmatprep.subr.bf16.mxu0 0
        %2953 = vmatpush1.bf16.msra.mxu0 %v2869
        %2954 = vmatprep.subr.bf16.mxu0 0
        %2955 = vmatpush1.bf16.msra.mxu0 %v2872
        %2956 = vmatprep.subr.bf16.mxu0 0
        %2957 = vmatpush1.bf16.msra.mxu0 0
        %2958 = vmatprep.subr.bf16.mxu0 0
        %2959 = vmatpush1.bf16.msra.mxu0 0
        %2960 = vmatprep.subr.bf16.mxu0 0
        %2961 = vmatpush1.bf16.msra.mxu0 0
        %2962 = vmatprep.subr.bf16.mxu0 0
        %2963 = vmatpush1.bf16.msra.mxu0 0
        %2964 = vmatprep.subr.bf16.mxu0 0
        %2965 = vmatpush1.bf16.msra.mxu0 0
        %2966 = vmatprep.subr.bf16.mxu0 0
        %2967 = vmatpush1.bf16.msra.mxu0 0
        %2968 = vmatprep.subr.bf16.mxu0 0
        %2969 = vmatpush1.bf16.msra.mxu0 0
        %2970 = vmatprep.subr.bf16.mxu0 0
        %2971 = vmatpush1.bf16.msra.mxu0 0
        %2972 = vmatprep.mubr.bf16.mxu0 0
        %2973 = vmatmul.mubr.bf16.gmra.mrb[0].mxu0 %v2735
        %v2974 = vpop.f32.mrb[0].mxu0
        %v2975 = vadd.f32 0.0, %v2974
        %v2976 = vpop.f32.mrb[0].mxu0
        %v2977 = vpop.f32.mrb[0].mxu0
        %v2978 = vadd.f32 0.0, %v2977
        %v2979 = vpop.f32.mrb[0].mxu0
        %2980 = vdwg.mxu0
        %v2982 = vsel %vm1032, %v2932, 0
        %v2985 = vsel %vm1032, %v2936, 0
        %v2988 = vsel %vm1032, %v2934, 0
        %v2991 = vsel %vm1032, %v2938, 0
        %2993 = vmatprep.subr.mxu0 0.0
        %2994 = vmatpush1.xpose.msra.mxu0 %v2988
        %2995 = vmatprep.subr.mxu0 0.0
        %2996 = vmatpush1.xpose.msra.mxu0 %v2991
        %2997 = vmatprep.subr.mxu0 0.0
        %2998 = vmatpush1.xpose.msra.mxu0 0.0
        %2999 = vmatprep.subr.mxu0 0.0
        %3000 = vmatpush1.xpose.msra.mxu0 0.0
        %3001 = vmatprep.subr.mxu0 0.0
        %3002 = vmatpush1.xpose.msra.mxu0 0.0
        %3003 = vmatprep.subr.mxu0 0.0
        %3004 = vmatpush1.xpose.msra.mxu0 0.0
        %3005 = vmatprep.subr.mxu0 0.0
        %3006 = vmatpush1.xpose.msra.mxu0 0.0
        %3007 = vmatprep.subr.mxu0 0.0
        %3008 = vmatpush1.xpose.msra.mxu0 0.0
        %3009 = vmatprep.subr.mxu0 0.0
        %3010 = vmatpush1.xpose.msra.mxu0 0.0
        %3011 = vmatprep.subr.mxu0 0.0
        %3012 = vmatpush1.xpose.msra.mxu0 0.0
        %3013 = vmatprep.subr.mxu0 0.0
        %3014 = vmatpush1.xpose.msra.mxu0 0.0
        %3015 = vmatprep.subr.mxu0 0.0
        %3016 = vmatpush1.xpose.msra.mxu0 0.0
        %3017 = vmatprep.subr.mxu0 0.0
        %3018 = vmatpush1.xpose.msra.mxu0 0.0
        %3019 = vmatprep.subr.mxu0 0.0
        %3020 = vmatpush1.xpose.msra.mxu0 0.0
        %3021 = vmatprep.subr.mxu0 0.0
        %3022 = vmatpush1.xpose.msra.mxu0 0.0
        %3023 = vmatprep.subr.mxu0 0.0
        %3024 = vmatpush1.xpose.msra.mxu0 0.0
        %3025 = vmatprep.subr.mxu0 0.0
        %3026 = vmatpush1.xpose.msra.mxu0 0.0
        %3027 = vmatprep.subr.mxu0 0.0
        %3028 = vmatpush1.xpose.msra.mxu0 0.0
        %3029 = vmatprep.subr.mxu0 0.0
        %3030 = vmatpush1.xpose.msra.mxu0 0.0
        %3031 = vmatprep.subr.mxu0 0.0
        %3032 = vmatpush1.xpose.msra.mxu0 0.0
        %3033 = vmatprep.subr.mxu0 0.0
        %3034 = vmatpush1.xpose.msra.mxu0 0.0
        %3035 = vmatprep.subr.mxu0 0.0
        %3036 = vmatpush1.xpose.msra.mxu0 0.0
        %3037 = vmatprep.subr.mxu0 0.0
        %3038 = vmatpush1.xpose.msra.mxu0 0.0
        %3039 = vmatprep.subr.mxu0 0.0
        %3040 = vmatpush1.xpose.msra.mxu0 0.0
        %3041 = vmatprep.subr.mxu0 0.0
        %3042 = vmatpush1.xpose.msra.mxu0 0.0
        %3043 = vmatprep.subr.mxu0 0.0
        %3044 = vmatpush1.xpose.msra.mxu0 0.0
        %3045 = vmatprep.subr.mxu0 0.0
        %3046 = vmatpush1.xpose.msra.mxu0 0.0
        %3047 = vmatprep.subr.mxu0 0.0
        %3048 = vmatpush1.xpose.msra.mxu0 0.0
        %3049 = vmatprep.subr.mxu0 0.0
        %3050 = vmatpush1.xpose.msra.mxu0 0.0
        %3051 = vmatprep.subr.mxu0 0.0
        %3052 = vmatpush1.xpose.msra.mxu0 0.0
        %3053 = vmatprep.subr.mxu0 0.0
        %3054 = vmatpush1.xpose.msra.mxu0 0.0
        %3055 = vmatprep.subr.mxu0 0.0
        %3056 = vmatpush1.xpose.msra.mxu0 0.0
        %3057 = vmatprep.mubr.f32.mxu0 0.0
        %3058 = vmatmul.mubr.f32.gmra.mrb[0].mxu0 %v2982
        %v3059 = vpop.f32.mrb[0].mxu0
        %v3060 = vadd.f32 0.0, %v3059
        %v3061 = vpop.f32.mrb[0].mxu0
        %3062 = vmatprep.mubr.f32.mxu0 0.0
        %3063 = vmatmul.mubr.f32.gmra.mrb[0].mxu0 %v2985
        %v3064 = vpop.f32.mrb[0].mxu0
        %v3065 = vadd.f32 0.0, %v3064
        %v3066 = vpop.f32.mrb[0].mxu0
        %3067 = vdwg.mxu0
        %v3068 = vmul.f32 %v3060, 0.17677669
        %v3069 = vmul.f32 %v3065, 0.17677669
        %v3070 = vadd.f32 %v3068, %v785
        %v3071 = vadd.f32 %v3069, %v786
        %v3072 = vsel %vm1124, %v3070, -inf
        %3073 = vmax.xlane.f32.xlu0 %v3072
        %v3074 = vpop.xlane.xlu0 %3073
        %v3075 = vsel %vm1124, %v3071, -inf
        %3076 = vmax.xlane.f32.xlu0 %v3075
        %v3077 = vpop.xlane.xlu0 %3076
        %v3078 = vsub.f32 %v3070, %v3074
        %v3079 = vsub.f32 %v3071, %v3077
        %v3080 = vmul.f32 %v3078, 1.442695
        %v3081 = vpow.pop %v3080
        %v3082 = vmul.f32 %v3079, 1.442695
        %v3083 = vpow.pop %v3082
        %v3084 = vsel %vm1124, %v3081, 0.0
        %3085 = vadd.xlane.f32.xlu0 %v3084
        %v3086 = vpop.xlane.xlu0 %3085
        %v3087 = vsel %vm1124, %v3083, 0.0
        %3088 = vadd.xlane.f32.xlu0 %v3087
        %v3089 = vpop.xlane.xlu0 %3088
        %v3090 = vrcp.pop %v3086
        %v3091 = vrcp.pop %v3089
        %v3092 = vmul.f32 %v3081, %v3090
        %v3093 = vmul.f32 %v3083, %v3091
        %v3095 = vsel %vm1124, %v3092, 0
        %v3098 = vsel %vm1124, %v3093, 0
        %3100 = vmatprep.subr.mxu0 0.0
        %3101 = vmatpush1.msra.mxu0 %v2975
        %3102 = vmatprep.subr.mxu0 0.0
        %3103 = vmatpush1.msra.mxu0 %v2978
        %3104 = vmatprep.subr.mxu0 0.0
        %3105 = vmatpush1.msra.mxu0 0.0
        %3106 = vmatprep.subr.mxu0 0.0
        %3107 = vmatpush1.msra.mxu0 0.0
        %3108 = vmatprep.subr.mxu0 0.0
        %3109 = vmatpush1.msra.mxu0 0.0
        %3110 = vmatprep.subr.mxu0 0.0
        %3111 = vmatpush1.msra.mxu0 0.0
        %3112 = vmatprep.subr.mxu0 0.0
        %3113 = vmatpush1.msra.mxu0 0.0
        %3114 = vmatprep.subr.mxu0 0.0
        %3115 = vmatpush1.msra.mxu0 0.0
        %3116 = vmatprep.subr.mxu0 0.0
        %3117 = vmatpush1.msra.mxu0 0.0
        %3118 = vmatprep.subr.mxu0 0.0
        %3119 = vmatpush1.msra.mxu0 0.0
        %3120 = vmatprep.subr.mxu0 0.0
        %3121 = vmatpush1.msra.mxu0 0.0
        %3122 = vmatprep.subr.mxu0 0.0
        %3123 = vmatpush1.msra.mxu0 0.0
        %3124 = vmatprep.subr.mxu0 0.0
        %3125 = vmatpush1.msra.mxu0 0.0
        %3126 = vmatprep.subr.mxu0 0.0
        %3127 = vmatpush1.msra.mxu0 0.0
        %3128 = vmatprep.subr.mxu0 0.0
        %3129 = vmatpush1.msra.mxu0 0.0
        %3130 = vmatprep.subr.mxu0 0.0
        %3131 = vmatpush1.msra.mxu0 0.0
        %3132 = vmatprep.subr.mxu0 0.0
        %3133 = vmatpush1.msra.mxu0 0.0
        %3134 = vmatprep.subr.mxu0 0.0
        %3135 = vmatpush1.msra.mxu0 0.0
        %3136 = vmatprep.subr.mxu0 0.0
        %3137 = vmatpush1.msra.mxu0 0.0
        %3138 = vmatprep.subr.mxu0 0.0
        %3139 = vmatpush1.msra.mxu0 0.0
        %3140 = vmatprep.subr.mxu0 0.0
        %3141 = vmatpush1.msra.mxu0 0.0
        %3142 = vmatprep.subr.mxu0 0.0
        %3143 = vmatpush1.msra.mxu0 0.0
        %3144 = vmatprep.subr.mxu0 0.0
        %3145 = vmatpush1.msra.mxu0 0.0
        %3146 = vmatprep.subr.mxu0 0.0
        %3147 = vmatpush1.msra.mxu0 0.0
        %3148 = vmatprep.subr.mxu0 0.0
        %3149 = vmatpush1.msra.mxu0 0.0
        %3150 = vmatprep.subr.mxu0 0.0
        %3151 = vmatpush1.msra.mxu0 0.0
        %3152 = vmatprep.subr.mxu0 0.0
        %3153 = vmatpush1.msra.mxu0 0.0
        %3154 = vmatprep.subr.mxu0 0.0
        %3155 = vmatpush1.msra.mxu0 0.0
        %3156 = vmatprep.subr.mxu0 0.0
        %3157 = vmatpush1.msra.mxu0 0.0
        %3158 = vmatprep.subr.mxu0 0.0
        %3159 = vmatpush1.msra.mxu0 0.0
        %3160 = vmatprep.subr.mxu0 0.0
        %3161 = vmatpush1.msra.mxu0 0.0
        %3162 = vmatprep.subr.mxu0 0.0
        %3163 = vmatpush1.msra.mxu0 0.0
        %3164 = vmatprep.mubr.f32.mxu0 0.0
        %3165 = vmatmul.mubr.f32.gmra.mrb[0].mxu0 %v3095
        %v3166 = vpop.f32.mrb[0].mxu0
        %v3167 = vadd.f32 0.0, %v3166
        %v3168 = vpop.f32.mrb[0].mxu0
        %3169 = vmatprep.mubr.f32.mxu0 0.0
        %3170 = vmatmul.mubr.f32.gmra.mrb[0].mxu0 %v3098
        %v3171 = vpop.f32.mrb[0].mxu0
        %v3172 = vadd.f32 0.0, %v3171
        %v3173 = vpop.f32.mrb[0].mxu0
        %3174 = vdwg.mxu0
        %3175 = vst.msk [vmem:[#allocation3] sm:$0xff] %vm1032, %v3167
        %3176 = vst.msk [vmem:[#allocation3 + $0x8] sm:$0xff] %vm1032, %v3172
        %3177 = vrot.lane.b32.xlu0 %v2932, 96
        %v3178 = vpop.permute.xlu0 %3177
        %3179 = vrot.lane.b32.xlu0 %v2936, 96
        %v3180 = vpop.permute.xlu0 %3179
        %3181 = vrot.lane.b32.xlu0 %v2934, 96
        %v3182 = vpop.permute.xlu0 %3181
        %3183 = vrot.lane.b32.xlu0 %v2938, 96
        %v3184 = vpop.permute.xlu0 %3183
        %v3185 = vsel %vm1032, %v3178, 0
        %v3187 = vsel %vm1032, %v3180, 0
        %v3189 = vsel %vm1032, %v3182, 0
        %v3191 = vsel %vm1032, %v3184, 0
        %3193 = vmatprep.subr.mxu0 0.0
        %3194 = vmatpush1.xpose.msra.mxu0 %v3189
        %3195 = vmatprep.subr.mxu0 0.0
        %3196 = vmatpush1.xpose.msra.mxu0 %v3191
        %3197 = vmatprep.subr.mxu0 0.0
        %3198 = vmatpush1.xpose.msra.mxu0 0.0
        %3199 = vmatprep.subr.mxu0 0.0
        %3200 = vmatpush1.xpose.msra.mxu0 0.0
        %3201 = vmatprep.subr.mxu0 0.0
        %3202 = vmatpush1.xpose.msra.mxu0 0.0
        %3203 = vmatprep.subr.mxu0 0.0
        %3204 = vmatpush1.xpose.msra.mxu0 0.0
        %3205 = vmatprep.subr.mxu0 0.0
        %3206 = vmatpush1.xpose.msra.mxu0 0.0
        %3207 = vmatprep.subr.mxu0 0.0
        %3208 = vmatpush1.xpose.msra.mxu0 0.0
        %3209 = vmatprep.subr.mxu0 0.0
        %3210 = vmatpush1.xpose.msra.mxu0 0.0
        %3211 = vmatprep.subr.mxu0 0.0
        %3212 = vmatpush1.xpose.msra.mxu0 0.0
        %3213 = vmatprep.subr.mxu0 0.0
        %3214 = vmatpush1.xpose.msra.mxu0 0.0
        %3215 = vmatprep.subr.mxu0 0.0
        %3216 = vmatpush1.xpose.msra.mxu0 0.0
        %3217 = vmatprep.subr.mxu0 0.0
        %3218 = vmatpush1.xpose.msra.mxu0 0.0
        %3219 = vmatprep.subr.mxu0 0.0
        %3220 = vmatpush1.xpose.msra.mxu0 0.0
        %3221 = vmatprep.subr.mxu0 0.0
        %3222 = vmatpush1.xpose.msra.mxu0 0.0
        %3223 = vmatprep.subr.mxu0 0.0
        %3224 = vmatpush1.xpose.msra.mxu0 0.0
        %3225 = vmatprep.subr.mxu0 0.0
        %3226 = vmatpush1.xpose.msra.mxu0 0.0
        %3227 = vmatprep.subr.mxu0 0.0
        %3228 = vmatpush1.xpose.msra.mxu0 0.0
        %3229 = vmatprep.subr.mxu0 0.0
        %3230 = vmatpush1.xpose.msra.mxu0 0.0
        %3231 = vmatprep.subr.mxu0 0.0
        %3232 = vmatpush1.xpose.msra.mxu0 0.0
        %3233 = vmatprep.subr.mxu0 0.0
        %3234 = vmatpush1.xpose.msra.mxu0 0.0
        %3235 = vmatprep.subr.mxu0 0.0
        %3236 = vmatpush1.xpose.msra.mxu0 0.0
        %3237 = vmatprep.subr.mxu0 0.0
        %3238 = vmatpush1.xpose.msra.mxu0 0.0
        %3239 = vmatprep.subr.mxu0 0.0
        %3240 = vmatpush1.xpose.msra.mxu0 0.0
        %3241 = vmatprep.subr.mxu0 0.0
        %3242 = vmatpush1.xpose.msra.mxu0 0.0
        %3243 = vmatprep.subr.mxu0 0.0
        %3244 = vmatpush1.xpose.msra.mxu0 0.0
        %3245 = vmatprep.subr.mxu0 0.0
        %3246 = vmatpush1.xpose.msra.mxu0 0.0
        %3247 = vmatprep.subr.mxu0 0.0
        %3248 = vmatpush1.xpose.msra.mxu0 0.0
        %3249 = vmatprep.subr.mxu0 0.0
        %3250 = vmatpush1.xpose.msra.mxu0 0.0
        %3251 = vmatprep.subr.mxu0 0.0
        %3252 = vmatpush1.xpose.msra.mxu0 0.0
        %3253 = vmatprep.subr.mxu0 0.0
        %3254 = vmatpush1.xpose.msra.mxu0 0.0
        %3255 = vmatprep.subr.mxu0 0.0
        %3256 = vmatpush1.xpose.msra.mxu0 0.0
        %3257 = vmatprep.mubr.f32.mxu0 0.0
        %3258 = vmatmul.mubr.f32.gmra.mrb[0].mxu0 %v3185
        %v3259 = vpop.f32.mrb[0].mxu0
        %v3260 = vadd.f32 0.0, %v3259
        %v3261 = vpop.f32.mrb[0].mxu0
        %3262 = vmatprep.mubr.f32.mxu0 0.0
        %3263 = vmatmul.mubr.f32.gmra.mrb[0].mxu0 %v3187
        %v3264 = vpop.f32.mrb[0].mxu0
        %v3265 = vadd.f32 0.0, %v3264
        %v3266 = vpop.f32.mrb[0].mxu0
        %3267 = vdwg.mxu0
        %v3268 = vmul.f32 %v3260, 0.17677669
        %v3269 = vmul.f32 %v3265, 0.17677669
        %v3270 = vadd.f32 %v3268, %v785
        %v3271 = vadd.f32 %v3269, %v786
        %v3272 = vsel %vm1124, %v3270, -inf
        %3273 = vmax.xlane.f32.xlu0 %v3272
        %v3274 = vpop.xlane.xlu0 %3273
        %v3275 = vsel %vm1124, %v3271, -inf
        %3276 = vmax.xlane.f32.xlu0 %v3275
        %v3277 = vpop.xlane.xlu0 %3276
        %v3278 = vsub.f32 %v3270, %v3274
        %v3279 = vsub.f32 %v3271, %v3277
        %v3280 = vmul.f32 %v3278, 1.442695
        %v3281 = vpow.pop %v3280
        %v3282 = vmul.f32 %v3279, 1.442695
        %v3283 = vpow.pop %v3282
        %v3284 = vsel %vm1124, %v3281, 0.0
        %3285 = vadd.xlane.f32.xlu0 %v3284
        %v3286 = vpop.xlane.xlu0 %3285
        %v3287 = vsel %vm1124, %v3283, 0.0
        %3288 = vadd.xlane.f32.xlu0 %v3287
        %v3289 = vpop.xlane.xlu0 %3288
        %v3290 = vrcp.pop %v3286
        %v3291 = vrcp.pop %v3289
        %v3292 = vmul.f32 %v3281, %v3290
        %v3293 = vmul.f32 %v3283, %v3291
        %3296 = vrot.lane.b32.xlu0 %v2975, 96
        %v3297 = vpop.permute.xlu0 %3296
        %3298 = vrot.lane.b32.xlu0 %v2978, 96
        %v3299 = vpop.permute.xlu0 %3298
        %v3303 = vsel %vm1124, %v3292, 0
        %v3306 = vsel %vm1124, %v3293, 0
        %3308 = vmatprep.subr.mxu0 0.0
        %3309 = vmatpush1.msra.mxu0 %v3297
        %3310 = vmatprep.subr.mxu0 0.0
        %3311 = vmatpush1.msra.mxu0 %v3299
        %3312 = vmatprep.subr.mxu0 0.0
        %3313 = vmatpush1.msra.mxu0 0.0
        %3314 = vmatprep.subr.mxu0 0.0
        %3315 = vmatpush1.msra.mxu0 0.0
        %3316 = vmatprep.subr.mxu0 0.0
        %3317 = vmatpush1.msra.mxu0 0.0
        %3318 = vmatprep.subr.mxu0 0.0
        %3319 = vmatpush1.msra.mxu0 0.0
        %3320 = vmatprep.subr.mxu0 0.0
        %3321 = vmatpush1.msra.mxu0 0.0
        %3322 = vmatprep.subr.mxu0 0.0
        %3323 = vmatpush1.msra.mxu0 0.0
        %3324 = vmatprep.subr.mxu0 0.0
        %3325 = vmatpush1.msra.mxu0 0.0
        %3326 = vmatprep.subr.mxu0 0.0
        %3327 = vmatpush1.msra.mxu0 0.0
        %3328 = vmatprep.subr.mxu0 0.0
        %3329 = vmatpush1.msra.mxu0 0.0
        %3330 = vmatprep.subr.mxu0 0.0
        %3331 = vmatpush1.msra.mxu0 0.0
        %3332 = vmatprep.subr.mxu0 0.0
        %3333 = vmatpush1.msra.mxu0 0.0
        %3334 = vmatprep.subr.mxu0 0.0
        %3335 = vmatpush1.msra.mxu0 0.0
        %3336 = vmatprep.subr.mxu0 0.0
        %3337 = vmatpush1.msra.mxu0 0.0
        %3338 = vmatprep.subr.mxu0 0.0
        %3339 = vmatpush1.msra.mxu0 0.0
        %3340 = vmatprep.subr.mxu0 0.0
        %3341 = vmatpush1.msra.mxu0 0.0
        %3342 = vmatprep.subr.mxu0 0.0
        %3343 = vmatpush1.msra.mxu0 0.0
        %3344 = vmatprep.subr.mxu0 0.0
        %3345 = vmatpush1.msra.mxu0 0.0
        %3346 = vmatprep.subr.mxu0 0.0
        %3347 = vmatpush1.msra.mxu0 0.0
        %3348 = vmatprep.subr.mxu0 0.0
        %3349 = vmatpush1.msra.mxu0 0.0
        %3350 = vmatprep.subr.mxu0 0.0
        %3351 = vmatpush1.msra.mxu0 0.0
        %3352 = vmatprep.subr.mxu0 0.0
        %3353 = vmatpush1.msra.mxu0 0.0
        %3354 = vmatprep.subr.mxu0 0.0
        %3355 = vmatpush1.msra.mxu0 0.0
        %3356 = vmatprep.subr.mxu0 0.0
        %3357 = vmatpush1.msra.mxu0 0.0
        %3358 = vmatprep.subr.mxu0 0.0
        %3359 = vmatpush1.msra.mxu0 0.0
        %3360 = vmatprep.subr.mxu0 0.0
        %3361 = vmatpush1.msra.mxu0 0.0
        %3362 = vmatprep.subr.mxu0 0.0
        %3363 = vmatpush1.msra.mxu0 0.0
        %3364 = vmatprep.subr.mxu0 0.0
        %3365 = vmatpush1.msra.mxu0 0.0
        %3366 = vmatprep.subr.mxu0 0.0
        %3367 = vmatpush1.msra.mxu0 0.0
        %3368 = vmatprep.subr.mxu0 0.0
        %3369 = vmatpush1.msra.mxu0 0.0
        %3370 = vmatprep.subr.mxu0 0.0
        %3371 = vmatpush1.msra.mxu0 0.0
        %3372 = vmatprep.mubr.f32.mxu0 0.0
        %3373 = vmatmul.mubr.f32.gmra.mrb[0].mxu0 %v3303
        %v3374 = vpop.f32.mrb[0].mxu0
        %v3375 = vadd.f32 0.0, %v3374
        %v3376 = vpop.f32.mrb[0].mxu0
        %3377 = vmatprep.mubr.f32.mxu0 0.0
        %3378 = vmatmul.mubr.f32.gmra.mrb[0].mxu0 %v3306
        %v3379 = vpop.f32.mrb[0].mxu0
        %v3380 = vadd.f32 0.0, %v3379
        %v3381 = vpop.f32.mrb[0].mxu0
        %3382 = vdwg.mxu0
        %3385 = vrot.lane.b32.xlu0 %v3375, 32
        %v3386 = vpop.permute.xlu0 %3385
        %3387 = vrot.lane.b32.xlu0 %v3380, 32
        %v3388 = vpop.permute.xlu0 %3387
        %3391 = vst.msk [vmem:[#allocation3] sm:$0xff] %vm1444, %v3386
        %3392 = vst.msk [vmem:[#allocation3 + $0x8] sm:$0xff] %vm1444, %v3388
        %3393 = vrot.lane.b32.xlu0 %v2932, 64
        %v3394 = vpop.permute.xlu0 %3393
        %3395 = vrot.lane.b32.xlu0 %v2936, 64
        %v3396 = vpop.permute.xlu0 %3395
        %3397 = vrot.lane.b32.xlu0 %v2934, 64
        %v3398 = vpop.permute.xlu0 %3397
        %3399 = vrot.lane.b32.xlu0 %v2938, 64
        %v3400 = vpop.permute.xlu0 %3399
        %v3401 = vsel %vm1032, %v3394, 0
        %v3403 = vsel %vm1032, %v3396, 0
        %v3405 = vsel %vm1032, %v3398, 0
        %v3407 = vsel %vm1032, %v3400, 0
        %3409 = vmatprep.subr.mxu0 0.0
        %3410 = vmatpush1.xpose.msra.mxu0 %v3405
        %3411 = vmatprep.subr.mxu0 0.0
        %3412 = vmatpush1.xpose.msra.mxu0 %v3407
        %3413 = vmatprep.subr.mxu0 0.0
        %3414 = vmatpush1.xpose.msra.mxu0 0.0
        %3415 = vmatprep.subr.mxu0 0.0
        %3416 = vmatpush1.xpose.msra.mxu0 0.0
        %3417 = vmatprep.subr.mxu0 0.0
        %3418 = vmatpush1.xpose.msra.mxu0 0.0
        %3419 = vmatprep.subr.mxu0 0.0
        %3420 = vmatpush1.xpose.msra.mxu0 0.0
        %3421 = vmatprep.subr.mxu0 0.0
        %3422 = vmatpush1.xpose.msra.mxu0 0.0
        %3423 = vmatprep.subr.mxu0 0.0
        %3424 = vmatpush1.xpose.msra.mxu0 0.0
        %3425 = vmatprep.subr.mxu0 0.0
        %3426 = vmatpush1.xpose.msra.mxu0 0.0
        %3427 = vmatprep.subr.mxu0 0.0
        %3428 = vmatpush1.xpose.msra.mxu0 0.0
        %3429 = vmatprep.subr.mxu0 0.0
        %3430 = vmatpush1.xpose.msra.mxu0 0.0
        %3431 = vmatprep.subr.mxu0 0.0
        %3432 = vmatpush1.xpose.msra.mxu0 0.0
        %3433 = vmatprep.subr.mxu0 0.0
        %3434 = vmatpush1.xpose.msra.mxu0 0.0
        %3435 = vmatprep.subr.mxu0 0.0
        %3436 = vmatpush1.xpose.msra.mxu0 0.0
        %3437 = vmatprep.subr.mxu0 0.0
        %3438 = vmatpush1.xpose.msra.mxu0 0.0
        %3439 = vmatprep.subr.mxu0 0.0
        %3440 = vmatpush1.xpose.msra.mxu0 0.0
        %3441 = vmatprep.subr.mxu0 0.0
        %3442 = vmatpush1.xpose.msra.mxu0 0.0
        %3443 = vmatprep.subr.mxu0 0.0
        %3444 = vmatpush1.xpose.msra.mxu0 0.0
        %3445 = vmatprep.subr.mxu0 0.0
        %3446 = vmatpush1.xpose.msra.mxu0 0.0
        %3447 = vmatprep.subr.mxu0 0.0
        %3448 = vmatpush1.xpose.msra.mxu0 0.0
        %3449 = vmatprep.subr.mxu0 0.0
        %3450 = vmatpush1.xpose.msra.mxu0 0.0
        %3451 = vmatprep.subr.mxu0 0.0
        %3452 = vmatpush1.xpose.msra.mxu0 0.0
        %3453 = vmatprep.subr.mxu0 0.0
        %3454 = vmatpush1.xpose.msra.mxu0 0.0
        %3455 = vmatprep.subr.mxu0 0.0
        %3456 = vmatpush1.xpose.msra.mxu0 0.0
        %3457 = vmatprep.subr.mxu0 0.0
        %3458 = vmatpush1.xpose.msra.mxu0 0.0
        %3459 = vmatprep.subr.mxu0 0.0
        %3460 = vmatpush1.xpose.msra.mxu0 0.0
        %3461 = vmatprep.subr.mxu0 0.0
        %3462 = vmatpush1.xpose.msra.mxu0 0.0
        %3463 = vmatprep.subr.mxu0 0.0
        %3464 = vmatpush1.xpose.msra.mxu0 0.0
        %3465 = vmatprep.subr.mxu0 0.0
        %3466 = vmatpush1.xpose.msra.mxu0 0.0
        %3467 = vmatprep.subr.mxu0 0.0
        %3468 = vmatpush1.xpose.msra.mxu0 0.0
        %3469 = vmatprep.subr.mxu0 0.0
        %3470 = vmatpush1.xpose.msra.mxu0 0.0
        %3471 = vmatprep.subr.mxu0 0.0
        %3472 = vmatpush1.xpose.msra.mxu0 0.0
        %3473 = vmatprep.mubr.f32.mxu0 0.0
        %3474 = vmatmul.mubr.f32.gmra.mrb[0].mxu0 %v3401
        %v3475 = vpop.f32.mrb[0].mxu0
        %v3476 = vadd.f32 0.0, %v3475
        %v3477 = vpop.f32.mrb[0].mxu0
        %3478 = vmatprep.mubr.f32.mxu0 0.0
        %3479 = vmatmul.mubr.f32.gmra.mrb[0].mxu0 %v3403
        %v3480 = vpop.f32.mrb[0].mxu0
        %v3481 = vadd.f32 0.0, %v3480
        %v3482 = vpop.f32.mrb[0].mxu0
        %3483 = vdwg.mxu0
        %v3484 = vmul.f32 %v3476, 0.17677669
        %v3485 = vmul.f32 %v3481, 0.17677669
        %v3486 = vadd.f32 %v3484, %v785
        %v3487 = vadd.f32 %v3485, %v786
        %v3488 = vsel %vm1124, %v3486, -inf
        %3489 = vmax.xlane.f32.xlu0 %v3488
        %v3490 = vpop.xlane.xlu0 %3489
        %v3491 = vsel %vm1124, %v3487, -inf
        %3492 = vmax.xlane.f32.xlu0 %v3491
        %v3493 = vpop.xlane.xlu0 %3492
        %v3494 = vsub.f32 %v3486, %v3490
        %v3495 = vsub.f32 %v3487, %v3493
        %v3496 = vmul.f32 %v3494, 1.442695
        %v3497 = vpow.pop %v3496
        %v3498 = vmul.f32 %v3495, 1.442695
        %v3499 = vpow.pop %v3498
        %v3500 = vsel %vm1124, %v3497, 0.0
        %3501 = vadd.xlane.f32.xlu0 %v3500
        %v3502 = vpop.xlane.xlu0 %3501
        %v3503 = vsel %vm1124, %v3499, 0.0
        %3504 = vadd.xlane.f32.xlu0 %v3503
        %v3505 = vpop.xlane.xlu0 %3504
        %v3506 = vrcp.pop %v3502
        %v3507 = vrcp.pop %v3505
        %v3508 = vmul.f32 %v3497, %v3506
        %v3509 = vmul.f32 %v3499, %v3507
        %3510 = vrot.lane.b32.xlu0 %v2975, 64
        %v3511 = vpop.permute.xlu0 %3510
        %3512 = vrot.lane.b32.xlu0 %v2978, 64
        %v3513 = vpop.permute.xlu0 %3512
        %v3517 = vsel %vm1124, %v3508, 0
        %v3520 = vsel %vm1124, %v3509, 0
        %3522 = vmatprep.subr.mxu0 0.0
        %3523 = vmatpush1.msra.mxu0 %v3511
        %3524 = vmatprep.subr.mxu0 0.0
        %3525 = vmatpush1.msra.mxu0 %v3513
        %3526 = vmatprep.subr.mxu0 0.0
        %3527 = vmatpush1.msra.mxu0 0.0
        %3528 = vmatprep.subr.mxu0 0.0
        %3529 = vmatpush1.msra.mxu0 0.0
        %3530 = vmatprep.subr.mxu0 0.0
        %3531 = vmatpush1.msra.mxu0 0.0
        %3532 = vmatprep.subr.mxu0 0.0
        %3533 = vmatpush1.msra.mxu0 0.0
        %3534 = vmatprep.subr.mxu0 0.0
        %3535 = vmatpush1.msra.mxu0 0.0
        %3536 = vmatprep.subr.mxu0 0.0
        %3537 = vmatpush1.msra.mxu0 0.0
        %3538 = vmatprep.subr.mxu0 0.0
        %3539 = vmatpush1.msra.mxu0 0.0
        %3540 = vmatprep.subr.mxu0 0.0
        %3541 = vmatpush1.msra.mxu0 0.0
        %3542 = vmatprep.subr.mxu0 0.0
        %3543 = vmatpush1.msra.mxu0 0.0
        %3544 = vmatprep.subr.mxu0 0.0
        %3545 = vmatpush1.msra.mxu0 0.0
        %3546 = vmatprep.subr.mxu0 0.0
        %3547 = vmatpush1.msra.mxu0 0.0
        %3548 = vmatprep.subr.mxu0 0.0
        %3549 = vmatpush1.msra.mxu0 0.0
        %3550 = vmatprep.subr.mxu0 0.0
        %3551 = vmatpush1.msra.mxu0 0.0
        %3552 = vmatprep.subr.mxu0 0.0
        %3553 = vmatpush1.msra.mxu0 0.0
        %3554 = vmatprep.subr.mxu0 0.0
        %3555 = vmatpush1.msra.mxu0 0.0
        %3556 = vmatprep.subr.mxu0 0.0
        %3557 = vmatpush1.msra.mxu0 0.0
        %3558 = vmatprep.subr.mxu0 0.0
        %3559 = vmatpush1.msra.mxu0 0.0
        %3560 = vmatprep.subr.mxu0 0.0
        %3561 = vmatpush1.msra.mxu0 0.0
        %3562 = vmatprep.subr.mxu0 0.0
        %3563 = vmatpush1.msra.mxu0 0.0
        %3564 = vmatprep.subr.mxu0 0.0
        %3565 = vmatpush1.msra.mxu0 0.0
        %3566 = vmatprep.subr.mxu0 0.0
        %3567 = vmatpush1.msra.mxu0 0.0
        %3568 = vmatprep.subr.mxu0 0.0
        %3569 = vmatpush1.msra.mxu0 0.0
        %3570 = vmatprep.subr.mxu0 0.0
        %3571 = vmatpush1.msra.mxu0 0.0
        %3572 = vmatprep.subr.mxu0 0.0
        %3573 = vmatpush1.msra.mxu0 0.0
        %3574 = vmatprep.subr.mxu0 0.0
        %3575 = vmatpush1.msra.mxu0 0.0
        %3576 = vmatprep.subr.mxu0 0.0
        %3577 = vmatpush1.msra.mxu0 0.0
        %3578 = vmatprep.subr.mxu0 0.0
        %3579 = vmatpush1.msra.mxu0 0.0
        %3580 = vmatprep.subr.mxu0 0.0
        %3581 = vmatpush1.msra.mxu0 0.0
        %3582 = vmatprep.subr.mxu0 0.0
        %3583 = vmatpush1.msra.mxu0 0.0
        %3584 = vmatprep.subr.mxu0 0.0
        %3585 = vmatpush1.msra.mxu0 0.0
        %3586 = vmatprep.mubr.f32.mxu0 0.0
        %3587 = vmatmul.mubr.f32.gmra.mrb[0].mxu0 %v3517
        %v3588 = vpop.f32.mrb[0].mxu0
        %v3589 = vadd.f32 0.0, %v3588
        %v3590 = vpop.f32.mrb[0].mxu0
        %3591 = vmatprep.mubr.f32.mxu0 0.0
        %3592 = vmatmul.mubr.f32.gmra.mrb[0].mxu0 %v3520
        %v3593 = vpop.f32.mrb[0].mxu0
        %v3594 = vadd.f32 0.0, %v3593
        %v3595 = vpop.f32.mrb[0].mxu0
        %3596 = vdwg.mxu0
        %3599 = vrot.lane.b32.xlu0 %v3589, 64
        %v3600 = vpop.permute.xlu0 %3599
        %3601 = vrot.lane.b32.xlu0 %v3594, 64
        %v3602 = vpop.permute.xlu0 %3601
        %3605 = vst.msk [vmem:[#allocation3] sm:$0xff] %vm1659, %v3600
        %3606 = vst.msk [vmem:[#allocation3 + $0x8] sm:$0xff] %vm1659, %v3602
        %3607 = vrot.lane.b32.xlu0 %v2932, 32
        %v3608 = vpop.permute.xlu0 %3607
        %3609 = vrot.lane.b32.xlu0 %v2936, 32
        %v3610 = vpop.permute.xlu0 %3609
        %3611 = vrot.lane.b32.xlu0 %v2934, 32
        %v3612 = vpop.permute.xlu0 %3611
        %3613 = vrot.lane.b32.xlu0 %v2938, 32
        %v3614 = vpop.permute.xlu0 %3613
        %v3615 = vsel %vm1032, %v3608, 0
        %v3617 = vsel %vm1032, %v3610, 0
        %v3619 = vsel %vm1032, %v3612, 0
        %v3621 = vsel %vm1032, %v3614, 0
        %3623 = vmatprep.subr.mxu0 0.0
        %3624 = vmatpush1.xpose.msra.mxu0 %v3619
        %3625 = vmatprep.subr.mxu0 0.0
        %3626 = vmatpush1.xpose.msra.mxu0 %v3621
        %3627 = vmatprep.subr.mxu0 0.0
        %3628 = vmatpush1.xpose.msra.mxu0 0.0
        %3629 = vmatprep.subr.mxu0 0.0
        %3630 = vmatpush1.xpose.msra.mxu0 0.0
        %3631 = vmatprep.subr.mxu0 0.0
        %3632 = vmatpush1.xpose.msra.mxu0 0.0
        %3633 = vmatprep.subr.mxu0 0.0
        %3634 = vmatpush1.xpose.msra.mxu0 0.0
        %3635 = vmatprep.subr.mxu0 0.0
        %3636 = vmatpush1.xpose.msra.mxu0 0.0
        %3637 = vmatprep.subr.mxu0 0.0
        %3638 = vmatpush1.xpose.msra.mxu0 0.0
        %3639 = vmatprep.subr.mxu0 0.0
        %3640 = vmatpush1.xpose.msra.mxu0 0.0
        %3641 = vmatprep.subr.mxu0 0.0
        %3642 = vmatpush1.xpose.msra.mxu0 0.0
        %3643 = vmatprep.subr.mxu0 0.0
        %3644 = vmatpush1.xpose.msra.mxu0 0.0
        %3645 = vmatprep.subr.mxu0 0.0
        %3646 = vmatpush1.xpose.msra.mxu0 0.0
        %3647 = vmatprep.subr.mxu0 0.0
        %3648 = vmatpush1.xpose.msra.mxu0 0.0
        %3649 = vmatprep.subr.mxu0 0.0
        %3650 = vmatpush1.xpose.msra.mxu0 0.0
        %3651 = vmatprep.subr.mxu0 0.0
        %3652 = vmatpush1.xpose.msra.mxu0 0.0
        %3653 = vmatprep.subr.mxu0 0.0
        %3654 = vmatpush1.xpose.msra.mxu0 0.0
        %3655 = vmatprep.subr.mxu0 0.0
        %3656 = vmatpush1.xpose.msra.mxu0 0.0
        %3657 = vmatprep.subr.mxu0 0.0
        %3658 = vmatpush1.xpose.msra.mxu0 0.0
        %3659 = vmatprep.subr.mxu0 0.0
        %3660 = vmatpush1.xpose.msra.mxu0 0.0
        %3661 = vmatprep.subr.mxu0 0.0
        %3662 = vmatpush1.xpose.msra.mxu0 0.0
        %3663 = vmatprep.subr.mxu0 0.0
        %3664 = vmatpush1.xpose.msra.mxu0 0.0
        %3665 = vmatprep.subr.mxu0 0.0
        %3666 = vmatpush1.xpose.msra.mxu0 0.0
        %3667 = vmatprep.subr.mxu0 0.0
        %3668 = vmatpush1.xpose.msra.mxu0 0.0
        %3669 = vmatprep.subr.mxu0 0.0
        %3670 = vmatpush1.xpose.msra.mxu0 0.0
        %3671 = vmatprep.subr.mxu0 0.0
        %3672 = vmatpush1.xpose.msra.mxu0 0.0
        %3673 = vmatprep.subr.mxu0 0.0
        %3674 = vmatpush1.xpose.msra.mxu0 0.0
        %3675 = vmatprep.subr.mxu0 0.0
        %3676 = vmatpush1.xpose.msra.mxu0 0.0
        %3677 = vmatprep.subr.mxu0 0.0
        %3678 = vmatpush1.xpose.msra.mxu0 0.0
        %3679 = vmatprep.subr.mxu0 0.0
        %3680 = vmatpush1.xpose.msra.mxu0 0.0
        %3681 = vmatprep.subr.mxu0 0.0
        %3682 = vmatpush1.xpose.msra.mxu0 0.0
        %3683 = vmatprep.subr.mxu0 0.0
        %3684 = vmatpush1.xpose.msra.mxu0 0.0
        %3685 = vmatprep.subr.mxu0 0.0
        %3686 = vmatpush1.xpose.msra.mxu0 0.0
        %3687 = vmatprep.mubr.f32.mxu0 0.0
        %3688 = vmatmul.mubr.f32.gmra.mrb[0].mxu0 %v3615
        %v3689 = vpop.f32.mrb[0].mxu0
        %v3690 = vadd.f32 0.0, %v3689
        %v3691 = vpop.f32.mrb[0].mxu0
        %3692 = vmatprep.mubr.f32.mxu0 0.0
        %3693 = vmatmul.mubr.f32.gmra.mrb[0].mxu0 %v3617
        %v3694 = vpop.f32.mrb[0].mxu0
        %v3695 = vadd.f32 0.0, %v3694
        %v3696 = vpop.f32.mrb[0].mxu0
        %3697 = vdwg.mxu0
        %v3698 = vmul.f32 %v3690, 0.17677669
        %v3699 = vmul.f32 %v3695, 0.17677669
        %v3700 = vadd.f32 %v3698, %v785
        %v3701 = vadd.f32 %v3699, %v786
        %v3702 = vsel %vm1124, %v3700, -inf
        %3703 = vmax.xlane.f32.xlu0 %v3702
        %v3704 = vpop.xlane.xlu0 %3703
        %v3705 = vsel %vm1124, %v3701, -inf
        %3706 = vmax.xlane.f32.xlu0 %v3705
        %v3707 = vpop.xlane.xlu0 %3706
        %v3708 = vsub.f32 %v3700, %v3704
        %v3709 = vsub.f32 %v3701, %v3707
        %v3710 = vmul.f32 %v3708, 1.442695
        %v3711 = vpow.pop %v3710
        %v3712 = vmul.f32 %v3709, 1.442695
        %v3713 = vpow.pop %v3712
        %v3714 = vsel %vm1124, %v3711, 0.0
        %3715 = vadd.xlane.f32.xlu0 %v3714
        %v3716 = vpop.xlane.xlu0 %3715
        %v3717 = vsel %vm1124, %v3713, 0.0
        %3718 = vadd.xlane.f32.xlu0 %v3717
        %v3719 = vpop.xlane.xlu0 %3718
        %v3720 = vrcp.pop %v3716
        %v3721 = vrcp.pop %v3719
        %v3722 = vmul.f32 %v3711, %v3720
        %v3723 = vmul.f32 %v3713, %v3721
        %3724 = vrot.lane.b32.xlu0 %v2975, 32
        %v3725 = vpop.permute.xlu0 %3724
        %3726 = vrot.lane.b32.xlu0 %v2978, 32
        %v3727 = vpop.permute.xlu0 %3726
        %v3731 = vsel %vm1124, %v3722, 0
        %v3734 = vsel %vm1124, %v3723, 0
        %3736 = vmatprep.subr.mxu0 0.0
        %3737 = vmatpush1.msra.mxu0 %v3725
        %3738 = vmatprep.subr.mxu0 0.0
        %3739 = vmatpush1.msra.mxu0 %v3727
        %3740 = vmatprep.subr.mxu0 0.0
        %3741 = vmatpush1.msra.mxu0 0.0
        %3742 = vmatprep.subr.mxu0 0.0
        %3743 = vmatpush1.msra.mxu0 0.0
        %3744 = vmatprep.subr.mxu0 0.0
        %3745 = vmatpush1.msra.mxu0 0.0
        %3746 = vmatprep.subr.mxu0 0.0
        %3747 = vmatpush1.msra.mxu0 0.0
        %3748 = vmatprep.subr.mxu0 0.0
        %3749 = vmatpush1.msra.mxu0 0.0
        %3750 = vmatprep.subr.mxu0 0.0
        %3751 = vmatpush1.msra.mxu0 0.0
        %3752 = vmatprep.subr.mxu0 0.0
        %3753 = vmatpush1.msra.mxu0 0.0
        %3754 = vmatprep.subr.mxu0 0.0
        %3755 = vmatpush1.msra.mxu0 0.0
        %3756 = vmatprep.subr.mxu0 0.0
        %3757 = vmatpush1.msra.mxu0 0.0
        %3758 = vmatprep.subr.mxu0 0.0
        %3759 = vmatpush1.msra.mxu0 0.0
        %3760 = vmatprep.subr.mxu0 0.0
        %3761 = vmatpush1.msra.mxu0 0.0
        %3762 = vmatprep.subr.mxu0 0.0
        %3763 = vmatpush1.msra.mxu0 0.0
        %3764 = vmatprep.subr.mxu0 0.0
        %3765 = vmatpush1.msra.mxu0 0.0
        %3766 = vmatprep.subr.mxu0 0.0
        %3767 = vmatpush1.msra.mxu0 0.0
        %3768 = vmatprep.subr.mxu0 0.0
        %3769 = vmatpush1.msra.mxu0 0.0
        %3770 = vmatprep.subr.mxu0 0.0
        %3771 = vmatpush1.msra.mxu0 0.0
        %3772 = vmatprep.subr.mxu0 0.0
        %3773 = vmatpush1.msra.mxu0 0.0
        %3774 = vmatprep.subr.mxu0 0.0
        %3775 = vmatpush1.msra.mxu0 0.0
        %3776 = vmatprep.subr.mxu0 0.0
        %3777 = vmatpush1.msra.mxu0 0.0
        %3778 = vmatprep.subr.mxu0 0.0
        %3779 = vmatpush1.msra.mxu0 0.0
        %3780 = vmatprep.subr.mxu0 0.0
        %3781 = vmatpush1.msra.mxu0 0.0
        %3782 = vmatprep.subr.mxu0 0.0
        %3783 = vmatpush1.msra.mxu0 0.0
        %3784 = vmatprep.subr.mxu0 0.0
        %3785 = vmatpush1.msra.mxu0 0.0
        %3786 = vmatprep.subr.mxu0 0.0
        %3787 = vmatpush1.msra.mxu0 0.0
        %3788 = vmatprep.subr.mxu0 0.0
        %3789 = vmatpush1.msra.mxu0 0.0
        %3790 = vmatprep.subr.mxu0 0.0
        %3791 = vmatpush1.msra.mxu0 0.0
        %3792 = vmatprep.subr.mxu0 0.0
        %3793 = vmatpush1.msra.mxu0 0.0
        %3794 = vmatprep.subr.mxu0 0.0
        %3795 = vmatpush1.msra.mxu0 0.0
        %3796 = vmatprep.subr.mxu0 0.0
        %3797 = vmatpush1.msra.mxu0 0.0
        %3798 = vmatprep.subr.mxu0 0.0
        %3799 = vmatpush1.msra.mxu0 0.0
        %3800 = vmatprep.mubr.f32.mxu0 0.0
        %3801 = vmatmul.mubr.f32.gmra.mrb[0].mxu0 %v3731
        %v3802 = vpop.f32.mrb[0].mxu0
        %v3803 = vadd.f32 0.0, %v3802
        %v3804 = vpop.f32.mrb[0].mxu0
        %3805 = vmatprep.mubr.f32.mxu0 0.0
        %3806 = vmatmul.mubr.f32.gmra.mrb[0].mxu0 %v3734
        %v3807 = vpop.f32.mrb[0].mxu0
        %v3808 = vadd.f32 0.0, %v3807
        %v3809 = vpop.f32.mrb[0].mxu0
        %3810 = vdwg.mxu0
        %3813 = vrot.lane.b32.xlu0 %v3803, 96
        %v3814 = vpop.permute.xlu0 %3813
        %3815 = vrot.lane.b32.xlu0 %v3808, 96
        %v3816 = vpop.permute.xlu0 %3815
        %3819 = vst.msk [vmem:[#allocation3] sm:$0xff] %vm1874, %v3814
        %3820 = vst.msk [vmem:[#allocation3 + $0x8] sm:$0xff] %vm1874, %v3816
        %v3821 = vld [vmem:[#allocation3] sm:$0xff]
        %v3822 = vld [vmem:[#allocation3 + $0x8] sm:$0xff]
        %v3823 = vpack.c.bf16 %v3822, %v3821
        %s3824 = scalar_lea.vmem [#allocation11], 64
        %v3825 = vld [vmem:[%s3824] sm:$0xf]
        %v3826 = vld [vmem:[%s3824 + $0x4] sm:$0xf]
        %v3827 = vld [vmem:[%s3824 + $0x8] sm:$0xf]
        %v3828 = vld [vmem:[%s3824 + $0xc] sm:$0xf]
        %v3829 = vld [vmem:[%s3824 + $0x10] sm:$0xf]
        %v3830 = vld [vmem:[%s3824 + $0x14] sm:$0xf]
        %v3831 = vld [vmem:[%s3824 + $0x18] sm:$0xf]
        %v3832 = vld [vmem:[%s3824 + $0x1c] sm:$0xf]
        %v3833 = vld [vmem:[%s3824 + $0x20] sm:$0xf]
        %v3834 = vld [vmem:[%s3824 + $0x24] sm:$0xf]
        %v3835 = vld [vmem:[%s3824 + $0x28] sm:$0xf]
        %v3836 = vld [vmem:[%s3824 + $0x2c] sm:$0xf]
        %v3837 = vld [vmem:[%s3824 + $0x30] sm:$0xf]
        %v3838 = vld [vmem:[%s3824 + $0x34] sm:$0xf]
        %v3839 = vld [vmem:[%s3824 + $0x38] sm:$0xf]
        %v3840 = vld [vmem:[%s3824 + $0x3c] sm:$0xf]
        %s3841 = scalar_lea.vmem %s5, 1
        %v3842 = vld [vmem:[%s3841] sm:$0x1]
        %v3844 = vlaneseq
        %v3845 = vshrl.u32 %v3844, 7
        %v3846 = vsub.s32 0, %v3845
        %v3847 = vrot.slane %v3842, %v3846
        %v3865 = vunpack.c.l.b16 %v3825
        %v3866 = vunpack.c.l.b16 %v3826
        %v3867 = vunpack.c.l.b16 %v3827
        %v3868 = vunpack.c.l.b16 %v3828
        %v3869 = vunpack.c.l.b16 %v3829
        %v3870 = vunpack.c.l.b16 %v3830
        %v3871 = vunpack.c.l.b16 %v3831
        %v3872 = vunpack.c.l.b16 %v3832
        %v3873 = vunpack.c.l.b16 %v3833
        %v3874 = vunpack.c.l.b16 %v3834
        %v3875 = vunpack.c.l.b16 %v3835
        %v3876 = vunpack.c.l.b16 %v3836
        %v3877 = vunpack.c.l.b16 %v3837
        %v3878 = vunpack.c.l.b16 %v3838
        %v3879 = vunpack.c.l.b16 %v3839
        %v3880 = vunpack.c.l.b16 %v3840
        %v3881 = vpack.c.b16 %v3866, %v3865
        %v3882 = vpack.c.b16 %v3868, %v3867
        %v3883 = vpack.c.b16 %v3870, %v3869
        %v3884 = vpack.c.b16 %v3872, %v3871
        %v3885 = vpack.c.b16 %v3874, %v3873
        %v3886 = vpack.c.b16 %v3876, %v3875
        %v3887 = vpack.c.b16 %v3878, %v3877
        %v3888 = vpack.c.b16 %v3880, %v3879
        %3897 = vmatprep.subr.bf16.mxu0 0
        %3898 = vmatpush1.bf16.msra.mxu0 %v3881
        %3899 = vmatprep.subr.bf16.mxu0 0
        %3900 = vmatpush1.bf16.msra.mxu0 %v3882
        %3901 = vmatprep.subr.bf16.mxu0 0
        %3902 = vmatpush1.bf16.msra.mxu0 %v3883
        %3903 = vmatprep.subr.bf16.mxu0 0
        %3904 = vmatpush1.bf16.msra.mxu0 %v3884
        %3905 = vmatprep.subr.bf16.mxu0 0
        %3906 = vmatpush1.bf16.msra.mxu0 %v3885
        %3907 = vmatprep.subr.bf16.mxu0 0
        %3908 = vmatpush1.bf16.msra.mxu0 %v3886
        %3909 = vmatprep.subr.bf16.mxu0 0
        %3910 = vmatpush1.bf16.msra.mxu0 %v3887
        %3911 = vmatprep.subr.bf16.mxu0 0
        %3912 = vmatpush1.bf16.msra.mxu0 %v3888
        %3913 = vmatprep.subr.bf16.mxu0 0
        %3914 = vmatpush1.bf16.msra.mxu0 0
        %3915 = vmatprep.subr.bf16.mxu0 0
        %3916 = vmatpush1.bf16.msra.mxu0 0
        %3917 = vmatprep.subr.bf16.mxu0 0
        %3918 = vmatpush1.bf16.msra.mxu0 0
        %3919 = vmatprep.subr.bf16.mxu0 0
        %3920 = vmatpush1.bf16.msra.mxu0 0
        %3921 = vmatprep.subr.bf16.mxu0 0
        %3922 = vmatpush1.bf16.msra.mxu0 0
        %3923 = vmatprep.subr.bf16.mxu0 0
        %3924 = vmatpush1.bf16.msra.mxu0 0
        %3925 = vmatprep.subr.bf16.mxu0 0
        %3926 = vmatpush1.bf16.msra.mxu0 0
        %3927 = vmatprep.subr.bf16.mxu0 0
        %3928 = vmatpush1.bf16.msra.mxu0 0
        %3929 = vmatprep.mubr.bf16.mxu0 0
        %3930 = vmatmul.mubr.bf16.gmra.mrb[0].mxu0 %v3823
        %v3931 = vpop.f32.mrb[0].mxu0
        %v3932 = vadd.f32 %v3847, %v3931
        %v3933 = vpop.f32.mrb[0].mxu0
        %v3934 = vpop.f32.mrb[0].mxu0
        %v3935 = vadd.f32 %v3847, %v3934
        %v3936 = vpop.f32.mrb[0].mxu0
        %3937 = vdwg.mxu0
        %v3938 = vadd.f32 %v2733, %v3932
        %v3939 = vadd.f32 %v2734, %v3935
        %s3940 = scalar_lea.vmem %s6, 1
        %v3941 = vld [vmem:[%s3940] sm:$0x1]
        %s3942 = scalar_lea.vmem %s7, 1
        %v3943 = vld [vmem:[%s3942] sm:$0x1]
        %3944 = vadd.xlane.f32.xlu0 %v3938
        %v3945 = vpop.xlane.xlu0 %3944
        %3946 = vadd.xlane.f32.xlu0 %v3939
        %v3947 = vpop.xlane.xlu0 %3946
        %v3948 = vmul.f32 %v3945, %v2000
        %v3949 = vmul.f32 %v3947, %v2000
        %v3950 = vsub.f32 %v3938, %v3948
        %v3951 = vsub.f32 %v3939, %v3949
        %v3952 = vmul.f32 %v3950, %v3950
        %v3953 = vmul.f32 %v3951, %v3951
        %3954 = vadd.xlane.f32.xlu0 %v3952
        %v3955 = vpop.xlane.xlu0 %3954
        %3956 = vadd.xlane.f32.xlu0 %v3953
        %v3957 = vpop.xlane.xlu0 %3956
        %v3958 = vmul.f32 %v3955, %v2000
        %v3959 = vmul.f32 %v3957, %v2000
        %v3960 = vadd.f32 %v3958, 1e-05
        %v3961 = vadd.f32 %v3959, 1e-05
        %v3962 = vrsqrt.pop %v3960
        %v3963 = vrsqrt.pop %v3961
        %v3964 = vmul.f32 %v3950, %v3962
        %v3965 = vmul.f32 %v3951, %v3963
        %v3967 = vlaneseq
        %v3968 = vshrl.u32 %v3967, 7
        %v3969 = vsub.s32 0, %v3968
        %v3970 = vrot.slane %v3941, %v3969
        %v3972 = vmul.f32 %v3964, %v3970
        %v3973 = vmul.f32 %v3965, %v3970
        %v3975 = vlaneseq
        %v3976 = vshrl.u32 %v3975, 7
        %v3977 = vsub.s32 0, %v3976
        %v3978 = vrot.slane %v3943, %v3977
        %v3980 = vadd.f32 %v3972, %v3978
        %v3981 = vadd.f32 %v3973, %v3978
        %v3982 = vpack.c.bf16 %v3981, %v3980
        %s3983 = scalar_lea.vmem [#allocation12], 256
        %v3984 = vld [vmem:[%s3983] sm:$0xff]
        %v3985 = vld [vmem:[%s3983 + $0x8] sm:$0xff]
        %v3986 = vld [vmem:[%s3983 + $0x10] sm:$0xff]
        %v3987 = vld [vmem:[%s3983 + $0x18] sm:$0xff]
        %v3988 = vld [vmem:[%s3983 + $0x20] sm:$0xff]
        %v3989 = vld [vmem:[%s3983 + $0x28] sm:$0xff]
        %v3990 = vld [vmem:[%s3983 + $0x30] sm:$0xff]
        %v3991 = vld [vmem:[%s3983 + $0x38] sm:$0xff]
        %v3992 = vld [vmem:[%s3983 + $0x40] sm:$0xff]
        %v3993 = vld [vmem:[%s3983 + $0x48] sm:$0xff]
        %v3994 = vld [vmem:[%s3983 + $0x50] sm:$0xff]
        %v3995 = vld [vmem:[%s3983 + $0x58] sm:$0xff]
        %v3996 = vld [vmem:[%s3983 + $0x60] sm:$0xff]
        %v3997 = vld [vmem:[%s3983 + $0x68] sm:$0xff]
        %v3998 = vld [vmem:[%s3983 + $0x70] sm:$0xff]
        %v3999 = vld [vmem:[%s3983 + $0x78] sm:$0xff]
        %v4000 = vld [vmem:[%s3983 + $0x80] sm:$0xff]
        %v4001 = vld [vmem:[%s3983 + $0x88] sm:$0xff]
        %v4002 = vld [vmem:[%s3983 + $0x90] sm:$0xff]
        %v4003 = vld [vmem:[%s3983 + $0x98] sm:$0xff]
        %v4004 = vld [vmem:[%s3983 + $0xa0] sm:$0xff]
        %v4005 = vld [vmem:[%s3983 + $0xa8] sm:$0xff]
        %v4006 = vld [vmem:[%s3983 + $0xb0] sm:$0xff]
        %v4007 = vld [vmem:[%s3983 + $0xb8] sm:$0xff]
        %v4008 = vld [vmem:[%s3983 + $0xc0] sm:$0xff]
        %v4009 = vld [vmem:[%s3983 + $0xc8] sm:$0xff]
        %v4010 = vld [vmem:[%s3983 + $0xd0] sm:$0xff]
        %v4011 = vld [vmem:[%s3983 + $0xd8] sm:$0xff]
        %v4012 = vld [vmem:[%s3983 + $0xe0] sm:$0xff]
        %v4013 = vld [vmem:[%s3983 + $0xe8] sm:$0xff]
        %v4014 = vld [vmem:[%s3983 + $0xf0] sm:$0xff]
        %v4015 = vld [vmem:[%s3983 + $0xf8] sm:$0xff]
        %s4016 = scalar_lea.vmem [#allocation14], 4
        %v4017 = vld [vmem:[%s4016] sm:$0xf]
        %v4019 = vlaneseq
        %v4020 = vshrl.u32 %v4019, 7
        %v4021 = vsub.s32 0, %v4020
        %v4022 = vrot.slane %v4017, %v4021
        %v4023 = vlaneseq
        %v4024 = vshrl.u32 %v4023, 7
        %v4025 = vsub.s32 1, %v4024
        %v4026 = vrot.slane %v4017, %v4025
        %v4027 = vlaneseq
        %v4028 = vshrl.u32 %v4027, 7
        %v4029 = vsub.s32 2, %v4028
        %v4030 = vrot.slane %v4017, %v4029
        %v4031 = vlaneseq
        %v4032 = vshrl.u32 %v4031, 7
        %v4033 = vsub.s32 3, %v4032
        %v4034 = vrot.slane %v4017, %v4033
        %v4071 = vunpack.c.l.b16 %v3984
        %v4072 = vunpack.c.h.b16 %v3984
        %v4073 = vunpack.c.l.b16 %v3985
        %v4074 = vunpack.c.h.b16 %v3985
        %v4075 = vunpack.c.l.b16 %v3986
        %v4076 = vunpack.c.h.b16 %v3986
        %v4077 = vunpack.c.l.b16 %v3987
        %v4078 = vunpack.c.h.b16 %v3987
        %v4079 = vunpack.c.l.b16 %v3988
        %v4080 = vunpack.c.h.b16 %v3988
        %v4081 = vunpack.c.l.b16 %v3989
        %v4082 = vunpack.c.h.b16 %v3989
        %v4083 = vunpack.c.l.b16 %v3990
        %v4084 = vunpack.c.h.b16 %v3990
        %v4085 = vunpack.c.l.b16 %v3991
        %v4086 = vunpack.c.h.b16 %v3991
        %v4087 = vunpack.c.l.b16 %v3992
        %v4088 = vunpack.c.h.b16 %v3992
        %v4089 = vunpack.c.l.b16 %v3993
        %v4090 = vunpack.c.h.b16 %v3993
        %v4091 = vunpack.c.l.b16 %v3994
        %v4092 = vunpack.c.h.b16 %v3994
        %v4093 = vunpack.c.l.b16 %v3995
        %v4094 = vunpack.c.h.b16 %v3995
        %v4095 = vunpack.c.l.b16 %v3996
        %v4096 = vunpack.c.h.b16 %v3996
        %v4097 = vunpack.c.l.b16 %v3997
        %v4098 = vunpack.c.h.b16 %v3997
        %v4099 = vunpack.c.l.b16 %v3998
        %v4100 = vunpack.c.h.b16 %v3998
        %v4101 = vunpack.c.l.b16 %v3999
        %v4102 = vunpack.c.h.b16 %v3999
        %v4103 = vunpack.c.l.b16 %v4000
        %v4104 = vunpack.c.h.b16 %v4000
        %v4105 = vunpack.c.l.b16 %v4001
        %v4106 = vunpack.c.h.b16 %v4001
        %v4107 = vunpack.c.l.b16 %v4002
        %v4108 = vunpack.c.h.b16 %v4002
        %v4109 = vunpack.c.l.b16 %v4003
        %v4110 = vunpack.c.h.b16 %v4003
        %v4111 = vunpack.c.l.b16 %v4004
        %v4112 = vunpack.c.h.b16 %v4004
        %v4113 = vunpack.c.l.b16 %v4005
        %v4114 = vunpack.c.h.b16 %v4005
        %v4115 = vunpack.c.l.b16 %v4006
        %v4116 = vunpack.c.h.b16 %v4006
        %v4117 = vunpack.c.l.b16 %v4007
        %v4118 = vunpack.c.h.b16 %v4007
        %v4119 = vunpack.c.l.b16 %v4008
        %v4120 = vunpack.c.h.b16 %v4008
        %v4121 = vunpack.c.l.b16 %v4009
        %v4122 = vunpack.c.h.b16 %v4009
        %v4123 = vunpack.c.l.b16 %v4010
        %v4124 = vunpack.c.h.b16 %v4010
        %v4125 = vunpack.c.l.b16 %v4011
        %v4126 = vunpack.c.h.b16 %v4011
        %v4127 = vunpack.c.l.b16 %v4012
        %v4128 = vunpack.c.h.b16 %v4012
        %v4129 = vunpack.c.l.b16 %v4013
        %v4130 = vunpack.c.h.b16 %v4013
        %v4131 = vunpack.c.l.b16 %v4014
        %v4132 = vunpack.c.h.b16 %v4014
        %v4133 = vunpack.c.l.b16 %v4015
        %v4134 = vunpack.c.h.b16 %v4015
        %v4135 = vpack.c.b16 %v4075, %v4071
        %v4136 = vpack.c.b16 %v4076, %v4072
        %v4137 = vpack.c.b16 %v4077, %v4073
        %v4138 = vpack.c.b16 %v4078, %v4074
        %v4139 = vpack.c.b16 %v4083, %v4079
        %v4140 = vpack.c.b16 %v4084, %v4080
        %v4141 = vpack.c.b16 %v4085, %v4081
        %v4142 = vpack.c.b16 %v4086, %v4082
        %v4143 = vpack.c.b16 %v4091, %v4087
        %v4144 = vpack.c.b16 %v4092, %v4088
        %v4145 = vpack.c.b16 %v4093, %v4089
        %v4146 = vpack.c.b16 %v4094, %v4090
        %v4147 = vpack.c.b16 %v4099, %v4095
        %v4148 = vpack.c.b16 %v4100, %v4096
        %v4149 = vpack.c.b16 %v4101, %v4097
        %v4150 = vpack.c.b16 %v4102, %v4098
        %v4151 = vpack.c.b16 %v4107, %v4103
        %v4152 = vpack.c.b16 %v4108, %v4104
        %v4153 = vpack.c.b16 %v4109, %v4105
        %v4154 = vpack.c.b16 %v4110, %v4106
        %v4155 = vpack.c.b16 %v4115, %v4111
        %v4156 = vpack.c.b16 %v4116, %v4112
        %v4157 = vpack.c.b16 %v4117, %v4113
        %v4158 = vpack.c.b16 %v4118, %v4114
        %v4159 = vpack.c.b16 %v4123, %v4119
        %v4160 = vpack.c.b16 %v4124, %v4120
        %v4161 = vpack.c.b16 %v4125, %v4121
        %v4162 = vpack.c.b16 %v4126, %v4122
        %v4163 = vpack.c.b16 %v4131, %v4127
        %v4164 = vpack.c.b16 %v4132, %v4128
        %v4165 = vpack.c.b16 %v4133, %v4129
        %v4166 = vpack.c.b16 %v4134, %v4130
        %4199 = vmatprep.subr.bf16.mxu0 %v4136
        %4200 = vmatpush1.bf16.msra.mxu0 %v4135
        %4201 = vmatprep.subr.bf16.mxu0 %v4140
        %4202 = vmatpush1.bf16.msra.mxu0 %v4139
        %4203 = vmatprep.subr.bf16.mxu0 %v4144
        %4204 = vmatpush1.bf16.msra.mxu0 %v4143
        %4205 = vmatprep.subr.bf16.mxu0 %v4148
        %4206 = vmatpush1.bf16.msra.mxu0 %v4147
        %4207 = vmatprep.subr.bf16.mxu0 %v4152
        %4208 = vmatpush1.bf16.msra.mxu0 %v4151
        %4209 = vmatprep.subr.bf16.mxu0 %v4156
        %4210 = vmatpush1.bf16.msra.mxu0 %v4155
        %4211 = vmatprep.subr.bf16.mxu0 %v4160
        %4212 = vmatpush1.bf16.msra.mxu0 %v4159
        %4213 = vmatprep.subr.bf16.mxu0 %v4164
        %4214 = vmatpush1.bf16.msra.mxu0 %v4163
        %4215 = vmatprep.subr.bf16.mxu0 0
        %4216 = vmatpush1.bf16.msra.mxu0 0
        %4217 = vmatprep.subr.bf16.mxu0 0
        %4218 = vmatpush1.bf16.msra.mxu0 0
        %4219 = vmatprep.subr.bf16.mxu0 0
        %4220 = vmatpush1.bf16.msra.mxu0 0
        %4221 = vmatprep.subr.bf16.mxu0 0
        %4222 = vmatpush1.bf16.msra.mxu0 0
        %4223 = vmatprep.subr.bf16.mxu0 0
        %4224 = vmatpush1.bf16.msra.mxu0 0
        %4225 = vmatprep.subr.bf16.mxu0 0
        %4226 = vmatpush1.bf16.msra.mxu0 0
        %4227 = vmatprep.subr.bf16.mxu0 0
        %4228 = vmatpush1.bf16.msra.mxu0 0
        %4229 = vmatprep.subr.bf16.mxu0 0
        %4230 = vmatpush1.bf16.msra.mxu0 0
        %4231 = vmatprep.mubr.bf16.mxu0 0
        %4232 = vmatmul.mubr.bf16.gmra.mrb[0].mxu0 %v3982
        %v4233 = vpop.f32.mrb[0].mxu0
        %v4234 = vadd.f32 %v4022, %v4233
        %v4235 = vpop.f32.mrb[0].mxu0
        %v4236 = vadd.f32 %v4026, %v4235
        %v4237 = vpop.f32.mrb[0].mxu0
        %v4238 = vadd.f32 %v4022, %v4237
        %v4239 = vpop.f32.mrb[0].mxu0
        %v4240 = vadd.f32 %v4026, %v4239
        %4241 = vdwg.mxu0
        %4242 = vmatprep.subr.bf16.mxu0 %v4138
        %4243 = vmatpush1.bf16.msra.mxu0 %v4137
        %4244 = vmatprep.subr.bf16.mxu0 %v4142
        %4245 = vmatpush1.bf16.msra.mxu0 %v4141
        %4246 = vmatprep.subr.bf16.mxu0 %v4146
        %4247 = vmatpush1.bf16.msra.mxu0 %v4145
        %4248 = vmatprep.subr.bf16.mxu0 %v4150
        %4249 = vmatpush1.bf16.msra.mxu0 %v4149
        %4250 = vmatprep.subr.bf16.mxu0 %v4154
        %4251 = vmatpush1.bf16.msra.mxu0 %v4153
        %4252 = vmatprep.subr.bf16.mxu0 %v4158
        %4253 = vmatpush1.bf16.msra.mxu0 %v4157
        %4254 = vmatprep.subr.bf16.mxu0 %v4162
        %4255 = vmatpush1.bf16.msra.mxu0 %v4161
        %4256 = vmatprep.subr.bf16.mxu0 %v4166
        %4257 = vmatpush1.bf16.msra.mxu0 %v4165
        %4258 = vmatprep.subr.bf16.mxu0 0
        %4259 = vmatpush1.bf16.msra.mxu0 0
        %4260 = vmatprep.subr.bf16.mxu0 0
        %4261 = vmatpush1.bf16.msra.mxu0 0
        %4262 = vmatprep.subr.bf16.mxu0 0
        %4263 = vmatpush1.bf16.msra.mxu0 0
        %4264 = vmatprep.subr.bf16.mxu0 0
        %4265 = vmatpush1.bf16.msra.mxu0 0
        %4266 = vmatprep.subr.bf16.mxu0 0
        %4267 = vmatpush1.bf16.msra.mxu0 0
        %4268 = vmatprep.subr.bf16.mxu0 0
        %4269 = vmatpush1.bf16.msra.mxu0 0
        %4270 = vmatprep.subr.bf16.mxu0 0
        %4271 = vmatpush1.bf16.msra.mxu0 0
        %4272 = vmatprep.subr.bf16.mxu0 0
        %4273 = vmatpush1.bf16.msra.mxu0 0
        %4274 = vmatprep.mubr.bf16.mxu0 0
        %4275 = vmatmul.mubr.bf16.gmra.mrb[0].mxu0 %v3982
        %v4276 = vpop.f32.mrb[0].mxu0
        %v4277 = vadd.f32 %v4030, %v4276
        %v4278 = vpop.f32.mrb[0].mxu0
        %v4279 = vadd.f32 %v4034, %v4278
        %v4280 = vpop.f32.mrb[0].mxu0
        %v4281 = vadd.f32 %v4030, %v4280
        %v4282 = vpop.f32.mrb[0].mxu0
        %v4283 = vadd.f32 %v4034, %v4282
        %4284 = vdwg.mxu0
        %v4285 = vmax.f32 %v4234, 0.0
        %v4286 = vmax.f32 %v4236, 0.0
        %v4287 = vmax.f32 %v4277, 0.0
        %v4288 = vmax.f32 %v4279, 0.0
        %v4289 = vmax.f32 %v4238, 0.0
        %v4290 = vmax.f32 %v4240, 0.0
        %v4291 = vmax.f32 %v4281, 0.0
        %v4292 = vmax.f32 %v4283, 0.0
        %v4293 = vpack.c.bf16 %v4289, %v4285
        %v4294 = vpack.c.bf16 %v4290, %v4286
        %v4295 = vpack.c.bf16 %v4291, %v4287
        %v4296 = vpack.c.bf16 %v4292, %v4288
        %s4297 = scalar_lea.vmem [#allocation15], 256
        %v4298 = vld [vmem:[%s4297] sm:$0xf]
        %v4299 = vld [vmem:[%s4297 + $0x4] sm:$0xf]
        %v4300 = vld [vmem:[%s4297 + $0x8] sm:$0xf]
        %v4301 = vld [vmem:[%s4297 + $0xc] sm:$0xf]
        %v4302 = vld [vmem:[%s4297 + $0x10] sm:$0xf]
        %v4303 = vld [vmem:[%s4297 + $0x14] sm:$0xf]
        %v4304 = vld [vmem:[%s4297 + $0x18] sm:$0xf]
        %v4305 = vld [vmem:[%s4297 + $0x1c] sm:$0xf]
        %v4306 = vld [vmem:[%s4297 + $0x20] sm:$0xf]
        %v4307 = vld [vmem:[%s4297 + $0x24] sm:$0xf]
        %v4308 = vld [vmem:[%s4297 + $0x28] sm:$0xf]
        %v4309 = vld [vmem:[%s4297 + $0x2c] sm:$0xf]
        %v4310 = vld [vmem:[%s4297 + $0x30] sm:$0xf]
        %v4311 = vld [vmem:[%s4297 + $0x34] sm:$0xf]
        %v4312 = vld [vmem:[%s4297 + $0x38] sm:$0xf]
        %v4313 = vld [vmem:[%s4297 + $0x3c] sm:$0xf]
        %v4314 = vld [vmem:[%s4297 + $0x40] sm:$0xf]
        %v4315 = vld [vmem:[%s4297 + $0x44] sm:$0xf]
        %v4316 = vld [vmem:[%s4297 + $0x48] sm:$0xf]
        %v4317 = vld [vmem:[%s4297 + $0x4c] sm:$0xf]
        %v4318 = vld [vmem:[%s4297 + $0x50] sm:$0xf]
        %v4319 = vld [vmem:[%s4297 + $0x54] sm:$0xf]
        %v4320 = vld [vmem:[%s4297 + $0x58] sm:$0xf]
        %v4321 = vld [vmem:[%s4297 + $0x5c] sm:$0xf]
        %v4322 = vld [vmem:[%s4297 + $0x60] sm:$0xf]
        %v4323 = vld [vmem:[%s4297 + $0x64] sm:$0xf]
        %v4324 = vld [vmem:[%s4297 + $0x68] sm:$0xf]
        %v4325 = vld [vmem:[%s4297 + $0x6c] sm:$0xf]
        %v4326 = vld [vmem:[%s4297 + $0x70] sm:$0xf]
        %v4327 = vld [vmem:[%s4297 + $0x74] sm:$0xf]
        %v4328 = vld [vmem:[%s4297 + $0x78] sm:$0xf]
        %v4329 = vld [vmem:[%s4297 + $0x7c] sm:$0xf]
        %v4330 = vld [vmem:[%s4297 + $0x80] sm:$0xf]
        %v4331 = vld [vmem:[%s4297 + $0x84] sm:$0xf]
        %v4332 = vld [vmem:[%s4297 + $0x88] sm:$0xf]
        %v4333 = vld [vmem:[%s4297 + $0x8c] sm:$0xf]
        %v4334 = vld [vmem:[%s4297 + $0x90] sm:$0xf]
        %v4335 = vld [vmem:[%s4297 + $0x94] sm:$0xf]
        %v4336 = vld [vmem:[%s4297 + $0x98] sm:$0xf]
        %v4337 = vld [vmem:[%s4297 + $0x9c] sm:$0xf]
        %v4338 = vld [vmem:[%s4297 + $0xa0] sm:$0xf]
        %v4339 = vld [vmem:[%s4297 + $0xa4] sm:$0xf]
        %v4340 = vld [vmem:[%s4297 + $0xa8] sm:$0xf]
        %v4341 = vld [vmem:[%s4297 + $0xac] sm:$0xf]
        %v4342 = vld [vmem:[%s4297 + $0xb0] sm:$0xf]
        %v4343 = vld [vmem:[%s4297 + $0xb4] sm:$0xf]
        %v4344 = vld [vmem:[%s4297 + $0xb8] sm:$0xf]
        %v4345 = vld [vmem:[%s4297 + $0xbc] sm:$0xf]
        %v4346 = vld [vmem:[%s4297 + $0xc0] sm:$0xf]
        %v4347 = vld [vmem:[%s4297 + $0xc4] sm:$0xf]
        %v4348 = vld [vmem:[%s4297 + $0xc8] sm:$0xf]
        %v4349 = vld [vmem:[%s4297 + $0xcc] sm:$0xf]
        %v4350 = vld [vmem:[%s4297 + $0xd0] sm:$0xf]
        %v4351 = vld [vmem:[%s4297 + $0xd4] sm:$0xf]
        %v4352 = vld [vmem:[%s4297 + $0xd8] sm:$0xf]
        %v4353 = vld [vmem:[%s4297 + $0xdc] sm:$0xf]
        %v4354 = vld [vmem:[%s4297 + $0xe0] sm:$0xf]
        %v4355 = vld [vmem:[%s4297 + $0xe4] sm:$0xf]
        %v4356 = vld [vmem:[%s4297 + $0xe8] sm:$0xf]
        %v4357 = vld [vmem:[%s4297 + $0xec] sm:$0xf]
        %v4358 = vld [vmem:[%s4297 + $0xf0] sm:$0xf]
        %v4359 = vld [vmem:[%s4297 + $0xf4] sm:$0xf]
        %v4360 = vld [vmem:[%s4297 + $0xf8] sm:$0xf]
        %v4361 = vld [vmem:[%s4297 + $0xfc] sm:$0xf]
        %s4362 = scalar_lea.vmem [#allocation17], 1
        %v4363 = vld [vmem:[%s4362] sm:$0x1]
        %v4365 = vlaneseq
        %v4366 = vshrl.u32 %v4365, 7
        %v4367 = vsub.s32 0, %v4366
        %v4368 = vrot.slane %v4363, %v4367
        %v4434 = vunpack.c.l.b16 %v4298
        %v4435 = vunpack.c.l.b16 %v4299
        %v4436 = vunpack.c.l.b16 %v4300
        %v4437 = vunpack.c.l.b16 %v4301
        %v4438 = vunpack.c.l.b16 %v4302
        %v4439 = vunpack.c.l.b16 %v4303
        %v4440 = vunpack.c.l.b16 %v4304
        %v4441 = vunpack.c.l.b16 %v4305
        %v4442 = vunpack.c.l.b16 %v4306
        %v4443 = vunpack.c.l.b16 %v4307
        %v4444 = vunpack.c.l.b16 %v4308
        %v4445 = vunpack.c.l.b16 %v4309
        %v4446 = vunpack.c.l.b16 %v4310
        %v4447 = vunpack.c.l.b16 %v4311
        %v4448 = vunpack.c.l.b16 %v4312
        %v4449 = vunpack.c.l.b16 %v4313
        %v4450 = vunpack.c.l.b16 %v4314
        %v4451 = vunpack.c.l.b16 %v4315
        %v4452 = vunpack.c.l.b16 %v4316
        %v4453 = vunpack.c.l.b16 %v4317
        %v4454 = vunpack.c.l.b16 %v4318
        %v4455 = vunpack.c.l.b16 %v4319
        %v4456 = vunpack.c.l.b16 %v4320
        %v4457 = vunpack.c.l.b16 %v4321
        %v4458 = vunpack.c.l.b16 %v4322
        %v4459 = vunpack.c.l.b16 %v4323
        %v4460 = vunpack.c.l.b16 %v4324
        %v4461 = vunpack.c.l.b16 %v4325
        %v4462 = vunpack.c.l.b16 %v4326
        %v4463 = vunpack.c.l.b16 %v4327
        %v4464 = vunpack.c.l.b16 %v4328
        %v4465 = vunpack.c.l.b16 %v4329
        %v4466 = vunpack.c.l.b16 %v4330
        %v4467 = vunpack.c.l.b16 %v4331
        %v4468 = vunpack.c.l.b16 %v4332
        %v4469 = vunpack.c.l.b16 %v4333
        %v4470 = vunpack.c.l.b16 %v4334
        %v4471 = vunpack.c.l.b16 %v4335
        %v4472 = vunpack.c.l.b16 %v4336
        %v4473 = vunpack.c.l.b16 %v4337
        %v4474 = vunpack.c.l.b16 %v4338
        %v4475 = vunpack.c.l.b16 %v4339
        %v4476 = vunpack.c.l.b16 %v4340
        %v4477 = vunpack.c.l.b16 %v4341
        %v4478 = vunpack.c.l.b16 %v4342
        %v4479 = vunpack.c.l.b16 %v4343
        %v4480 = vunpack.c.l.b16 %v4344
        %v4481 = vunpack.c.l.b16 %v4345
        %v4482 = vunpack.c.l.b16 %v4346
        %v4483 = vunpack.c.l.b16 %v4347
        %v4484 = vunpack.c.l.b16 %v4348
        %v4485 = vunpack.c.l.b16 %v4349
        %v4486 = vunpack.c.l.b16 %v4350
        %v4487 = vunpack.c.l.b16 %v4351
        %v4488 = vunpack.c.l.b16 %v4352
        %v4489 = vunpack.c.l.b16 %v4353
        %v4490 = vunpack.c.l.b16 %v4354
        %v4491 = vunpack.c.l.b16 %v4355
        %v4492 = vunpack.c.l.b16 %v4356
        %v4493 = vunpack.c.l.b16 %v4357
        %v4494 = vunpack.c.l.b16 %v4358
        %v4495 = vunpack.c.l.b16 %v4359
        %v4496 = vunpack.c.l.b16 %v4360
        %v4497 = vunpack.c.l.b16 %v4361
        %v4498 = vpack.c.b16 %v4435, %v4434
        %v4499 = vpack.c.b16 %v4437, %v4436
        %v4500 = vpack.c.b16 %v4439, %v4438
        %v4501 = vpack.c.b16 %v4441, %v4440
        %v4502 = vpack.c.b16 %v4443, %v4442
        %v4503 = vpack.c.b16 %v4445, %v4444
        %v4504 = vpack.c.b16 %v4447, %v4446
        %v4505 = vpack.c.b16 %v4449, %v4448
        %v4506 = vpack.c.b16 %v4451, %v4450
        %v4507 = vpack.c.b16 %v4453, %v4452
        %v4508 = vpack.c.b16 %v4455, %v4454
        %v4509 = vpack.c.b16 %v4457, %v4456
        %v4510 = vpack.c.b16 %v4459, %v4458
        %v4511 = vpack.c.b16 %v4461, %v4460
        %v4512 = vpack.c.b16 %v4463, %v4462
        %v4513 = vpack.c.b16 %v4465, %v4464
        %v4514 = vpack.c.b16 %v4467, %v4466
        %v4515 = vpack.c.b16 %v4469, %v4468
        %v4516 = vpack.c.b16 %v4471, %v4470
        %v4517 = vpack.c.b16 %v4473, %v4472
        %v4518 = vpack.c.b16 %v4475, %v4474
        %v4519 = vpack.c.b16 %v4477, %v4476
        %v4520 = vpack.c.b16 %v4479, %v4478
        %v4521 = vpack.c.b16 %v4481, %v4480
        %v4522 = vpack.c.b16 %v4483, %v4482
        %v4523 = vpack.c.b16 %v4485, %v4484
        %v4524 = vpack.c.b16 %v4487, %v4486
        %v4525 = vpack.c.b16 %v4489, %v4488
        %v4526 = vpack.c.b16 %v4491, %v4490
        %v4527 = vpack.c.b16 %v4493, %v4492
        %v4528 = vpack.c.b16 %v4495, %v4494
        %v4529 = vpack.c.b16 %v4497, %v4496
        %4562 = vmatprep.subr.bf16.mxu0 0
        %4563 = vmatpush1.bf16.msra.mxu0 %v4498
        %4564 = vmatprep.subr.bf16.mxu0 0
        %4565 = vmatpush1.bf16.msra.mxu0 %v4499
        %4566 = vmatprep.subr.bf16.mxu0 0
        %4567 = vmatpush1.bf16.msra.mxu0 %v4500
        %4568 = vmatprep.subr.bf16.mxu0 0
        %4569 = vmatpush1.bf16.msra.mxu0 %v4501
        %4570 = vmatprep.subr.bf16.mxu0 0
        %4571 = vmatpush1.bf16.msra.mxu0 %v4502
        %4572 = vmatprep.subr.bf16.mxu0 0
        %4573 = vmatpush1.bf16.msra.mxu0 %v4503
        %4574 = vmatprep.subr.bf16.mxu0 0
        %4575 = vmatpush1.bf16.msra.mxu0 %v4504
        %4576 = vmatprep.subr.bf16.mxu0 0
        %4577 = vmatpush1.bf16.msra.mxu0 %v4505
        %4578 = vmatprep.subr.bf16.mxu0 0
        %4579 = vmatpush1.bf16.msra.mxu0 %v4506
        %4580 = vmatprep.subr.bf16.mxu0 0
        %4581 = vmatpush1.bf16.msra.mxu0 %v4507
        %4582 = vmatprep.subr.bf16.mxu0 0
        %4583 = vmatpush1.bf16.msra.mxu0 %v4508
        %4584 = vmatprep.subr.bf16.mxu0 0
        %4585 = vmatpush1.bf16.msra.mxu0 %v4509
        %4586 = vmatprep.subr.bf16.mxu0 0
        %4587 = vmatpush1.bf16.msra.mxu0 %v4510
        %4588 = vmatprep.subr.bf16.mxu0 0
        %4589 = vmatpush1.bf16.msra.mxu0 %v4511
        %4590 = vmatprep.subr.bf16.mxu0 0
        %4591 = vmatpush1.bf16.msra.mxu0 %v4512
        %4592 = vmatprep.subr.bf16.mxu0 0
        %4593 = vmatpush1.bf16.msra.mxu0 %v4513
        %4594 = vmatprep.mubr.bf16.mxu0 %v4294
        %4595 = vmatmul.mubr.bf16.gmra.mrb[0].mxu0 %v4293
        %v4596 = vpop.f32.mrb[0].mxu0
        %v4597 = vadd.f32 %v4368, %v4596
        %v4598 = vpop.f32.mrb[0].mxu0
        %v4599 = vpop.f32.mrb[0].mxu0
        %v4600 = vadd.f32 %v4368, %v4599
        %v4601 = vpop.f32.mrb[0].mxu0
        %4602 = vdwg.mxu0
        %4603 = vmatprep.subr.bf16.mxu0 0
        %4604 = vmatpush1.bf16.msra.mxu0 %v4514
        %4605 = vmatprep.subr.bf16.mxu0 0
        %4606 = vmatpush1.bf16.msra.mxu0 %v4515
        %4607 = vmatprep.subr.bf16.mxu0 0
        %4608 = vmatpush1.bf16.msra.mxu0 %v4516
        %4609 = vmatprep.subr.bf16.mxu0 0
        %4610 = vmatpush1.bf16.msra.mxu0 %v4517
        %4611 = vmatprep.subr.bf16.mxu0 0
        %4612 = vmatpush1.bf16.msra.mxu0 %v4518
        %4613 = vmatprep.subr.bf16.mxu0 0
        %4614 = vmatpush1.bf16.msra.mxu0 %v4519
        %4615 = vmatprep.subr.bf16.mxu0 0
        %4616 = vmatpush1.bf16.msra.mxu0 %v4520
        %4617 = vmatprep.subr.bf16.mxu0 0
        %4618 = vmatpush1.bf16.msra.mxu0 %v4521
        %4619 = vmatprep.subr.bf16.mxu0 0
        %4620 = vmatpush1.bf16.msra.mxu0 %v4522
        %4621 = vmatprep.subr.bf16.mxu0 0
        %4622 = vmatpush1.bf16.msra.mxu0 %v4523
        %4623 = vmatprep.subr.bf16.mxu0 0
        %4624 = vmatpush1.bf16.msra.mxu0 %v4524
        %4625 = vmatprep.subr.bf16.mxu0 0
        %4626 = vmatpush1.bf16.msra.mxu0 %v4525
        %4627 = vmatprep.subr.bf16.mxu0 0
        %4628 = vmatpush1.bf16.msra.mxu0 %v4526
        %4629 = vmatprep.subr.bf16.mxu0 0
        %4630 = vmatpush1.bf16.msra.mxu0 %v4527
        %4631 = vmatprep.subr.bf16.mxu0 0
        %4632 = vmatpush1.bf16.msra.mxu0 %v4528
        %4633 = vmatprep.subr.bf16.mxu0 0
        %4634 = vmatpush1.bf16.msra.mxu0 %v4529
        %4635 = vmatprep.mubr.bf16.mxu0 %v4296
        %4636 = vmatmul.mubr.bf16.gmra.mrb[0].mxu0 %v4295
        %v4637 = vpop.f32.mrb[0].mxu0
        %v4638 = vadd.f32 %v4597, %v4637
        %v4639 = vpop.f32.mrb[0].mxu0
        %v4640 = vpop.f32.mrb[0].mxu0
        %v4641 = vadd.f32 %v4600, %v4640
        %v4642 = vpop.f32.mrb[0].mxu0
        %4643 = vdwg.mxu0
        %v4644 = vadd.f32 %v3980, %v4638
        %v4645 = vadd.f32 %v3981, %v4641
        %s4646 = scalar_lea.vmem %s12, 1
        %v4647 = vld [vmem:[%s4646] sm:$0x1]
        %s4648 = scalar_lea.vmem %s13, 1
        %v4649 = vld [vmem:[%s4648] sm:$0x1]
        %4650 = vadd.xlane.f32.xlu0 %v4644
        %v4651 = vpop.xlane.xlu0 %4650
        %4652 = vadd.xlane.f32.xlu0 %v4645
        %v4653 = vpop.xlane.xlu0 %4652
        %v4654 = vmul.f32 %v4651, %v2000
        %v4655 = vmul.f32 %v4653, %v2000
        %v4656 = vsub.f32 %v4644, %v4654
        %v4657 = vsub.f32 %v4645, %v4655
        %v4658 = vmul.f32 %v4656, %v4656
        %v4659 = vmul.f32 %v4657, %v4657
        %4660 = vadd.xlane.f32.xlu0 %v4658
        %v4661 = vpop.xlane.xlu0 %4660
        %4662 = vadd.xlane.f32.xlu0 %v4659
        %v4663 = vpop.xlane.xlu0 %4662
        %v4664 = vmul.f32 %v4661, %v2000
        %v4665 = vmul.f32 %v4663, %v2000
        %v4666 = vadd.f32 %v4664, 1e-05
        %v4667 = vadd.f32 %v4665, 1e-05
        %v4668 = vrsqrt.pop %v4666
        %v4669 = vrsqrt.pop %v4667
        %v4670 = vmul.f32 %v4656, %v4668
        %v4671 = vmul.f32 %v4657, %v4669
        %v4673 = vlaneseq
        %v4674 = vshrl.u32 %v4673, 7
        %v4675 = vsub.s32 0, %v4674
        %v4676 = vrot.slane %v4647, %v4675
        %v4678 = vmul.f32 %v4670, %v4676
        %v4679 = vmul.f32 %v4671, %v4676
        %v4681 = vlaneseq
        %v4682 = vshrl.u32 %v4681, 7
        %v4683 = vsub.s32 0, %v4682
        %v4684 = vrot.slane %v4649, %v4683
        %v4686 = vadd.f32 %v4678, %v4684
        %v4687 = vadd.f32 %v4679, %v4684
        %v4688 = vld [vmem:[%s14] sm:$0x1]
        %v4689 = vld [vmem:[%s15] sm:$0x1]
        %4690 = vadd.xlane.f32.xlu0 %v4686
        %v4691 = vpop.xlane.xlu0 %4690
        %4692 = vadd.xlane.f32.xlu0 %v4687
        %v4693 = vpop.xlane.xlu0 %4692
        %v4694 = vmul.f32 %v4691, %v2000
        %v4695 = vmul.f32 %v4693, %v2000
        %v4696 = vsub.f32 %v4686, %v4694
        %v4697 = vsub.f32 %v4687, %v4695
        %v4698 = vmul.f32 %v4696, %v4696
        %v4699 = vmul.f32 %v4697, %v4697
        %4700 = vadd.xlane.f32.xlu0 %v4698
        %v4701 = vpop.xlane.xlu0 %4700
        %4702 = vadd.xlane.f32.xlu0 %v4699
        %v4703 = vpop.xlane.xlu0 %4702
        %v4704 = vmul.f32 %v4701, %v2000
        %v4705 = vmul.f32 %v4703, %v2000
        %v4706 = vadd.f32 %v4704, 1e-05
        %v4707 = vadd.f32 %v4705, 1e-05
        %v4708 = vrsqrt.pop %v4706
        %v4709 = vrsqrt.pop %v4707
        %v4710 = vmul.f32 %v4696, %v4708
        %v4711 = vmul.f32 %v4697, %v4709
        %v4713 = vlaneseq
        %v4714 = vshrl.u32 %v4713, 7
        %v4715 = vsub.s32 0, %v4714
        %v4716 = vrot.slane %v4688, %v4715
        %v4718 = vmul.f32 %v4710, %v4716
        %v4719 = vmul.f32 %v4711, %v4716
        %v4721 = vlaneseq
        %v4722 = vshrl.u32 %v4721, 7
        %v4723 = vsub.s32 0, %v4722
        %v4724 = vrot.slane %v4689, %v4723
        %v4726 = vadd.f32 %v4718, %v4724
        %v4727 = vadd.f32 %v4719, %v4724
        %v4728 = vpack.c.bf16 %v4727, %v4726
        %v4729 = vld [vmem:[#allocation18] sm:$0xf]
        %v4730 = vld [vmem:[#allocation18 + $0x4] sm:$0xf]
        %v4731 = vld [vmem:[#allocation18 + $0x8] sm:$0xf]
        %v4732 = vld [vmem:[#allocation18 + $0xc] sm:$0xf]
        %v4733 = vld [vmem:[#allocation18 + $0x10] sm:$0xf]
        %v4734 = vld [vmem:[#allocation18 + $0x14] sm:$0xf]
        %v4735 = vld [vmem:[#allocation18 + $0x18] sm:$0xf]
        %v4736 = vld [vmem:[#allocation18 + $0x1c] sm:$0xf]
        %v4737 = vld [vmem:[#allocation18 + $0x20] sm:$0xf]
        %v4738 = vld [vmem:[#allocation18 + $0x24] sm:$0xf]
        %v4739 = vld [vmem:[#allocation18 + $0x28] sm:$0xf]
        %v4740 = vld [vmem:[#allocation18 + $0x2c] sm:$0xf]
        %v4741 = vld [vmem:[#allocation18 + $0x30] sm:$0xf]
        %v4742 = vld [vmem:[#allocation18 + $0x34] sm:$0xf]
        %v4743 = vld [vmem:[#allocation18 + $0x38] sm:$0xf]
        %v4744 = vld [vmem:[#allocation18 + $0x3c] sm:$0xf]
        %v4745 = vld [vmem:[#allocation20] sm:$0x1]
        %v4747 = vlaneseq
        %v4748 = vshrl.u32 %v4747, 7
        %v4749 = vsub.s32 0, %v4748
        %v4750 = vrot.slane %v4745, %v4749
        %v4768 = vunpack.c.l.b16 %v4729
        %v4769 = vunpack.c.l.b16 %v4730
        %v4770 = vunpack.c.l.b16 %v4731
        %v4771 = vunpack.c.l.b16 %v4732
        %v4772 = vunpack.c.l.b16 %v4733
        %v4773 = vunpack.c.l.b16 %v4734
        %v4774 = vunpack.c.l.b16 %v4735
        %v4775 = vunpack.c.l.b16 %v4736
        %v4776 = vunpack.c.l.b16 %v4737
        %v4777 = vunpack.c.l.b16 %v4738
        %v4778 = vunpack.c.l.b16 %v4739
        %v4779 = vunpack.c.l.b16 %v4740
        %v4780 = vunpack.c.l.b16 %v4741
        %v4781 = vunpack.c.l.b16 %v4742
        %v4782 = vunpack.c.l.b16 %v4743
        %v4783 = vunpack.c.l.b16 %v4744
        %v4784 = vpack.c.b16 %v4769, %v4768
        %v4785 = vpack.c.b16 %v4771, %v4770
        %v4786 = vpack.c.b16 %v4773, %v4772
        %v4787 = vpack.c.b16 %v4775, %v4774
        %v4788 = vpack.c.b16 %v4777, %v4776
        %v4789 = vpack.c.b16 %v4779, %v4778
        %v4790 = vpack.c.b16 %v4781, %v4780
        %v4791 = vpack.c.b16 %v4783, %v4782
        %4800 = vmatprep.subr.bf16.mxu0 0
        %4801 = vmatpush1.bf16.msra.mxu0 %v4784
        %4802 = vmatprep.subr.bf16.mxu0 0
        %4803 = vmatpush1.bf16.msra.mxu0 %v4785
        %4804 = vmatprep.subr.bf16.mxu0 0
        %4805 = vmatpush1.bf16.msra.mxu0 %v4786
        %4806 = vmatprep.subr.bf16.mxu0 0
        %4807 = vmatpush1.bf16.msra.mxu0 %v4787
        %4808 = vmatprep.subr.bf16.mxu0 0
        %4809 = vmatpush1.bf16.msra.mxu0 %v4788
        %4810 = vmatprep.subr.bf16.mxu0 0
        %4811 = vmatpush1.bf16.msra.mxu0 %v4789
        %4812 = vmatprep.subr.bf16.mxu0 0
        %4813 = vmatpush1.bf16.msra.mxu0 %v4790
        %4814 = vmatprep.subr.bf16.mxu0 0
        %4815 = vmatpush1.bf16.msra.mxu0 %v4791
        %4816 = vmatprep.subr.bf16.mxu0 0
        %4817 = vmatpush1.bf16.msra.mxu0 0
        %4818 = vmatprep.subr.bf16.mxu0 0
        %4819 = vmatpush1.bf16.msra.mxu0 0
        %4820 = vmatprep.subr.bf16.mxu0 0
        %4821 = vmatpush1.bf16.msra.mxu0 0
        %4822 = vmatprep.subr.bf16.mxu0 0
        %4823 = vmatpush1.bf16.msra.mxu0 0
        %4824 = vmatprep.subr.bf16.mxu0 0
        %4825 = vmatpush1.bf16.msra.mxu0 0
        %4826 = vmatprep.subr.bf16.mxu0 0
        %4827 = vmatpush1.bf16.msra.mxu0 0
        %4828 = vmatprep.subr.bf16.mxu0 0
        %4829 = vmatpush1.bf16.msra.mxu0 0
        %4830 = vmatprep.subr.bf16.mxu0 0
        %4831 = vmatpush1.bf16.msra.mxu0 0
        %4832 = vmatprep.mubr.bf16.mxu0 0
        %4833 = vmatmul.mubr.bf16.gmra.mrb[0].mxu0 %v4728
        %v4834 = vpop.f32.mrb[0].mxu0
        %v4835 = vadd.f32 %v4750, %v4834
        %v4836 = vpop.f32.mrb[0].mxu0
        %v4837 = vpop.f32.mrb[0].mxu0
        %v4838 = vadd.f32 %v4750, %v4837
        %v4839 = vpop.f32.mrb[0].mxu0
        %4840 = vdwg.mxu0
        %4841 = vst [vmem:[%s662] sm:$0xff] %v4835
        %4842 = vst [vmem:[%s662 + $0x8] sm:$0xff] %v4838
        %s4843 = sand.u32 %s408, 1
        %s4844 = scalar_lea.sflag [#allocation8], %s4843
        %s4845 = sand.u32 %s408, 1
        %s4846 = smul.addr %s4845, 16
        %s4847 = scalar_lea.vmem [#allocation21], %s4846
        // Predicated region
        $region125: #{gpt_forward_fn.1} parent=87 // pred_check
          %p4848 = pneg %p418
        $region126: #{gpt_forward_fn.1} parent=87 // pred_check_branch
          %4850 = sbr.rel (%p4848) target = $region128
        $region127: #{gpt_forward_fn.1} parent=87 // pred_region
          %s4852 = ssub.s32 256, 256
          %4853 = vsyncadd %s4844, %s4852
          %s4854 = smul.addr %s43, 2
          %s4855 = smul.addr %s4854, 128
          %s4856 = scalar_lea.hbm %s18, %s4855
          %s4857 = sshll.u32 %s4847, 4
          %s4858 = int_to_ptr.vmem [resolvable:$true] %s4857
          %4863 = dma.vmem_to_hbm [thread:$0]  %s4858, 256, %s4856, %s4844, 128, 128, 8
        $region128: #{gpt_forward_fn.1} parent=87 // pred_fallthru
          _
      $region88: #{gpt_forward_fn.1} parent=5 // pred_fallthru
        _
      %p4864 = scmp.le.s32.totalorder 2, %s38
      // Predicated region
      $region129: #{gpt_forward_fn.1} parent=5 // pred_check
        %p4865 = pneg %p4864
      $region130: #{gpt_forward_fn.1} parent=5 // pred_check_branch
        %4867 = sbr.rel (%p4865) target = $region132
      $region131: #{gpt_forward_fn.1} parent=5 // pred_region
        %s4868 = ssub.s32 %s38, 2
        // Predicated region
        $region133: #{gpt_forward_fn.1} parent=131 // pred_check
          %p4869 = pneg %p424
        $region134: #{gpt_forward_fn.1} parent=131 // pred_check_branch
          %4871 = sbr.rel (%p4869) target = $region136
        $region135: #{gpt_forward_fn.1} parent=131 // pred_region
          %s4872 = sand.u32 %s409, 1
          %s4873 = scalar_lea.sflag [#allocation8], %s4872
          %s4874 = sand.u32 %s409, 1
          %s4875 = smul.addr %s4874, 16
          %s4876 = scalar_lea.vmem [#allocation21], %s4875
          %4877 = dma.done %s4873, 256
        $region136: #{gpt_forward_fn.1} parent=131 // pred_fallthru
          _
      $region132: #{gpt_forward_fn.1} parent=5 // pred_fallthru
        _
    $region6: #{gpt_forward_fn.1} parent=1 // loop_footer
      %s42 = sadd.s32 1, %s38
    $region7: #{gpt_forward_fn.1} parent=1 // loop_footer_branch
      %37 = sbr.rel target = $region3
    $region8: #{gpt_forward_fn.1} parent=1 // loop_exit
      _
    %4878 = vsyncpa [#allocation7], 1
    %s4879 = scalar_lea.sflag [#allocation7], 1
    %4880 = vsyncpa %s4879, 1
    %4881 = vsyncpa [#allocation10], 1
    %4882 = vsyncpa [#allocation13], 1
    %4883 = vsyncpa [#allocation16], 1
    %4884 = vsyncpa [#allocation19], 1
    %4885 = vsyncpa [#allocation8], 1
    %s4886 = scalar_lea.sflag [#allocation8], 1
    %4887 = vsyncpa %s4886, 1

</llo_original>
